<compile_context>
chip_gen: v6e
topology: v6e:2x2x1
jax: 0.10.0
libtpu: 0.0.40
codegen_flags: <defaults>
</compile_context>

<pallas_src>
import functools

import jax
import jax.numpy as jnp
from jax import lax
from jax.experimental import pallas as pl
from jax.experimental.pallas import tpu as pltpu


def _set_xf_pcd_kernel(x_ref, w1_ref, b1_ref, wkv_ref, bkv_ref,
                       q_ref, qbs_ref, mask_ref, wo_ref, bo_ref,
                       wout_ref, bout_ref, o_ref, *, approx_recip):
    """Processes TB batch elements per grid step; all weights resident in VMEM."""
    tb, n, c = x_ref.shape
    qn, hdim = q_ref.shape            # (num_queries, hidden)
    hq = qbs_ref.shape[0]             # num_heads * num_queries
    heads = hq // qn
    mm_dtype = w1_ref.dtype           # bf16 in the fast path, f32 in the precise path

    # ---- flattened projections over all TB*N points (one big MXU matmul each) ----
    x = x_ref[...].reshape(tb * n, c)                                       # (TB*N, C)
    h = jnp.dot(x.astype(mm_dtype), w1_ref[...],
                preferred_element_type=jnp.float32) + b1_ref[...]           # (TB*N, H)
    kv = jnp.dot(h.astype(mm_dtype), wkv_ref[...],
                 preferred_element_type=jnp.float32) + bkv_ref[...]         # (TB*N, 2H)
    k = kv[:, :hdim]                                                        # (TB*N, H)
    v = kv[:, hdim:]                                                        # (TB*N, H)

    q = q_ref[...]          # (Q, H)  un-scaled projected queries (for residual)
    qbs = qbs_ref[...]      # (heads*Q, H)  block-diag expanded, pre-scaled by 1/sqrt(H)
    mask = mask_ref[...]    # (heads*Q, H)  0/1 per-head column mask

    # ---- attention: per batch element, two 2-D MXU matmuls (no per-head slicing) ----
    o_rows = []
    for b in range(tb):                                    # static, small unroll
        lo = b * n
        kb = k[lo:lo + n, :]                               # (N, H)
        vb = v[lo:lo + n, :]                               # (N, H)
        # block-diagonal queries -> per-head scores in one matmul: (heads*Q, N)
        s = lax.dot_general(qbs, kb, (((1,), (1,)), ((), ())),
                            preferred_element_type=jnp.float32)
        s = s - jnp.max(s, axis=-1, keepdims=True)
        e = jnp.exp(s)
        denom = jnp.sum(e, axis=-1, keepdims=True)
        if approx_recip:
            attn = e * pl.reciprocal(denom, approx=True)   # EUP slot
        else:
            attn = e / denom
        p = jnp.dot(attn, vb, preferred_element_type=jnp.float32)           # (heads*Q, H)
        # keep only each head's own feature slice and fold heads back together
        o_b = q + jnp.sum((p * mask).reshape(heads, qn, hdim), axis=0)      # (Q, H)
        o_rows.append(o_b)
    o = jnp.concatenate(o_rows, axis=0)                                     # (TB*Q, H)

    # O = O + relu(fc_o(O))   (no LayerNorm)
    o = o + jnp.maximum(
        jnp.dot(o.astype(mm_dtype), wo_ref[...],
                preferred_element_type=jnp.float32) + bo_ref[...], 0.0)

    # max-pool over queries, then output linear
    pooled = jnp.max(o.reshape(tb, qn, hdim), axis=1)                       # (TB, H)
    out = jnp.dot(pooled.astype(mm_dtype), wout_ref[...],
                  preferred_element_type=jnp.float32) + bout_ref[...]       # (TB, D_out)
    o_ref[...] = out.astype(o_ref.dtype)


def set_xf_pcd_encoder(x, params, *, num_heads=8, block_b=8, precise=False):
    B, N, C = x.shape
    H = params["w1"].shape[1]
    Q = params["s"].shape[0]
    D_out = params["wout"].shape[1]
    assert H % num_heads == 0
    dh = H // num_heads

    # ---- hoist the batch-invariant query path out of the kernel ----
    q = params["s"] @ params["wq"] + params["bq"]                    # (Q, H), f32
    scale = 1.0 / jnp.sqrt(jnp.float32(H))                           # Set-Transformer scales by dim_V
    head_mask = ((jnp.arange(H)[None, :] // dh)
                 == jnp.arange(num_heads)[:, None]).astype(jnp.float32)      # (heads, H)
    mask = jnp.repeat(head_mask, Q, axis=0)                          # (heads*Q, H): row h*Q+i -> head h
    qb_scaled = jnp.tile(q, (num_heads, 1)) * mask * scale           # block-diag expanded queries

    # ---- fuse K|V projection into a single 256-wide matmul ----
    wkv = jnp.concatenate([params["wk"], params["wv"]], axis=1)      # (H, 2H)
    bkv = jnp.concatenate([params["bk"], params["bv"]], axis=1)      # (1, 2H)

    # fast path: bf16 matmul operands, f32 accumulation; elementwise math stays f32
    mm_dtype = jnp.float32 if precise else jnp.bfloat16
    w1 = params["w1"].astype(mm_dtype)
    wkv = wkv.astype(mm_dtype)
    wo = params["wo"].astype(mm_dtype)
    wout = params["wout"].astype(mm_dtype)

    # ---- batch tiling: TB samples per grid step ----
    if B <= block_b:
        TB = B                      # block == full batch dim -> always layout-legal
    else:
        assert block_b % 8 == 0, "block_b must be a multiple of 8 when tiling the batch dim"
        TB = block_b
    grid = (pl.cdiv(B, TB),)

    weights = (w1, params["b1"], wkv, bkv, q, qb_scaled, mask,
               wo, params["bo"], wout, params["bout"])

    def wspec(arr):
        # full array resident in VMEM; constant index_map -> fetched once, not re-DMA'd per step
        return pl.BlockSpec(arr.shape, lambda b: (0, 0))

    kernel = functools.partial(_set_xf_pcd_kernel, approx_recip=not precise)

    HQ = num_heads * Q
    flops = 2 * B * N * (C * H + H * 2 * H) + 2 * B * (2 * HQ * N * H) \
        + 2 * B * Q * H * H + 2 * B * H * D_out
    bytes_accessed = 4 * (x.size + B * D_out) + sum(int(w.size * w.dtype.itemsize) for w in weights)

    out = pl.pallas_call(
        kernel,
        out_shape=jax.ShapeDtypeStruct((B, D_out), jnp.float32),
        grid=grid,
        in_specs=[pl.BlockSpec((TB, N, C), lambda b: (b, 0, 0))] +
                 [wspec(a) for a in weights],
        out_specs=pl.BlockSpec((TB, D_out), lambda b: (b, 0)),
        compiler_params=pltpu.CompilerParams(dimension_semantics=("parallel",)),
        cost_estimate=pl.CostEstimate(flops=int(flops),
                                      transcendentals=int(B * HQ * N),
                                      bytes_accessed=int(bytes_accessed)),
    )(x, *weights)
    return out


# ------------------------- parameter construction -------------------------

def init_params(key, n_coordinates=6, hidden_dim=128, output_dim=64, num_queries=8):
    ks = jax.random.split(key, 13)

    def linear(kw, kb, fan_in, fan_out):
        bound = 1.0 / jnp.sqrt(jnp.float32(fan_in))
        w = jax.random.uniform(kw, (fan_in, fan_out), jnp.float32, -bound, bound)
        b = jax.random.uniform(kb, (1, fan_out), jnp.float32, -bound, bound)
        return w, b

    w1, b1 = linear(ks[0], ks[1], n_coordinates, hidden_dim)
    xb = jnp.sqrt(6.0 / jnp.float32(num_queries + hidden_dim))      # PMA seeds: xavier_uniform
    s = jax.random.uniform(ks[2], (num_queries, hidden_dim), jnp.float32, -xb, xb)
    wq, bq = linear(ks[3], ks[4], hidden_dim, hidden_dim)
    wk, bk = linear(ks[5], ks[6], hidden_dim, hidden_dim)
    wv, bv = linear(ks[7], ks[8], hidden_dim, hidden_dim)
    wo, bo = linear(ks[9], ks[10], hidden_dim, hidden_dim)
    wout, bout = linear(ks[11], ks[12], hidden_dim, output_dim)
    return dict(w1=w1, b1=b1, s=s, wq=wq, bq=bq, wk=wk, bk=bk, wv=wv, bv=bv,
                wo=wo, bo=bo, wout=wout, bout=bout)


# ------------------------- pure-JAX reference -------------------------

def reference(x, p, num_heads=8):
    B, N, _ = x.shape
    H = p["w1"].shape[1]
    Q = p["s"].shape[0]
    dh = H // num_heads
    h = x @ p["w1"] + p["b1"][0]
    s = jnp.broadcast_to(p["s"][None], (B, Q, H))
    q = s @ p["wq"] + p["bq"][0]
    k = h @ p["wk"] + p["bk"][0]
    v = h @ p["wv"] + p["bv"][0]
    qh = q.reshape(B, Q, num_heads, dh)
    kh = k.reshape(B, N, num_heads, dh)
    vh = v.reshape(B, N, num_heads, dh)
    scores = jnp.einsum("bqhd,bnhd->bhqn", qh, kh) / jnp.sqrt(jnp.float32(H))
    attn = jax.nn.softmax(scores, axis=-1)
    o = jnp.einsum("bhqn,bnhd->bqhd", attn, vh).reshape(B, Q, H)
    o = q + o
    o = o + jax.nn.relu(o @ p["wo"] + p["bo"][0])
    pooled = jnp.max(o, axis=1)
    return pooled @ p["wout"] + p["bout"][0]


if __name__ == "__main__":
    B, N, C = 16, 64, 6          # batch, number of points, coordinates per point
    H, D_OUT, HEADS, QUERIES = 128, 64, 8, 8

    key = jax.random.PRNGKey(0)
    kx, kp = jax.random.split(key)
    x = jax.random.normal(kx, (B, N, C), dtype=jnp.float32)
    params = init_params(kp, n_coordinates=C, hidden_dim=H,
                         output_dim=D_OUT, num_queries=QUERIES)

    ref = reference(x, params, num_heads=HEADS)

    # Precise path: f32 matmuls + exact softmax divide — tight semantic check.
    out_precise = jax.block_until_ready(
        set_xf_pcd_encoder(x, params, num_heads=HEADS, block_b=8, precise=True))
    assert out_precise.shape == (B, D_OUT), out_precise.shape
    assert jnp.allclose(out_precise, ref, rtol=1e-4, atol=1e-4), \
        float(jnp.max(jnp.abs(out_precise - ref)))

    # Fast path: bf16 MXU operands (f32 accumulate) + EUP approximate reciprocal.
    out_fast = jax.block_until_ready(
        set_xf_pcd_encoder(x, params, num_heads=HEADS, block_b=8, precise=False))
    assert out_fast.shape == (B, D_OUT), out_fast.shape
    assert jnp.allclose(out_fast, ref, rtol=5e-2, atol=5e-2), \
        float(jnp.max(jnp.abs(out_fast - ref)))

    print("KERNEL_OK")
</pallas_src>

<mosaic_0001>
module attributes {stable_mosaic.version = 11 : i64} {
  func.func @_set_xf_pcd_kernel(%arg0: i32, %arg1: memref<8x64x6xf32, #tpu.memory_space<vmem>>, %arg2: memref<6x128xf32, #tpu.memory_space<vmem>>, %arg3: memref<1x128xf32, #tpu.memory_space<vmem>>, %arg4: memref<128x256xf32, #tpu.memory_space<vmem>>, %arg5: memref<1x256xf32, #tpu.memory_space<vmem>>, %arg6: memref<8x128xf32, #tpu.memory_space<vmem>>, %arg7: memref<64x128xf32, #tpu.memory_space<vmem>>, %arg8: memref<64x128xf32, #tpu.memory_space<vmem>>, %arg9: memref<128x128xf32, #tpu.memory_space<vmem>>, %arg10: memref<1x128xf32, #tpu.memory_space<vmem>>, %arg11: memref<128x64xf32, #tpu.memory_space<vmem>>, %arg12: memref<1x64xf32, #tpu.memory_space<vmem>>, %arg13: memref<8x64xf32, #tpu.memory_space<vmem>>) attributes {dimension_semantics = [#tpu.dimension_semantics<parallel>], iteration_bounds = array<i64: 2>, scalar_prefetch = 0 : i64, scratch_operands = 0 : i64, tpu.core_type = #tpu.core_type<tc>, window_params = [{transform_indices = @transform_0, window_bounds = array<i64: 8, 64, 6>}, {pipeline_mode = #tpu.pipeline_mode<synchronous>, transform_indices = @transform_1, window_bounds = array<i64: 6, 128>}, {pipeline_mode = #tpu.pipeline_mode<synchronous>, transform_indices = @transform_2, window_bounds = array<i64: 1, 128>}, {pipeline_mode = #tpu.pipeline_mode<synchronous>, transform_indices = @transform_3, window_bounds = array<i64: 128, 256>}, {pipeline_mode = #tpu.pipeline_mode<synchronous>, transform_indices = @transform_4, window_bounds = array<i64: 1, 256>}, {pipeline_mode = #tpu.pipeline_mode<synchronous>, transform_indices = @transform_5, window_bounds = array<i64: 8, 128>}, {pipeline_mode = #tpu.pipeline_mode<synchronous>, transform_indices = @transform_6, window_bounds = array<i64: 64, 128>}, {pipeline_mode = #tpu.pipeline_mode<synchronous>, transform_indices = @transform_7, window_bounds = array<i64: 64, 128>}, {pipeline_mode = #tpu.pipeline_mode<synchronous>, transform_indices = @transform_8, window_bounds = array<i64: 128, 128>}, {pipeline_mode = #tpu.pipeline_mode<synchronous>, transform_indices = @transform_9, window_bounds = array<i64: 1, 128>}, {pipeline_mode = #tpu.pipeline_mode<synchronous>, transform_indices = @transform_10, window_bounds = array<i64: 128, 64>}, {pipeline_mode = #tpu.pipeline_mode<synchronous>, transform_indices = @transform_11, window_bounds = array<i64: 1, 64>}, {transform_indices = @transform_12, window_bounds = array<i64: 8, 64>}]} {
    %c0 = arith.constant 0 : index
    %c0_0 = arith.constant 0 : index
    %c0_1 = arith.constant 0 : index
    %0 = vector.load %arg1[%c0, %c0_0, %c0_1] : memref<8x64x6xf32, #tpu.memory_space<vmem>>, vector<8x64x6xf32>
    %1 = vector.shape_cast %0 : vector<8x64x6xf32> to vector<512x6xf32>
    %c0_2 = arith.constant 0 : index
    %c0_3 = arith.constant 0 : index
    %2 = vector.load %arg2[%c0_2, %c0_3] : memref<6x128xf32, #tpu.memory_space<vmem>>, vector<6x128xf32>
    %cst = arith.constant dense<0.000000e+00> : vector<512x128xf32>
    %3 = tpu.matmul %1, %2, %cst {dimension_numbers = #tpu.dot_dimension_numbers<[1], [0], [0], [1], [0, 0, 1, 1], [], []>} : vector<512x6xf32>, vector<6x128xf32>, vector<512x128xf32> -> vector<512x128xf32>
    %c0_4 = arith.constant 0 : index
    %c0_5 = arith.constant 0 : index
    %4 = vector.load %arg3[%c0_4, %c0_5] : memref<1x128xf32, #tpu.memory_space<vmem>>, vector<1x128xf32>
    %5 = vector.broadcast %4 : vector<1x128xf32> to vector<512x128xf32>
    %6 = arith.addf %3, %5 : vector<512x128xf32>
    %c0_6 = arith.constant 0 : index
    %c0_7 = arith.constant 0 : index
    %7 = vector.load %arg4[%c0_6, %c0_7] : memref<128x256xf32, #tpu.memory_space<vmem>>, vector<128x256xf32>
    %cst_8 = arith.constant dense<0.000000e+00> : vector<512x256xf32>
    %8 = tpu.matmul %6, %7, %cst_8 {dimension_numbers = #tpu.dot_dimension_numbers<[1], [0], [0], [1], [0, 0, 1, 1], [], []>} : vector<512x128xf32>, vector<128x256xf32>, vector<512x256xf32> -> vector<512x256xf32>
    %c0_9 = arith.constant 0 : index
    %c0_10 = arith.constant 0 : index
    %9 = vector.load %arg5[%c0_9, %c0_10] : memref<1x256xf32, #tpu.memory_space<vmem>>, vector<1x256xf32>
    %10 = vector.broadcast %9 : vector<1x256xf32> to vector<512x256xf32>
    %11 = arith.addf %8, %10 : vector<512x256xf32>
    %12 = vector.extract_strided_slice %11 {offsets = [0, 0], sizes = [512, 128], strides = [1, 1]} : vector<512x256xf32> to vector<512x128xf32>
    %13 = vector.extract_strided_slice %11 {offsets = [0, 128], sizes = [512, 128], strides = [1, 1]} : vector<512x256xf32> to vector<512x128xf32>
    %c0_11 = arith.constant 0 : index
    %c0_12 = arith.constant 0 : index
    %14 = vector.load %arg6[%c0_11, %c0_12] : memref<8x128xf32, #tpu.memory_space<vmem>>, vector<8x128xf32>
    %c0_13 = arith.constant 0 : index
    %c0_14 = arith.constant 0 : index
    %15 = vector.load %arg7[%c0_13, %c0_14] : memref<64x128xf32, #tpu.memory_space<vmem>>, vector<64x128xf32>
    %c0_15 = arith.constant 0 : index
    %c0_16 = arith.constant 0 : index
    %16 = vector.load %arg8[%c0_15, %c0_16] : memref<64x128xf32, #tpu.memory_space<vmem>>, vector<64x128xf32>
    %17 = vector.extract_strided_slice %12 {offsets = [0, 0], sizes = [64, 128], strides = [1, 1]} : vector<512x128xf32> to vector<64x128xf32>
    %18 = vector.extract_strided_slice %13 {offsets = [0, 0], sizes = [64, 128], strides = [1, 1]} : vector<512x128xf32> to vector<64x128xf32>
    %cst_17 = arith.constant dense<0.000000e+00> : vector<64x64xf32>
    %19 = tpu.matmul %15, %17, %cst_17 {dimension_numbers = #tpu.dot_dimension_numbers<[1], [1], [0], [0], [0, 0, 1, 0], [], []>} : vector<64x128xf32>, vector<64x128xf32>, vector<64x64xf32> -> vector<64x64xf32>
    %cst_18 = arith.constant dense<0xFF800000> : vector<64xf32>
    %20 = vector.multi_reduction <maximumf>, %19, %cst_18 [1] : vector<64x64xf32> to vector<64xf32>
    %21 = vector.shape_cast %20 : vector<64xf32> to vector<64x1xf32>
    %22 = vector.broadcast %21 : vector<64x1xf32> to vector<64x64xf32>
    %23 = arith.subf %19, %22 : vector<64x64xf32>
    %24 = math.exp %23 : vector<64x64xf32>
    %cst_19 = arith.constant dense<0.000000e+00> : vector<64xf32>
    %25 = vector.multi_reduction <add>, %24, %cst_19 [1] : vector<64x64xf32> to vector<64xf32>
    %26 = vector.shape_cast %25 : vector<64xf32> to vector<64x1xf32>
    %27 = vector.broadcast %26 : vector<64x1xf32> to vector<64x64xf32>
    %28 = arith.divf %24, %27 : vector<64x64xf32>
    %cst_20 = arith.constant dense<0.000000e+00> : vector<64x128xf32>
    %29 = tpu.matmul %28, %18, %cst_20 {dimension_numbers = #tpu.dot_dimension_numbers<[1], [0], [0], [1], [0, 0, 1, 1], [], []>} : vector<64x64xf32>, vector<64x128xf32>, vector<64x128xf32> -> vector<64x128xf32>
    %30 = arith.mulf %29, %16 : vector<64x128xf32>
    %31 = vector.shape_cast %30 : vector<64x128xf32> to vector<8x8x128xf32>
    %cst_21 = arith.constant dense<0.000000e+00> : vector<8x128xf32>
    %32 = vector.multi_reduction <add>, %31, %cst_21 [0] : vector<8x8x128xf32> to vector<8x128xf32>
    %33 = arith.addf %14, %32 : vector<8x128xf32>
    %34 = vector.extract_strided_slice %12 {offsets = [64, 0], sizes = [64, 128], strides = [1, 1]} : vector<512x128xf32> to vector<64x128xf32>
    %35 = vector.extract_strided_slice %13 {offsets = [64, 0], sizes = [64, 128], strides = [1, 1]} : vector<512x128xf32> to vector<64x128xf32>
    %cst_22 = arith.constant dense<0.000000e+00> : vector<64x64xf32>
    %36 = tpu.matmul %15, %34, %cst_22 {dimension_numbers = #tpu.dot_dimension_numbers<[1], [1], [0], [0], [0, 0, 1, 0], [], []>} : vector<64x128xf32>, vector<64x128xf32>, vector<64x64xf32> -> vector<64x64xf32>
    %cst_23 = arith.constant dense<0xFF800000> : vector<64xf32>
    %37 = vector.multi_reduction <maximumf>, %36, %cst_23 [1] : vector<64x64xf32> to vector<64xf32>
    %38 = vector.shape_cast %37 : vector<64xf32> to vector<64x1xf32>
    %39 = vector.broadcast %38 : vector<64x1xf32> to vector<64x64xf32>
    %40 = arith.subf %36, %39 : vector<64x64xf32>
    %41 = math.exp %40 : vector<64x64xf32>
    %cst_24 = arith.constant dense<0.000000e+00> : vector<64xf32>
    %42 = vector.multi_reduction <add>, %41, %cst_24 [1] : vector<64x64xf32> to vector<64xf32>
    %43 = vector.shape_cast %42 : vector<64xf32> to vector<64x1xf32>
    %44 = vector.broadcast %43 : vector<64x1xf32> to vector<64x64xf32>
    %45 = arith.divf %41, %44 : vector<64x64xf32>
    %cst_25 = arith.constant dense<0.000000e+00> : vector<64x128xf32>
    %46 = tpu.matmul %45, %35, %cst_25 {dimension_numbers = #tpu.dot_dimension_numbers<[1], [0], [0], [1], [0, 0, 1, 1], [], []>} : vector<64x64xf32>, vector<64x128xf32>, vector<64x128xf32> -> vector<64x128xf32>
    %47 = arith.mulf %46, %16 : vector<64x128xf32>
    %48 = vector.shape_cast %47 : vector<64x128xf32> to vector<8x8x128xf32>
    %cst_26 = arith.constant dense<0.000000e+00> : vector<8x128xf32>
    %49 = vector.multi_reduction <add>, %48, %cst_26 [0] : vector<8x8x128xf32> to vector<8x128xf32>
    %50 = arith.addf %14, %49 : vector<8x128xf32>
    %51 = vector.extract_strided_slice %12 {offsets = [128, 0], sizes = [64, 128], strides = [1, 1]} : vector<512x128xf32> to vector<64x128xf32>
    %52 = vector.extract_strided_slice %13 {offsets = [128, 0], sizes = [64, 128], strides = [1, 1]} : vector<512x128xf32> to vector<64x128xf32>
    %cst_27 = arith.constant dense<0.000000e+00> : vector<64x64xf32>
    %53 = tpu.matmul %15, %51, %cst_27 {dimension_numbers = #tpu.dot_dimension_numbers<[1], [1], [0], [0], [0, 0, 1, 0], [], []>} : vector<64x128xf32>, vector<64x128xf32>, vector<64x64xf32> -> vector<64x64xf32>
    %cst_28 = arith.constant dense<0xFF800000> : vector<64xf32>
    %54 = vector.multi_reduction <maximumf>, %53, %cst_28 [1] : vector<64x64xf32> to vector<64xf32>
    %55 = vector.shape_cast %54 : vector<64xf32> to vector<64x1xf32>
    %56 = vector.broadcast %55 : vector<64x1xf32> to vector<64x64xf32>
    %57 = arith.subf %53, %56 : vector<64x64xf32>
    %58 = math.exp %57 : vector<64x64xf32>
    %cst_29 = arith.constant dense<0.000000e+00> : vector<64xf32>
    %59 = vector.multi_reduction <add>, %58, %cst_29 [1] : vector<64x64xf32> to vector<64xf32>
    %60 = vector.shape_cast %59 : vector<64xf32> to vector<64x1xf32>
    %61 = vector.broadcast %60 : vector<64x1xf32> to vector<64x64xf32>
    %62 = arith.divf %58, %61 : vector<64x64xf32>
    %cst_30 = arith.constant dense<0.000000e+00> : vector<64x128xf32>
    %63 = tpu.matmul %62, %52, %cst_30 {dimension_numbers = #tpu.dot_dimension_numbers<[1], [0], [0], [1], [0, 0, 1, 1], [], []>} : vector<64x64xf32>, vector<64x128xf32>, vector<64x128xf32> -> vector<64x128xf32>
    %64 = arith.mulf %63, %16 : vector<64x128xf32>
    %65 = vector.shape_cast %64 : vector<64x128xf32> to vector<8x8x128xf32>
    %cst_31 = arith.constant dense<0.000000e+00> : vector<8x128xf32>
    %66 = vector.multi_reduction <add>, %65, %cst_31 [0] : vector<8x8x128xf32> to vector<8x128xf32>
    %67 = arith.addf %14, %66 : vector<8x128xf32>
    %68 = vector.extract_strided_slice %12 {offsets = [192, 0], sizes = [64, 128], strides = [1, 1]} : vector<512x128xf32> to vector<64x128xf32>
    %69 = vector.extract_strided_slice %13 {offsets = [192, 0], sizes = [64, 128], strides = [1, 1]} : vector<512x128xf32> to vector<64x128xf32>
    %cst_32 = arith.constant dense<0.000000e+00> : vector<64x64xf32>
    %70 = tpu.matmul %15, %68, %cst_32 {dimension_numbers = #tpu.dot_dimension_numbers<[1], [1], [0], [0], [0, 0, 1, 0], [], []>} : vector<64x128xf32>, vector<64x128xf32>, vector<64x64xf32> -> vector<64x64xf32>
    %cst_33 = arith.constant dense<0xFF800000> : vector<64xf32>
    %71 = vector.multi_reduction <maximumf>, %70, %cst_33 [1] : vector<64x64xf32> to vector<64xf32>
    %72 = vector.shape_cast %71 : vector<64xf32> to vector<64x1xf32>
    %73 = vector.broadcast %72 : vector<64x1xf32> to vector<64x64xf32>
    %74 = arith.subf %70, %73 : vector<64x64xf32>
    %75 = math.exp %74 : vector<64x64xf32>
    %cst_34 = arith.constant dense<0.000000e+00> : vector<64xf32>
    %76 = vector.multi_reduction <add>, %75, %cst_34 [1] : vector<64x64xf32> to vector<64xf32>
    %77 = vector.shape_cast %76 : vector<64xf32> to vector<64x1xf32>
    %78 = vector.broadcast %77 : vector<64x1xf32> to vector<64x64xf32>
    %79 = arith.divf %75, %78 : vector<64x64xf32>
    %cst_35 = arith.constant dense<0.000000e+00> : vector<64x128xf32>
    %80 = tpu.matmul %79, %69, %cst_35 {dimension_numbers = #tpu.dot_dimension_numbers<[1], [0], [0], [1], [0, 0, 1, 1], [], []>} : vector<64x64xf32>, vector<64x128xf32>, vector<64x128xf32> -> vector<64x128xf32>
    %81 = arith.mulf %80, %16 : vector<64x128xf32>
    %82 = vector.shape_cast %81 : vector<64x128xf32> to vector<8x8x128xf32>
    %cst_36 = arith.constant dense<0.000000e+00> : vector<8x128xf32>
    %83 = vector.multi_reduction <add>, %82, %cst_36 [0] : vector<8x8x128xf32> to vector<8x128xf32>
    %84 = arith.addf %14, %83 : vector<8x128xf32>
    %85 = vector.extract_strided_slice %12 {offsets = [256, 0], sizes = [64, 128], strides = [1, 1]} : vector<512x128xf32> to vector<64x128xf32>
    %86 = vector.extract_strided_slice %13 {offsets = [256, 0], sizes = [64, 128], strides = [1, 1]} : vector<512x128xf32> to vector<64x128xf32>
    %cst_37 = arith.constant dense<0.000000e+00> : vector<64x64xf32>
    %87 = tpu.matmul %15, %85, %cst_37 {dimension_numbers = #tpu.dot_dimension_numbers<[1], [1], [0], [0], [0, 0, 1, 0], [], []>} : vector<64x128xf32>, vector<64x128xf32>, vector<64x64xf32> -> vector<64x64xf32>
    %cst_38 = arith.constant dense<0xFF800000> : vector<64xf32>
    %88 = vector.multi_reduction <maximumf>, %87, %cst_38 [1] : vector<64x64xf32> to vector<64xf32>
    %89 = vector.shape_cast %88 : vector<64xf32> to vector<64x1xf32>
    %90 = vector.broadcast %89 : vector<64x1xf32> to vector<64x64xf32>
    %91 = arith.subf %87, %90 : vector<64x64xf32>
    %92 = math.exp %91 : vector<64x64xf32>
    %cst_39 = arith.constant dense<0.000000e+00> : vector<64xf32>
    %93 = vector.multi_reduction <add>, %92, %cst_39 [1] : vector<64x64xf32> to vector<64xf32>
    %94 = vector.shape_cast %93 : vector<64xf32> to vector<64x1xf32>
    %95 = vector.broadcast %94 : vector<64x1xf32> to vector<64x64xf32>
    %96 = arith.divf %92, %95 : vector<64x64xf32>
    %cst_40 = arith.constant dense<0.000000e+00> : vector<64x128xf32>
    %97 = tpu.matmul %96, %86, %cst_40 {dimension_numbers = #tpu.dot_dimension_numbers<[1], [0], [0], [1], [0, 0, 1, 1], [], []>} : vector<64x64xf32>, vector<64x128xf32>, vector<64x128xf32> -> vector<64x128xf32>
    %98 = arith.mulf %97, %16 : vector<64x128xf32>
    %99 = vector.shape_cast %98 : vector<64x128xf32> to vector<8x8x128xf32>
    %cst_41 = arith.constant dense<0.000000e+00> : vector<8x128xf32>
    %100 = vector.multi_reduction <add>, %99, %cst_41 [0] : vector<8x8x128xf32> to vector<8x128xf32>
    %101 = arith.addf %14, %100 : vector<8x128xf32>
    %102 = vector.extract_strided_slice %12 {offsets = [320, 0], sizes = [64, 128], strides = [1, 1]} : vector<512x128xf32> to vector<64x128xf32>
    %103 = vector.extract_strided_slice %13 {offsets = [320, 0], sizes = [64, 128], strides = [1, 1]} : vector<512x128xf32> to vector<64x128xf32>
    %cst_42 = arith.constant dense<0.000000e+00> : vector<64x64xf32>
    %104 = tpu.matmul %15, %102, %cst_42 {dimension_numbers = #tpu.dot_dimension_numbers<[1], [1], [0], [0], [0, 0, 1, 0], [], []>} : vector<64x128xf32>, vector<64x128xf32>, vector<64x64xf32> -> vector<64x64xf32>
    %cst_43 = arith.constant dense<0xFF800000> : vector<64xf32>
    %105 = vector.multi_reduction <maximumf>, %104, %cst_43 [1] : vector<64x64xf32> to vector<64xf32>
    %106 = vector.shape_cast %105 : vector<64xf32> to vector<64x1xf32>
    %107 = vector.broadcast %106 : vector<64x1xf32> to vector<64x64xf32>
    %108 = arith.subf %104, %107 : vector<64x64xf32>
    %109 = math.exp %108 : vector<64x64xf32>
    %cst_44 = arith.constant dense<0.000000e+00> : vector<64xf32>
    %110 = vector.multi_reduction <add>, %109, %cst_44 [1] : vector<64x64xf32> to vector<64xf32>
    %111 = vector.shape_cast %110 : vector<64xf32> to vector<64x1xf32>
    %112 = vector.broadcast %111 : vector<64x1xf32> to vector<64x64xf32>
    %113 = arith.divf %109, %112 : vector<64x64xf32>
    %cst_45 = arith.constant dense<0.000000e+00> : vector<64x128xf32>
    %114 = tpu.matmul %113, %103, %cst_45 {dimension_numbers = #tpu.dot_dimension_numbers<[1], [0], [0], [1], [0, 0, 1, 1], [], []>} : vector<64x64xf32>, vector<64x128xf32>, vector<64x128xf32> -> vector<64x128xf32>
    %115 = arith.mulf %114, %16 : vector<64x128xf32>
    %116 = vector.shape_cast %115 : vector<64x128xf32> to vector<8x8x128xf32>
    %cst_46 = arith.constant dense<0.000000e+00> : vector<8x128xf32>
    %117 = vector.multi_reduction <add>, %116, %cst_46 [0] : vector<8x8x128xf32> to vector<8x128xf32>
    %118 = arith.addf %14, %117 : vector<8x128xf32>
    %119 = vector.extract_strided_slice %12 {offsets = [384, 0], sizes = [64, 128], strides = [1, 1]} : vector<512x128xf32> to vector<64x128xf32>
    %120 = vector.extract_strided_slice %13 {offsets = [384, 0], sizes = [64, 128], strides = [1, 1]} : vector<512x128xf32> to vector<64x128xf32>
    %cst_47 = arith.constant dense<0.000000e+00> : vector<64x64xf32>
    %121 = tpu.matmul %15, %119, %cst_47 {dimension_numbers = #tpu.dot_dimension_numbers<[1], [1], [0], [0], [0, 0, 1, 0], [], []>} : vector<64x128xf32>, vector<64x128xf32>, vector<64x64xf32> -> vector<64x64xf32>
    %cst_48 = arith.constant dense<0xFF800000> : vector<64xf32>
    %122 = vector.multi_reduction <maximumf>, %121, %cst_48 [1] : vector<64x64xf32> to vector<64xf32>
    %123 = vector.shape_cast %122 : vector<64xf32> to vector<64x1xf32>
    %124 = vector.broadcast %123 : vector<64x1xf32> to vector<64x64xf32>
    %125 = arith.subf %121, %124 : vector<64x64xf32>
    %126 = math.exp %125 : vector<64x64xf32>
    %cst_49 = arith.constant dense<0.000000e+00> : vector<64xf32>
    %127 = vector.multi_reduction <add>, %126, %cst_49 [1] : vector<64x64xf32> to vector<64xf32>
    %128 = vector.shape_cast %127 : vector<64xf32> to vector<64x1xf32>
    %129 = vector.broadcast %128 : vector<64x1xf32> to vector<64x64xf32>
    %130 = arith.divf %126, %129 : vector<64x64xf32>
    %cst_50 = arith.constant dense<0.000000e+00> : vector<64x128xf32>
    %131 = tpu.matmul %130, %120, %cst_50 {dimension_numbers = #tpu.dot_dimension_numbers<[1], [0], [0], [1], [0, 0, 1, 1], [], []>} : vector<64x64xf32>, vector<64x128xf32>, vector<64x128xf32> -> vector<64x128xf32>
    %132 = arith.mulf %131, %16 : vector<64x128xf32>
    %133 = vector.shape_cast %132 : vector<64x128xf32> to vector<8x8x128xf32>
    %cst_51 = arith.constant dense<0.000000e+00> : vector<8x128xf32>
    %134 = vector.multi_reduction <add>, %133, %cst_51 [0] : vector<8x8x128xf32> to vector<8x128xf32>
    %135 = arith.addf %14, %134 : vector<8x128xf32>
    %136 = vector.extract_strided_slice %12 {offsets = [448, 0], sizes = [64, 128], strides = [1, 1]} : vector<512x128xf32> to vector<64x128xf32>
    %137 = vector.extract_strided_slice %13 {offsets = [448, 0], sizes = [64, 128], strides = [1, 1]} : vector<512x128xf32> to vector<64x128xf32>
    %cst_52 = arith.constant dense<0.000000e+00> : vector<64x64xf32>
    %138 = tpu.matmul %15, %136, %cst_52 {dimension_numbers = #tpu.dot_dimension_numbers<[1], [1], [0], [0], [0, 0, 1, 0], [], []>} : vector<64x128xf32>, vector<64x128xf32>, vector<64x64xf32> -> vector<64x64xf32>
    %cst_53 = arith.constant dense<0xFF800000> : vector<64xf32>
    %139 = vector.multi_reduction <maximumf>, %138, %cst_53 [1] : vector<64x64xf32> to vector<64xf32>
    %140 = vector.shape_cast %139 : vector<64xf32> to vector<64x1xf32>
    %141 = vector.broadcast %140 : vector<64x1xf32> to vector<64x64xf32>
    %142 = arith.subf %138, %141 : vector<64x64xf32>
    %143 = math.exp %142 : vector<64x64xf32>
    %cst_54 = arith.constant dense<0.000000e+00> : vector<64xf32>
    %144 = vector.multi_reduction <add>, %143, %cst_54 [1] : vector<64x64xf32> to vector<64xf32>
    %145 = vector.shape_cast %144 : vector<64xf32> to vector<64x1xf32>
    %146 = vector.broadcast %145 : vector<64x1xf32> to vector<64x64xf32>
    %147 = arith.divf %143, %146 : vector<64x64xf32>
    %cst_55 = arith.constant dense<0.000000e+00> : vector<64x128xf32>
    %148 = tpu.matmul %147, %137, %cst_55 {dimension_numbers = #tpu.dot_dimension_numbers<[1], [0], [0], [1], [0, 0, 1, 1], [], []>} : vector<64x64xf32>, vector<64x128xf32>, vector<64x128xf32> -> vector<64x128xf32>
    %149 = arith.mulf %148, %16 : vector<64x128xf32>
    %150 = vector.shape_cast %149 : vector<64x128xf32> to vector<8x8x128xf32>
    %cst_56 = arith.constant dense<0.000000e+00> : vector<8x128xf32>
    %151 = vector.multi_reduction <add>, %150, %cst_56 [0] : vector<8x8x128xf32> to vector<8x128xf32>
    %152 = arith.addf %14, %151 : vector<8x128xf32>
    %153 = tpu.concatenate %33, %50, %67, %84, %101, %118, %135, %152 in 0 : vector<8x128xf32>, vector<8x128xf32>, vector<8x128xf32>, vector<8x128xf32>, vector<8x128xf32>, vector<8x128xf32>, vector<8x128xf32>, vector<8x128xf32> -> vector<64x128xf32>
    %c0_57 = arith.constant 0 : index
    %c0_58 = arith.constant 0 : index
    %154 = vector.load %arg9[%c0_57, %c0_58] : memref<128x128xf32, #tpu.memory_space<vmem>>, vector<128x128xf32>
    %cst_59 = arith.constant dense<0.000000e+00> : vector<64x128xf32>
    %155 = tpu.matmul %153, %154, %cst_59 {dimension_numbers = #tpu.dot_dimension_numbers<[1], [0], [0], [1], [0, 0, 1, 1], [], []>} : vector<64x128xf32>, vector<128x128xf32>, vector<64x128xf32> -> vector<64x128xf32>
    %c0_60 = arith.constant 0 : index
    %c0_61 = arith.constant 0 : index
    %156 = vector.load %arg10[%c0_60, %c0_61] : memref<1x128xf32, #tpu.memory_space<vmem>>, vector<1x128xf32>
    %157 = vector.broadcast %156 : vector<1x128xf32> to vector<64x128xf32>
    %158 = arith.addf %155, %157 : vector<64x128xf32>
    %cst_62 = arith.constant 0.000000e+00 : f32
    %159 = vector.broadcast %cst_62 : f32 to vector<64x128xf32>
    %160 = arith.maximumf %158, %159 : vector<64x128xf32>
    %161 = arith.addf %153, %160 : vector<64x128xf32>
    %162 = vector.shape_cast %161 : vector<64x128xf32> to vector<8x8x128xf32>
    %cst_63 = arith.constant dense<0xFF800000> : vector<8x128xf32>
    %163 = vector.multi_reduction <maximumf>, %162, %cst_63 [1] : vector<8x8x128xf32> to vector<8x128xf32>
    %c0_64 = arith.constant 0 : index
    %c0_65 = arith.constant 0 : index
    %164 = vector.load %arg11[%c0_64, %c0_65] : memref<128x64xf32, #tpu.memory_space<vmem>>, vector<128x64xf32>
    %cst_66 = arith.constant dense<0.000000e+00> : vector<8x64xf32>
    %165 = tpu.matmul %163, %164, %cst_66 {dimension_numbers = #tpu.dot_dimension_numbers<[1], [0], [0], [1], [0, 0, 1, 1], [], []>} : vector<8x128xf32>, vector<128x64xf32>, vector<8x64xf32> -> vector<8x64xf32>
    %c0_67 = arith.constant 0 : index
    %c0_68 = arith.constant 0 : index
    %166 = vector.load %arg12[%c0_67, %c0_68] : memref<1x64xf32, #tpu.memory_space<vmem>>, vector<1x64xf32>
    %167 = vector.broadcast %166 : vector<1x64xf32> to vector<8x64xf32>
    %168 = arith.addf %165, %167 : vector<8x64xf32>
    %c0_69 = arith.constant 0 : index
    %c0_70 = arith.constant 0 : index
    %169 = vector.load %arg13[%c0_69, %c0_70] : memref<8x64xf32, #tpu.memory_space<vmem>>, vector<8x64xf32>
    tpu.vector_store %arg13[%c0_69, %c0_70], %168 {strides = array<i32>} : memref<8x64xf32, #tpu.memory_space<vmem>>, vector<8x64xf32>,
    return
  }
  func.func @transform_0(%arg0: i32) -> (i32, i32, i32) {
    %c0_i32 = arith.constant 0 : i32
    %c0_i32_0 = arith.constant 0 : i32
    %c0_i32_1 = arith.constant 0 : i32
    return %arg0, %c0_i32, %c0_i32_0 : i32, i32, i32
  }
  func.func @transform_1(%arg0: i32) -> (i32, i32) {
    %c0_i32 = arith.constant 0 : i32
    %c0_i32_0 = arith.constant 0 : i32
    %c0_i32_1 = arith.constant 0 : i32
    return %c0_i32, %c0_i32_0 : i32, i32
  }
  func.func @transform_2(%arg0: i32) -> (i32, i32) {
    %c0_i32 = arith.constant 0 : i32
    %c0_i32_0 = arith.constant 0 : i32
    %c0_i32_1 = arith.constant 0 : i32
    return %c0_i32, %c0_i32_0 : i32, i32
  }
  func.func @transform_3(%arg0: i32) -> (i32, i32) {
    %c0_i32 = arith.constant 0 : i32
    %c0_i32_0 = arith.constant 0 : i32
    %c0_i32_1 = arith.constant 0 : i32
    return %c0_i32, %c0_i32_0 : i32, i32
  }
  func.func @transform_4(%arg0: i32) -> (i32, i32) {
    %c0_i32 = arith.constant 0 : i32
    %c0_i32_0 = arith.constant 0 : i32
    %c0_i32_1 = arith.constant 0 : i32
    return %c0_i32, %c0_i32_0 : i32, i32
  }
  func.func @transform_5(%arg0: i32) -> (i32, i32) {
    %c0_i32 = arith.constant 0 : i32
    %c0_i32_0 = arith.constant 0 : i32
    %c0_i32_1 = arith.constant 0 : i32
    return %c0_i32, %c0_i32_0 : i32, i32
  }
  func.func @transform_6(%arg0: i32) -> (i32, i32) {
    %c0_i32 = arith.constant 0 : i32
    %c0_i32_0 = arith.constant 0 : i32
    %c0_i32_1 = arith.constant 0 : i32
    return %c0_i32, %c0_i32_0 : i32, i32
  }
  func.func @transform_7(%arg0: i32) -> (i32, i32) {
    %c0_i32 = arith.constant 0 : i32
    %c0_i32_0 = arith.constant 0 : i32
    %c0_i32_1 = arith.constant 0 : i32
    return %c0_i32, %c0_i32_0 : i32, i32
  }
  func.func @transform_8(%arg0: i32) -> (i32, i32) {
    %c0_i32 = arith.constant 0 : i32
    %c0_i32_0 = arith.constant 0 : i32
    %c0_i32_1 = arith.constant 0 : i32
    return %c0_i32, %c0_i32_0 : i32, i32
  }
  func.func @transform_9(%arg0: i32) -> (i32, i32) {
    %c0_i32 = arith.constant 0 : i32
    %c0_i32_0 = arith.constant 0 : i32
    %c0_i32_1 = arith.constant 0 : i32
    return %c0_i32, %c0_i32_0 : i32, i32
  }
  func.func @transform_10(%arg0: i32) -> (i32, i32) {
    %c0_i32 = arith.constant 0 : i32
    %c0_i32_0 = arith.constant 0 : i32
    %c0_i32_1 = arith.constant 0 : i32
    return %c0_i32, %c0_i32_0 : i32, i32
  }
  func.func @transform_11(%arg0: i32) -> (i32, i32) {
    %c0_i32 = arith.constant 0 : i32
    %c0_i32_0 = arith.constant 0 : i32
    %c0_i32_1 = arith.constant 0 : i32
    return %c0_i32, %c0_i32_0 : i32, i32
  }
  func.func @transform_12(%arg0: i32) -> (i32, i32) {
    %c0_i32 = arith.constant 0 : i32
    %c0_i32_0 = arith.constant 0 : i32
    return %arg0, %c0_i32 : i32, i32
  }
}

</mosaic_0001>

<llo_original>
// kernel: tpu_custom_call.1
$region0: #{tpu_custom_call.1}
  #allocation0 [shape = 'u32[]', space=smem, size = 0x4, offset = 0x4, fixed_abs, tag = 'smem constant byte address 0x4 - core index']
  #allocation1 [shape = 'u32[144,128]{1,0:T(1,128)}', space=vmem, size = 0x12000, scoped, tag = 'internal scratch']
  %s0 = inlined_call_operand.vmem [shape: f32[16,64,6], index: 0, kind: input, shape index: {}]
  %s1 = inlined_call_operand.vmem [shape: f32[6,128], index: 1, kind: input, shape index: {}]
  %s2 = inlined_call_operand.vmem [shape: f32[1,128], index: 2, kind: input, shape index: {}]
  %s3 = inlined_call_operand.vmem [shape: f32[128,256], index: 3, kind: input, shape index: {}]
  %s4 = inlined_call_operand.vmem [shape: f32[1,256], index: 4, kind: input, shape index: {}]
  %s5 = inlined_call_operand.vmem [shape: f32[8,128], index: 5, kind: input, shape index: {}]
  %s6 = inlined_call_operand.vmem [shape: f32[64,128], index: 6, kind: input, shape index: {}]
  %s7 = inlined_call_operand.vmem [shape: f32[64,128], index: 7, kind: input, shape index: {}]
  %s8 = inlined_call_operand.vmem [shape: f32[128,128], index: 8, kind: input, shape index: {}]
  %s9 = inlined_call_operand.vmem [shape: f32[1,128], index: 9, kind: input, shape index: {}]
  %s10 = inlined_call_operand.vmem [shape: f32[128,64], index: 10, kind: input, shape index: {}]
  %s11 = inlined_call_operand.vmem [shape: f32[1,64], index: 11, kind: input, shape index: {}]
  %s12 = inlined_call_operand.hbm [shape: f32[16,64], index: 12, kind: output, shape index: {}]
  %s13 = sld [smem:[#allocation0]]
  $region81: #{tpu_custom_call.1} parent=0
    _
  %s15 = ssub.s32 1, %s13
  %s16 = scalar_select 0, %s15, %s13
  $region1: #{tpu_custom_call.1} parent=0
    #allocation2 [shape = 'u8[8192]{0}', space=vmem, size = 0x2000, scoped, tag = 'output window, operand 0']
    #allocation3 [shape = 's32[2]{0}', space=sflag, size = 0x8, scoped, tag = 'scoped memory for tpu_custom_call.1']
    %17 = vsyncpa [#allocation3], 0
    %s18 = scalar_lea.sflag [#allocation3], 1
    %19 = vsyncpa %s18, 0
    loop: start=0, step=1, limit=4
    $region2: #{tpu_custom_call.1} parent=1 // loop_pre_header
      _
    $region3: #{tpu_custom_call.1} parent=1 // loop_header
      %s21 = sphi 0, %s25
      %p22 = scmp.ge.s32.totalorder %s21, 4
      %s31 = sphi 0, %s33
      %s34 = sphi 0, %s31
      %s35 = sphi 0, %s34
      %s51 = sphi 0, %s35
      %s55 = sphi 0, %s55
      %s57 = sphi 0, %s55
      %s58 = sphi 0, %s57
      %s72 = sphi 0, %s58
      %s76 = sphi 0, %s76
      %s78 = sphi 0, %s76
      %s79 = sphi 0, %s78
      %s93 = sphi 0, %s79
      %s97 = sphi 0, %s97
      %s99 = sphi 0, %s97
      %s100 = sphi 0, %s99
      %s114 = sphi 0, %s100
      %s118 = sphi 0, %s118
      %s120 = sphi 0, %s118
      %s121 = sphi 0, %s120
      %s135 = sphi 0, %s121
      %s139 = sphi 0, %s139
      %s141 = sphi 0, %s139
      %s142 = sphi 0, %s141
      %s156 = sphi 0, %s142
      %s160 = sphi 0, %s160
      %s162 = sphi 0, %s160
      %s163 = sphi 0, %s162
      %s177 = sphi 0, %s163
      %s181 = sphi 0, %s181
      %s183 = sphi 0, %s181
      %s184 = sphi 0, %s183
      %s198 = sphi 0, %s184
      %s202 = sphi 0, %s202
      %s204 = sphi 0, %s202
      %s205 = sphi 0, %s204
      %s219 = sphi 0, %s205
      %s223 = sphi 0, %s223
      %s225 = sphi 0, %s223
      %s226 = sphi 0, %s225
      %s240 = sphi 0, %s226
      %s244 = sphi 0, %s244
      %s246 = sphi 0, %s244
      %s247 = sphi 0, %s246
      %s261 = sphi 0, %s247
      %s265 = sphi 0, %s265
      %s267 = sphi 0, %s265
      %s268 = sphi 0, %s267
      %s282 = sphi 0, %s268
      %s288 = sphi 0, %s290
      %s291 = sphi 0, %s288
      %s292 = sphi 0, %s291
      %s308 = sphi 0, %s292
    $region4: #{tpu_custom_call.1} parent=1 // loop_header_branch
      %24 = sbr.rel (%p22) target = $region8
    $region5: #{tpu_custom_call.1} parent=1 // loop_body
      %s26 = ssub.s32 %s21, 1
      %s27 = ssub.s32 %s21, 2
      %s28 = sadd.s32 %s21, 1
      %s29 = ssub.s32 %s21, %s28
      %p30 = scmp.eq.s32.totalorder %s29, 0
      %s32 = sadd.s32 %s31, 1
      %s33 = scalar_select %p30, %s31, %s32
      %p36 = pneg %p30
      %p37 = scmp.eq.s32.totalorder %s21, 1
      %p38 = por %p36, %p37
      %p39 = scmp.ne.s32.totalorder %s31, %s34
      %p40 = scmp.eq.s32.totalorder %s21, 0
      %p41 = por %p39, %p40
      %p42 = scmp.ne.s32.totalorder %s31, %s34
      %p43 = scmp.eq.s32.totalorder %s26, 1
      %p44 = por %p42, %p43
      %p45 = scmp.ne.s32.totalorder %s34, %s35
      %p46 = scmp.eq.s32.totalorder %s26, 0
      %p47 = por %p45, %p46
      %p48 = scmp.ne.s32.totalorder %s34, %s35
      %p49 = scmp.eq.s32.totalorder %s27, 1
      %p50 = por %p48, %p49
      %p52 = scmp.ne.s32.totalorder %s35, %s51
      %p53 = scmp.eq.s32.totalorder %s27, 0
      %p54 = por %p52, %p53
      %s56 = sadd.s32 %s55, 1
      %p59 = scmp.eq.s32.totalorder %s21, 1
      %p60 = scmp.ne.s32.totalorder %s55, %s57
      %p61 = scmp.eq.s32.totalorder %s21, 0
      %p62 = por %p60, %p61
      %p63 = scmp.ne.s32.totalorder %s55, %s57
      %p64 = scmp.eq.s32.totalorder %s26, 1
      %p65 = por %p63, %p64
      %p66 = scmp.ne.s32.totalorder %s57, %s58
      %p67 = scmp.eq.s32.totalorder %s26, 0
      %p68 = por %p66, %p67
      %p69 = scmp.ne.s32.totalorder %s57, %s58
      %p70 = scmp.eq.s32.totalorder %s27, 1
      %p71 = por %p69, %p70
      %p73 = scmp.ne.s32.totalorder %s58, %s72
      %p74 = scmp.eq.s32.totalorder %s27, 0
      %p75 = por %p73, %p74
      %s77 = sadd.s32 %s76, 1
      %p80 = scmp.eq.s32.totalorder %s21, 1
      %p81 = scmp.ne.s32.totalorder %s76, %s78
      %p82 = scmp.eq.s32.totalorder %s21, 0
      %p83 = por %p81, %p82
      %p84 = scmp.ne.s32.totalorder %s76, %s78
      %p85 = scmp.eq.s32.totalorder %s26, 1
      %p86 = por %p84, %p85
      %p87 = scmp.ne.s32.totalorder %s78, %s79
      %p88 = scmp.eq.s32.totalorder %s26, 0
      %p89 = por %p87, %p88
      %p90 = scmp.ne.s32.totalorder %s78, %s79
      %p91 = scmp.eq.s32.totalorder %s27, 1
      %p92 = por %p90, %p91
      %p94 = scmp.ne.s32.totalorder %s79, %s93
      %p95 = scmp.eq.s32.totalorder %s27, 0
      %p96 = por %p94, %p95
      %s98 = sadd.s32 %s97, 1
      %p101 = scmp.eq.s32.totalorder %s21, 1
      %p102 = scmp.ne.s32.totalorder %s97, %s99
      %p103 = scmp.eq.s32.totalorder %s21, 0
      %p104 = por %p102, %p103
      %p105 = scmp.ne.s32.totalorder %s97, %s99
      %p106 = scmp.eq.s32.totalorder %s26, 1
      %p107 = por %p105, %p106
      %p108 = scmp.ne.s32.totalorder %s99, %s100
      %p109 = scmp.eq.s32.totalorder %s26, 0
      %p110 = por %p108, %p109
      %p111 = scmp.ne.s32.totalorder %s99, %s100
      %p112 = scmp.eq.s32.totalorder %s27, 1
      %p113 = por %p111, %p112
      %p115 = scmp.ne.s32.totalorder %s100, %s114
      %p116 = scmp.eq.s32.totalorder %s27, 0
      %p117 = por %p115, %p116
      %s119 = sadd.s32 %s118, 1
      %p122 = scmp.eq.s32.totalorder %s21, 1
      %p123 = scmp.ne.s32.totalorder %s118, %s120
      %p124 = scmp.eq.s32.totalorder %s21, 0
      %p125 = por %p123, %p124
      %p126 = scmp.ne.s32.totalorder %s118, %s120
      %p127 = scmp.eq.s32.totalorder %s26, 1
      %p128 = por %p126, %p127
      %p129 = scmp.ne.s32.totalorder %s120, %s121
      %p130 = scmp.eq.s32.totalorder %s26, 0
      %p131 = por %p129, %p130
      %p132 = scmp.ne.s32.totalorder %s120, %s121
      %p133 = scmp.eq.s32.totalorder %s27, 1
      %p134 = por %p132, %p133
      %p136 = scmp.ne.s32.totalorder %s121, %s135
      %p137 = scmp.eq.s32.totalorder %s27, 0
      %p138 = por %p136, %p137
      %s140 = sadd.s32 %s139, 1
      %p143 = scmp.eq.s32.totalorder %s21, 1
      %p144 = scmp.ne.s32.totalorder %s139, %s141
      %p145 = scmp.eq.s32.totalorder %s21, 0
      %p146 = por %p144, %p145
      %p147 = scmp.ne.s32.totalorder %s139, %s141
      %p148 = scmp.eq.s32.totalorder %s26, 1
      %p149 = por %p147, %p148
      %p150 = scmp.ne.s32.totalorder %s141, %s142
      %p151 = scmp.eq.s32.totalorder %s26, 0
      %p152 = por %p150, %p151
      %p153 = scmp.ne.s32.totalorder %s141, %s142
      %p154 = scmp.eq.s32.totalorder %s27, 1
      %p155 = por %p153, %p154
      %p157 = scmp.ne.s32.totalorder %s142, %s156
      %p158 = scmp.eq.s32.totalorder %s27, 0
      %p159 = por %p157, %p158
      %s161 = sadd.s32 %s160, 1
      %p164 = scmp.eq.s32.totalorder %s21, 1
      %p165 = scmp.ne.s32.totalorder %s160, %s162
      %p166 = scmp.eq.s32.totalorder %s21, 0
      %p167 = por %p165, %p166
      %p168 = scmp.ne.s32.totalorder %s160, %s162
      %p169 = scmp.eq.s32.totalorder %s26, 1
      %p170 = por %p168, %p169
      %p171 = scmp.ne.s32.totalorder %s162, %s163
      %p172 = scmp.eq.s32.totalorder %s26, 0
      %p173 = por %p171, %p172
      %p174 = scmp.ne.s32.totalorder %s162, %s163
      %p175 = scmp.eq.s32.totalorder %s27, 1
      %p176 = por %p174, %p175
      %p178 = scmp.ne.s32.totalorder %s163, %s177
      %p179 = scmp.eq.s32.totalorder %s27, 0
      %p180 = por %p178, %p179
      %s182 = sadd.s32 %s181, 1
      %p185 = scmp.eq.s32.totalorder %s21, 1
      %p186 = scmp.ne.s32.totalorder %s181, %s183
      %p187 = scmp.eq.s32.totalorder %s21, 0
      %p188 = por %p186, %p187
      %p189 = scmp.ne.s32.totalorder %s181, %s183
      %p190 = scmp.eq.s32.totalorder %s26, 1
      %p191 = por %p189, %p190
      %p192 = scmp.ne.s32.totalorder %s183, %s184
      %p193 = scmp.eq.s32.totalorder %s26, 0
      %p194 = por %p192, %p193
      %p195 = scmp.ne.s32.totalorder %s183, %s184
      %p196 = scmp.eq.s32.totalorder %s27, 1
      %p197 = por %p195, %p196
      %p199 = scmp.ne.s32.totalorder %s184, %s198
      %p200 = scmp.eq.s32.totalorder %s27, 0
      %p201 = por %p199, %p200
      %s203 = sadd.s32 %s202, 1
      %p206 = scmp.eq.s32.totalorder %s21, 1
      %p207 = scmp.ne.s32.totalorder %s202, %s204
      %p208 = scmp.eq.s32.totalorder %s21, 0
      %p209 = por %p207, %p208
      %p210 = scmp.ne.s32.totalorder %s202, %s204
      %p211 = scmp.eq.s32.totalorder %s26, 1
      %p212 = por %p210, %p211
      %p213 = scmp.ne.s32.totalorder %s204, %s205
      %p214 = scmp.eq.s32.totalorder %s26, 0
      %p215 = por %p213, %p214
      %p216 = scmp.ne.s32.totalorder %s204, %s205
      %p217 = scmp.eq.s32.totalorder %s27, 1
      %p218 = por %p216, %p217
      %p220 = scmp.ne.s32.totalorder %s205, %s219
      %p221 = scmp.eq.s32.totalorder %s27, 0
      %p222 = por %p220, %p221
      %s224 = sadd.s32 %s223, 1
      %p227 = scmp.eq.s32.totalorder %s21, 1
      %p228 = scmp.ne.s32.totalorder %s223, %s225
      %p229 = scmp.eq.s32.totalorder %s21, 0
      %p230 = por %p228, %p229
      %p231 = scmp.ne.s32.totalorder %s223, %s225
      %p232 = scmp.eq.s32.totalorder %s26, 1
      %p233 = por %p231, %p232
      %p234 = scmp.ne.s32.totalorder %s225, %s226
      %p235 = scmp.eq.s32.totalorder %s26, 0
      %p236 = por %p234, %p235
      %p237 = scmp.ne.s32.totalorder %s225, %s226
      %p238 = scmp.eq.s32.totalorder %s27, 1
      %p239 = por %p237, %p238
      %p241 = scmp.ne.s32.totalorder %s226, %s240
      %p242 = scmp.eq.s32.totalorder %s27, 0
      %p243 = por %p241, %p242
      %s245 = sadd.s32 %s244, 1
      %p248 = scmp.eq.s32.totalorder %s21, 1
      %p249 = scmp.ne.s32.totalorder %s244, %s246
      %p250 = scmp.eq.s32.totalorder %s21, 0
      %p251 = por %p249, %p250
      %p252 = scmp.ne.s32.totalorder %s244, %s246
      %p253 = scmp.eq.s32.totalorder %s26, 1
      %p254 = por %p252, %p253
      %p255 = scmp.ne.s32.totalorder %s246, %s247
      %p256 = scmp.eq.s32.totalorder %s26, 0
      %p257 = por %p255, %p256
      %p258 = scmp.ne.s32.totalorder %s246, %s247
      %p259 = scmp.eq.s32.totalorder %s27, 1
      %p260 = por %p258, %p259
      %p262 = scmp.ne.s32.totalorder %s247, %s261
      %p263 = scmp.eq.s32.totalorder %s27, 0
      %p264 = por %p262, %p263
      %s266 = sadd.s32 %s265, 1
      %p269 = scmp.eq.s32.totalorder %s21, 1
      %p270 = scmp.ne.s32.totalorder %s265, %s267
      %p271 = scmp.eq.s32.totalorder %s21, 0
      %p272 = por %p270, %p271
      %p273 = scmp.ne.s32.totalorder %s265, %s267
      %p274 = scmp.eq.s32.totalorder %s26, 1
      %p275 = por %p273, %p274
      %p276 = scmp.ne.s32.totalorder %s267, %s268
      %p277 = scmp.eq.s32.totalorder %s26, 0
      %p278 = por %p276, %p277
      %p279 = scmp.ne.s32.totalorder %s267, %s268
      %p280 = scmp.eq.s32.totalorder %s27, 1
      %p281 = por %p279, %p280
      %p283 = scmp.ne.s32.totalorder %s268, %s282
      %p284 = scmp.eq.s32.totalorder %s27, 0
      %p285 = por %p283, %p284
      %s286 = ssub.s32 %s21, %s28
      %p287 = scmp.eq.s32.totalorder %s286, 0
      %s289 = sadd.s32 %s288, 1
      %s290 = scalar_select %p287, %s288, %s289
      %p293 = pneg %p287
      %p294 = scmp.eq.s32.totalorder %s21, 1
      %p295 = por %p293, %p294
      %p296 = scmp.ne.s32.totalorder %s288, %s291
      %p297 = scmp.eq.s32.totalorder %s21, 0
      %p298 = por %p296, %p297
      %p299 = scmp.ne.s32.totalorder %s288, %s291
      %p300 = scmp.eq.s32.totalorder %s26, 1
      %p301 = por %p299, %p300
      %p302 = scmp.ne.s32.totalorder %s291, %s292
      %p303 = scmp.eq.s32.totalorder %s26, 0
      %p304 = por %p302, %p303
      %p305 = scmp.ne.s32.totalorder %s291, %s292
      %p306 = scmp.eq.s32.totalorder %s27, 1
      %p307 = por %p305, %p306
      %p309 = scmp.ne.s32.totalorder %s292, %s308
      %p310 = scmp.eq.s32.totalorder %s27, 0
      %p311 = por %p309, %p310
      %p312 = scmp.le.s32.totalorder 1, %s21
      %p313 = scmp.lt.s32.totalorder %s21, 3
      %p314 = pnand %p312, %p313
      %p315 = pneg %p314
      // Predicated region
      $region9: #{tpu_custom_call.1} parent=5 // pred_check
        _
      $region10: #{tpu_custom_call.1} parent=5 // pred_check_branch
        %317 = sbr.rel (%p314) target = $region12
      $region11: #{tpu_custom_call.1} parent=5 // pred_region
        %s318 = ssub.s32 %s21, 1
        // Predicated region
        $region13: #{tpu_custom_call.1} parent=11 // pred_check
          %p319 = pneg %p68
        $region14: #{tpu_custom_call.1} parent=11 // pred_check_branch
          %321 = sbr.rel (%p319) target = $region16
        $region15: #{tpu_custom_call.1} parent=11 // pred_region
          _
        $region16: #{tpu_custom_call.1} parent=11 // pred_fallthru
          _
        // Predicated region
        $region17: #{tpu_custom_call.1} parent=11 // pred_check
          %p322 = pneg %p89
        $region18: #{tpu_custom_call.1} parent=11 // pred_check_branch
          %324 = sbr.rel (%p322) target = $region20
        $region19: #{tpu_custom_call.1} parent=11 // pred_region
          _
        $region20: #{tpu_custom_call.1} parent=11 // pred_fallthru
          _
        // Predicated region
        $region21: #{tpu_custom_call.1} parent=11 // pred_check
          %p325 = pneg %p110
        $region22: #{tpu_custom_call.1} parent=11 // pred_check_branch
          %327 = sbr.rel (%p325) target = $region24
        $region23: #{tpu_custom_call.1} parent=11 // pred_region
          _
        $region24: #{tpu_custom_call.1} parent=11 // pred_fallthru
          _
        // Predicated region
        $region25: #{tpu_custom_call.1} parent=11 // pred_check
          %p328 = pneg %p131
        $region26: #{tpu_custom_call.1} parent=11 // pred_check_branch
          %330 = sbr.rel (%p328) target = $region28
        $region27: #{tpu_custom_call.1} parent=11 // pred_region
          _
        $region28: #{tpu_custom_call.1} parent=11 // pred_fallthru
          _
        // Predicated region
        $region29: #{tpu_custom_call.1} parent=11 // pred_check
          %p331 = pneg %p152
        $region30: #{tpu_custom_call.1} parent=11 // pred_check_branch
          %333 = sbr.rel (%p331) target = $region32
        $region31: #{tpu_custom_call.1} parent=11 // pred_region
          _
        $region32: #{tpu_custom_call.1} parent=11 // pred_fallthru
          _
        // Predicated region
        $region33: #{tpu_custom_call.1} parent=11 // pred_check
          %p334 = pneg %p173
        $region34: #{tpu_custom_call.1} parent=11 // pred_check_branch
          %336 = sbr.rel (%p334) target = $region36
        $region35: #{tpu_custom_call.1} parent=11 // pred_region
          _
        $region36: #{tpu_custom_call.1} parent=11 // pred_fallthru
          _
        // Predicated region
        $region37: #{tpu_custom_call.1} parent=11 // pred_check
          %p337 = pneg %p194
        $region38: #{tpu_custom_call.1} parent=11 // pred_check_branch
          %339 = sbr.rel (%p337) target = $region40
        $region39: #{tpu_custom_call.1} parent=11 // pred_region
          _
        $region40: #{tpu_custom_call.1} parent=11 // pred_fallthru
          _
        // Predicated region
        $region41: #{tpu_custom_call.1} parent=11 // pred_check
          %p340 = pneg %p215
        $region42: #{tpu_custom_call.1} parent=11 // pred_check_branch
          %342 = sbr.rel (%p340) target = $region44
        $region43: #{tpu_custom_call.1} parent=11 // pred_region
          _
        $region44: #{tpu_custom_call.1} parent=11 // pred_fallthru
          _
        // Predicated region
        $region45: #{tpu_custom_call.1} parent=11 // pred_check
          %p343 = pneg %p236
        $region46: #{tpu_custom_call.1} parent=11 // pred_check_branch
          %345 = sbr.rel (%p343) target = $region48
        $region47: #{tpu_custom_call.1} parent=11 // pred_region
          _
        $region48: #{tpu_custom_call.1} parent=11 // pred_fallthru
          _
        // Predicated region
        $region49: #{tpu_custom_call.1} parent=11 // pred_check
          %p346 = pneg %p257
        $region50: #{tpu_custom_call.1} parent=11 // pred_check_branch
          %348 = sbr.rel (%p346) target = $region52
        $region51: #{tpu_custom_call.1} parent=11 // pred_region
          _
        $region52: #{tpu_custom_call.1} parent=11 // pred_fallthru
          _
        // Predicated region
        $region53: #{tpu_custom_call.1} parent=11 // pred_check
          %p349 = pneg %p278
        $region54: #{tpu_custom_call.1} parent=11 // pred_check_branch
          %351 = sbr.rel (%p349) target = $region56
        $region55: #{tpu_custom_call.1} parent=11 // pred_region
          _
        $region56: #{tpu_custom_call.1} parent=11 // pred_fallthru
          _
      $region12: #{tpu_custom_call.1} parent=5 // pred_fallthru
        _
      %p352 = scmp.lt.s32.totalorder %s21, 2
      // Predicated region
      $region57: #{tpu_custom_call.1} parent=5 // pred_check
        %p353 = pneg %p352
      $region58: #{tpu_custom_call.1} parent=5 // pred_check_branch
        %355 = sbr.rel (%p353) target = $region60
      $region59: #{tpu_custom_call.1} parent=5 // pred_region
        // Predicated region
        $region61: #{tpu_custom_call.1} parent=59 // pred_check
          %p356 = pneg %p41
        $region62: #{tpu_custom_call.1} parent=59 // pred_check_branch
          %358 = sbr.rel (%p356) target = $region64
        $region63: #{tpu_custom_call.1} parent=59 // pred_region
          %s359 = smul.u32 8, %s21
          %p360 = scmp.lt.s32.totalorder %s359, 15
          %s361 = scalar_select %p360, %s359, 15
          %s362 = smul.addr %s361, 8
          %s363 = smul.addr %s362, 8
          %s364 = scalar_lea.vmem %s0, %s363
          %s365 = smul.u32 8, %s21
        $region64: #{tpu_custom_call.1} parent=59 // pred_fallthru
          _
      $region60: #{tpu_custom_call.1} parent=5 // pred_fallthru
        _
      %p366 = scmp.le.s32.totalorder 1, %s21
      %p367 = scmp.lt.s32.totalorder %s21, 3
      %p368 = pnand %p366, %p367
      %p369 = pneg %p368
      // Predicated region
      $region65: #{tpu_custom_call.1} parent=5 // pred_check
        _
      $region66: #{tpu_custom_call.1} parent=5 // pred_check_branch
        %371 = sbr.rel (%p368) target = $region68
      $region67: #{tpu_custom_call.1} parent=5 // pred_region
        %s372 = ssub.s32 %s21, 1
        %s373 = smul.u32 8, %s26
        %p374 = scmp.lt.s32.totalorder %s373, 15
        %s375 = scalar_select %p374, %s373, 15
        %s376 = smul.addr %s375, 8
        %s377 = smul.addr %s376, 8
        %s378 = scalar_lea.vmem %s0, %s377
        %p379 = pneg %p47
        %p380 = pneg %p44
        %p381 = pneg %p68
        %p382 = pneg %p65
        %p383 = pneg %p89
        %p384 = pneg %p86
        %p385 = pneg %p110
        %p386 = pneg %p107
        %p387 = pneg %p131
        %p388 = pneg %p128
        %p389 = pneg %p152
        %p390 = pneg %p149
        %p391 = pneg %p173
        %p392 = pneg %p170
        %p393 = pneg %p194
        %p394 = pneg %p191
        %p395 = pneg %p215
        %p396 = pneg %p212
        %p397 = pneg %p236
        %p398 = pneg %p233
        %p399 = pneg %p257
        %p400 = pneg %p254
        %p401 = pneg %p278
        %p402 = pneg %p275
        %p403 = pneg %p304
        %p404 = pneg %p301
        %s405 = sand.u32 %s291, 1
        %s406 = scalar_lea.sflag [#allocation3], %s405
        %s407 = sand.u32 %s291, 1
        %s408 = smul.addr %s407, 8
        %s409 = scalar_lea.vmem [#allocation2], %s408
        %s410 = smul.u32 8, %s26
        %p411 = scmp.lt.s32.totalorder %s410, 15
        %s412 = scalar_select %p411, %s410, 15
        %s413 = smul.addr %s412, 8
        %s414 = smul.addr %s413, 8
        %s415 = scalar_lea.vmem %s0, %s414
        %s416 = smul.u32 8, %s26
        %v417 = vld [vmem:[%s415] sm:$0xff]
        %v418 = vld [vmem:[%s415 + $0x8] sm:$0xff]
        %v419 = vld [vmem:[%s415 + $0x10] sm:$0xff]
        %v420 = vld [vmem:[%s415 + $0x18] sm:$0xff]
        %v421 = vld [vmem:[%s415 + $0x20] sm:$0xff]
        %v422 = vld [vmem:[%s415 + $0x28] sm:$0xff]
        %v423 = vld [vmem:[%s415 + $0x30] sm:$0xff]
        %v424 = vld [vmem:[%s415 + $0x38] sm:$0xff]
        %v425 = vld [vmem:[%s415 + $0x40] sm:$0xff]
        %v426 = vld [vmem:[%s415 + $0x48] sm:$0xff]
        %v427 = vld [vmem:[%s415 + $0x50] sm:$0xff]
        %v428 = vld [vmem:[%s415 + $0x58] sm:$0xff]
        %v429 = vld [vmem:[%s415 + $0x60] sm:$0xff]
        %v430 = vld [vmem:[%s415 + $0x68] sm:$0xff]
        %v431 = vld [vmem:[%s415 + $0x70] sm:$0xff]
        %v432 = vld [vmem:[%s415 + $0x78] sm:$0xff]
        %v433 = vld [vmem:[%s415 + $0x80] sm:$0xff]
        %v434 = vld [vmem:[%s415 + $0x88] sm:$0xff]
        %v435 = vld [vmem:[%s415 + $0x90] sm:$0xff]
        %v436 = vld [vmem:[%s415 + $0x98] sm:$0xff]
        %v437 = vld [vmem:[%s415 + $0xa0] sm:$0xff]
        %v438 = vld [vmem:[%s415 + $0xa8] sm:$0xff]
        %v439 = vld [vmem:[%s415 + $0xb0] sm:$0xff]
        %v440 = vld [vmem:[%s415 + $0xb8] sm:$0xff]
        %v441 = vld [vmem:[%s415 + $0xc0] sm:$0xff]
        %v442 = vld [vmem:[%s415 + $0xc8] sm:$0xff]
        %v443 = vld [vmem:[%s415 + $0xd0] sm:$0xff]
        %v444 = vld [vmem:[%s415 + $0xd8] sm:$0xff]
        %v445 = vld [vmem:[%s415 + $0xe0] sm:$0xff]
        %v446 = vld [vmem:[%s415 + $0xe8] sm:$0xff]
        %v447 = vld [vmem:[%s415 + $0xf0] sm:$0xff]
        %v448 = vld [vmem:[%s415 + $0xf8] sm:$0xff]
        %v449 = vld [vmem:[%s415 + $0x100] sm:$0xff]
        %v450 = vld [vmem:[%s415 + $0x108] sm:$0xff]
        %v451 = vld [vmem:[%s415 + $0x110] sm:$0xff]
        %v452 = vld [vmem:[%s415 + $0x118] sm:$0xff]
        %v453 = vld [vmem:[%s415 + $0x120] sm:$0xff]
        %v454 = vld [vmem:[%s415 + $0x128] sm:$0xff]
        %v455 = vld [vmem:[%s415 + $0x130] sm:$0xff]
        %v456 = vld [vmem:[%s415 + $0x138] sm:$0xff]
        %v457 = vld [vmem:[%s415 + $0x140] sm:$0xff]
        %v458 = vld [vmem:[%s415 + $0x148] sm:$0xff]
        %v459 = vld [vmem:[%s415 + $0x150] sm:$0xff]
        %v460 = vld [vmem:[%s415 + $0x158] sm:$0xff]
        %v461 = vld [vmem:[%s415 + $0x160] sm:$0xff]
        %v462 = vld [vmem:[%s415 + $0x168] sm:$0xff]
        %v463 = vld [vmem:[%s415 + $0x170] sm:$0xff]
        %v464 = vld [vmem:[%s415 + $0x178] sm:$0xff]
        %v465 = vld [vmem:[%s415 + $0x180] sm:$0xff]
        %v466 = vld [vmem:[%s415 + $0x188] sm:$0xff]
        %v467 = vld [vmem:[%s415 + $0x190] sm:$0xff]
        %v468 = vld [vmem:[%s415 + $0x198] sm:$0xff]
        %v469 = vld [vmem:[%s415 + $0x1a0] sm:$0xff]
        %v470 = vld [vmem:[%s415 + $0x1a8] sm:$0xff]
        %v471 = vld [vmem:[%s415 + $0x1b0] sm:$0xff]
        %v472 = vld [vmem:[%s415 + $0x1b8] sm:$0xff]
        %v473 = vld [vmem:[%s415 + $0x1c0] sm:$0xff]
        %v474 = vld [vmem:[%s415 + $0x1c8] sm:$0xff]
        %v475 = vld [vmem:[%s415 + $0x1d0] sm:$0xff]
        %v476 = vld [vmem:[%s415 + $0x1d8] sm:$0xff]
        %v477 = vld [vmem:[%s415 + $0x1e0] sm:$0xff]
        %v478 = vld [vmem:[%s415 + $0x1e8] sm:$0xff]
        %v479 = vld [vmem:[%s415 + $0x1f0] sm:$0xff]
        %v480 = vld [vmem:[%s415 + $0x1f8] sm:$0xff]
        %v481 = vld [vmem:[%s1] sm:$0x3f]
        %v482 = vld [vmem:[%s2] sm:$0x1]
        %v484 = vlaneseq
        %v485 = vshrl.u32 %v484, 7
        %v486 = vsub.s32 0, %v485
        %v487 = vrot.slane %v482, %v486
        %vm489 = vcmask 48128
        %v491 = vsel %vm489, %v417, 0
        %v494 = vsel %vm489, %v418, 0
        %v497 = vsel %vm489, %v419, 0
        %v500 = vsel %vm489, %v420, 0
        %v503 = vsel %vm489, %v421, 0
        %v506 = vsel %vm489, %v422, 0
        %v509 = vsel %vm489, %v423, 0
        %v512 = vsel %vm489, %v424, 0
        %v515 = vsel %vm489, %v425, 0
        %v518 = vsel %vm489, %v426, 0
        %v521 = vsel %vm489, %v427, 0
        %v524 = vsel %vm489, %v428, 0
        %v527 = vsel %vm489, %v429, 0
        %v530 = vsel %vm489, %v430, 0
        %v533 = vsel %vm489, %v431, 0
        %v536 = vsel %vm489, %v432, 0
        %v539 = vsel %vm489, %v433, 0
        %v542 = vsel %vm489, %v434, 0
        %v545 = vsel %vm489, %v435, 0
        %v548 = vsel %vm489, %v436, 0
        %v551 = vsel %vm489, %v437, 0
        %v554 = vsel %vm489, %v438, 0
        %v557 = vsel %vm489, %v439, 0
        %v560 = vsel %vm489, %v440, 0
        %v563 = vsel %vm489, %v441, 0
        %v566 = vsel %vm489, %v442, 0
        %v569 = vsel %vm489, %v443, 0
        %v572 = vsel %vm489, %v444, 0
        %v575 = vsel %vm489, %v445, 0
        %v578 = vsel %vm489, %v446, 0
        %v581 = vsel %vm489, %v447, 0
        %v584 = vsel %vm489, %v448, 0
        %v587 = vsel %vm489, %v449, 0
        %v590 = vsel %vm489, %v450, 0
        %v593 = vsel %vm489, %v451, 0
        %v596 = vsel %vm489, %v452, 0
        %v599 = vsel %vm489, %v453, 0
        %v602 = vsel %vm489, %v454, 0
        %v605 = vsel %vm489, %v455, 0
        %v608 = vsel %vm489, %v456, 0
        %v611 = vsel %vm489, %v457, 0
        %v614 = vsel %vm489, %v458, 0
        %v617 = vsel %vm489, %v459, 0
        %v620 = vsel %vm489, %v460, 0
        %v623 = vsel %vm489, %v461, 0
        %v626 = vsel %vm489, %v462, 0
        %v629 = vsel %vm489, %v463, 0
        %v632 = vsel %vm489, %v464, 0
        %v635 = vsel %vm489, %v465, 0
        %v638 = vsel %vm489, %v466, 0
        %v641 = vsel %vm489, %v467, 0
        %v644 = vsel %vm489, %v468, 0
        %v647 = vsel %vm489, %v469, 0
        %v650 = vsel %vm489, %v470, 0
        %v653 = vsel %vm489, %v471, 0
        %v656 = vsel %vm489, %v472, 0
        %v659 = vsel %vm489, %v473, 0
        %v662 = vsel %vm489, %v474, 0
        %v665 = vsel %vm489, %v475, 0
        %v668 = vsel %vm489, %v476, 0
        %v671 = vsel %vm489, %v477, 0
        %v674 = vsel %vm489, %v478, 0
        %v677 = vsel %vm489, %v479, 0
        %v680 = vsel %vm489, %v480, 0
        %vm682 = vcmask 1045504
        %v684 = vsel %vm682, %v481, 0
        %686 = vmatprep.subr.mxu0 0.0
        %687 = vmatpush1.msra.mxu0 0.0
        %688 = vmatprep.subr.mxu0 0.0
        %689 = vmatpush1.msra.mxu0 0.0
        %690 = vmatprep.subr.mxu0 0.0
        %691 = vmatpush1.msra.mxu0 0.0
        %692 = vmatprep.subr.mxu0 0.0
        %693 = vmatpush1.msra.mxu0 0.0
        %694 = vmatprep.subr.mxu0 0.0
        %695 = vmatpush1.msra.mxu0 0.0
        %696 = vmatprep.subr.mxu0 0.0
        %697 = vmatpush1.msra.mxu0 0.0
        %698 = vmatprep.subr.mxu0 0.0
        %699 = vmatpush1.msra.mxu0 0.0
        %700 = vmatprep.subr.mxu0 0.0
        %701 = vmatpush1.msra.mxu0 0.0
        %702 = vmatprep.subr.mxu0 0.0
        %703 = vmatpush1.msra.mxu0 0.0
        %704 = vmatprep.subr.mxu0 0.0
        %705 = vmatpush1.msra.mxu0 0.0
        %706 = vmatprep.subr.mxu0 0.0
        %707 = vmatpush1.msra.mxu0 0.0
        %708 = vmatprep.subr.mxu0 0.0
        %709 = vmatpush1.msra.mxu0 0.0
        %710 = vmatprep.subr.mxu0 0.0
        %711 = vmatpush1.msra.mxu0 0.0
        %712 = vmatprep.subr.mxu0 0.0
        %713 = vmatpush1.msra.mxu0 0.0
        %714 = vmatprep.subr.mxu0 0.0
        %715 = vmatpush1.msra.mxu0 0.0
        %716 = vmatprep.subr.mxu0 0.0
        %717 = vmatpush1.msra.mxu0 %v684
        %718 = vmatprep.subr.mxu0 0.0
        %719 = vmatpush2.msra.mxu0 0.0
        %720 = vmatprep.subr.mxu0 0.0
        %721 = vmatpush2.msra.mxu0 0.0
        %722 = vmatprep.subr.mxu0 0.0
        %723 = vmatpush2.msra.mxu0 0.0
        %724 = vmatprep.subr.mxu0 0.0
        %725 = vmatpush2.msra.mxu0 0.0
        %726 = vmatprep.subr.mxu0 0.0
        %727 = vmatpush2.msra.mxu0 0.0
        %728 = vmatprep.subr.mxu0 0.0
        %729 = vmatpush2.msra.mxu0 0.0
        %730 = vmatprep.subr.mxu0 0.0
        %731 = vmatpush2.msra.mxu0 0.0
        %732 = vmatprep.subr.mxu0 0.0
        %733 = vmatpush2.msra.mxu0 0.0
        %734 = vmatprep.subr.mxu0 0.0
        %735 = vmatpush2.msra.mxu0 0.0
        %736 = vmatprep.subr.mxu0 0.0
        %737 = vmatpush2.msra.mxu0 0.0
        %738 = vmatprep.subr.mxu0 0.0
        %739 = vmatpush2.msra.mxu0 0.0
        %740 = vmatprep.subr.mxu0 0.0
        %741 = vmatpush2.msra.mxu0 0.0
        %742 = vmatprep.subr.mxu0 0.0
        %743 = vmatpush2.msra.mxu0 0.0
        %744 = vmatprep.subr.mxu0 0.0
        %745 = vmatpush2.msra.mxu0 0.0
        %746 = vmatprep.subr.mxu0 0.0
        %747 = vmatpush2.msra.mxu0 0.0
        %748 = vmatprep.subr.mxu0 0.0
        %749 = vmatpush2.msra.mxu0 0.0
        %750 = vmatprep.mubr.f32.mxu0 0.0
        %751 = vmatmul.mubr.f32.gmra.mxu0 %v491
        %v752 = vpop.f32.mrf.mxu0
        %v753 = vadd.f32 %v487, %v752
        %v754 = vpop.f32.mrf.mxu0
        %755 = vmatprep.mubr.f32.mxu0 0.0
        %756 = vmatmul.mubr.f32.gmra.mxu0 %v494
        %v757 = vpop.f32.mrf.mxu0
        %v758 = vadd.f32 %v487, %v757
        %v759 = vpop.f32.mrf.mxu0
        %760 = vmatprep.mubr.f32.mxu0 0.0
        %761 = vmatmul.mubr.f32.gmra.mxu0 %v497
        %v762 = vpop.f32.mrf.mxu0
        %v763 = vadd.f32 %v487, %v762
        %v764 = vpop.f32.mrf.mxu0
        %765 = vmatprep.mubr.f32.mxu0 0.0
        %766 = vmatmul.mubr.f32.gmra.mxu0 %v500
        %v767 = vpop.f32.mrf.mxu0
        %v768 = vadd.f32 %v487, %v767
        %v769 = vpop.f32.mrf.mxu0
        %770 = vmatprep.mubr.f32.mxu0 0.0
        %771 = vmatmul.mubr.f32.gmra.mxu0 %v503
        %v772 = vpop.f32.mrf.mxu0
        %v773 = vadd.f32 %v487, %v772
        %v774 = vpop.f32.mrf.mxu0
        %775 = vmatprep.mubr.f32.mxu0 0.0
        %776 = vmatmul.mubr.f32.gmra.mxu0 %v506
        %v777 = vpop.f32.mrf.mxu0
        %v778 = vadd.f32 %v487, %v777
        %v779 = vpop.f32.mrf.mxu0
        %780 = vmatprep.mubr.f32.mxu0 0.0
        %781 = vmatmul.mubr.f32.gmra.mxu0 %v509
        %v782 = vpop.f32.mrf.mxu0
        %v783 = vadd.f32 %v487, %v782
        %v784 = vpop.f32.mrf.mxu0
        %785 = vmatprep.mubr.f32.mxu0 0.0
        %786 = vmatmul.mubr.f32.gmra.mxu0 %v512
        %v787 = vpop.f32.mrf.mxu0
        %v788 = vadd.f32 %v487, %v787
        %v789 = vpop.f32.mrf.mxu0
        %790 = vmatprep.mubr.f32.mxu0 0.0
        %791 = vmatmul.mubr.f32.gmra.mxu0 %v515
        %v792 = vpop.f32.mrf.mxu0
        %v793 = vadd.f32 %v487, %v792
        %v794 = vpop.f32.mrf.mxu0
        %795 = vmatprep.mubr.f32.mxu0 0.0
        %796 = vmatmul.mubr.f32.gmra.mxu0 %v518
        %v797 = vpop.f32.mrf.mxu0
        %v798 = vadd.f32 %v487, %v797
        %v799 = vpop.f32.mrf.mxu0
        %800 = vmatprep.mubr.f32.mxu0 0.0
        %801 = vmatmul.mubr.f32.gmra.mxu0 %v521
        %v802 = vpop.f32.mrf.mxu0
        %v803 = vadd.f32 %v487, %v802
        %v804 = vpop.f32.mrf.mxu0
        %805 = vmatprep.mubr.f32.mxu0 0.0
        %806 = vmatmul.mubr.f32.gmra.mxu0 %v524
        %v807 = vpop.f32.mrf.mxu0
        %v808 = vadd.f32 %v487, %v807
        %v809 = vpop.f32.mrf.mxu0
        %810 = vmatprep.mubr.f32.mxu0 0.0
        %811 = vmatmul.mubr.f32.gmra.mxu0 %v527
        %v812 = vpop.f32.mrf.mxu0
        %v813 = vadd.f32 %v487, %v812
        %v814 = vpop.f32.mrf.mxu0
        %815 = vmatprep.mubr.f32.mxu0 0.0
        %816 = vmatmul.mubr.f32.gmra.mxu0 %v530
        %v817 = vpop.f32.mrf.mxu0
        %v818 = vadd.f32 %v487, %v817
        %v819 = vpop.f32.mrf.mxu0
        %820 = vmatprep.mubr.f32.mxu0 0.0
        %821 = vmatmul.mubr.f32.gmra.mxu0 %v533
        %v822 = vpop.f32.mrf.mxu0
        %v823 = vadd.f32 %v487, %v822
        %v824 = vpop.f32.mrf.mxu0
        %825 = vmatprep.mubr.f32.mxu0 0.0
        %826 = vmatmul.mubr.f32.gmra.mxu0 %v536
        %v827 = vpop.f32.mrf.mxu0
        %v828 = vadd.f32 %v487, %v827
        %v829 = vpop.f32.mrf.mxu0
        %830 = vmatprep.mubr.f32.mxu0 0.0
        %831 = vmatmul.mubr.f32.gmra.mxu0 %v539
        %v832 = vpop.f32.mrf.mxu0
        %v833 = vadd.f32 %v487, %v832
        %v834 = vpop.f32.mrf.mxu0
        %835 = vmatprep.mubr.f32.mxu0 0.0
        %836 = vmatmul.mubr.f32.gmra.mxu0 %v542
        %v837 = vpop.f32.mrf.mxu0
        %v838 = vadd.f32 %v487, %v837
        %v839 = vpop.f32.mrf.mxu0
        %840 = vmatprep.mubr.f32.mxu0 0.0
        %841 = vmatmul.mubr.f32.gmra.mxu0 %v545
        %v842 = vpop.f32.mrf.mxu0
        %v843 = vadd.f32 %v487, %v842
        %v844 = vpop.f32.mrf.mxu0
        %845 = vmatprep.mubr.f32.mxu0 0.0
        %846 = vmatmul.mubr.f32.gmra.mxu0 %v548
        %v847 = vpop.f32.mrf.mxu0
        %v848 = vadd.f32 %v487, %v847
        %v849 = vpop.f32.mrf.mxu0
        %850 = vmatprep.mubr.f32.mxu0 0.0
        %851 = vmatmul.mubr.f32.gmra.mxu0 %v551
        %v852 = vpop.f32.mrf.mxu0
        %v853 = vadd.f32 %v487, %v852
        %v854 = vpop.f32.mrf.mxu0
        %855 = vmatprep.mubr.f32.mxu0 0.0
        %856 = vmatmul.mubr.f32.gmra.mxu0 %v554
        %v857 = vpop.f32.mrf.mxu0
        %v858 = vadd.f32 %v487, %v857
        %v859 = vpop.f32.mrf.mxu0
        %860 = vmatprep.mubr.f32.mxu0 0.0
        %861 = vmatmul.mubr.f32.gmra.mxu0 %v557
        %v862 = vpop.f32.mrf.mxu0
        %v863 = vadd.f32 %v487, %v862
        %v864 = vpop.f32.mrf.mxu0
        %865 = vmatprep.mubr.f32.mxu0 0.0
        %866 = vmatmul.mubr.f32.gmra.mxu0 %v560
        %v867 = vpop.f32.mrf.mxu0
        %v868 = vadd.f32 %v487, %v867
        %v869 = vpop.f32.mrf.mxu0
        %870 = vmatprep.mubr.f32.mxu0 0.0
        %871 = vmatmul.mubr.f32.gmra.mxu0 %v563
        %v872 = vpop.f32.mrf.mxu0
        %v873 = vadd.f32 %v487, %v872
        %v874 = vpop.f32.mrf.mxu0
        %875 = vmatprep.mubr.f32.mxu0 0.0
        %876 = vmatmul.mubr.f32.gmra.mxu0 %v566
        %v877 = vpop.f32.mrf.mxu0
        %v878 = vadd.f32 %v487, %v877
        %v879 = vpop.f32.mrf.mxu0
        %880 = vmatprep.mubr.f32.mxu0 0.0
        %881 = vmatmul.mubr.f32.gmra.mxu0 %v569
        %v882 = vpop.f32.mrf.mxu0
        %v883 = vadd.f32 %v487, %v882
        %v884 = vpop.f32.mrf.mxu0
        %885 = vmatprep.mubr.f32.mxu0 0.0
        %886 = vmatmul.mubr.f32.gmra.mxu0 %v572
        %v887 = vpop.f32.mrf.mxu0
        %v888 = vadd.f32 %v487, %v887
        %v889 = vpop.f32.mrf.mxu0
        %890 = vmatprep.mubr.f32.mxu0 0.0
        %891 = vmatmul.mubr.f32.gmra.mxu0 %v575
        %v892 = vpop.f32.mrf.mxu0
        %v893 = vadd.f32 %v487, %v892
        %v894 = vpop.f32.mrf.mxu0
        %895 = vmatprep.mubr.f32.mxu0 0.0
        %896 = vmatmul.mubr.f32.gmra.mxu0 %v578
        %v897 = vpop.f32.mrf.mxu0
        %v898 = vadd.f32 %v487, %v897
        %v899 = vpop.f32.mrf.mxu0
        %900 = vmatprep.mubr.f32.mxu0 0.0
        %901 = vmatmul.mubr.f32.gmra.mxu0 %v581
        %v902 = vpop.f32.mrf.mxu0
        %v903 = vadd.f32 %v487, %v902
        %v904 = vpop.f32.mrf.mxu0
        %905 = vmatprep.mubr.f32.mxu0 0.0
        %906 = vmatmul.mubr.f32.gmra.mxu0 %v584
        %v907 = vpop.f32.mrf.mxu0
        %v908 = vadd.f32 %v487, %v907
        %v909 = vpop.f32.mrf.mxu0
        %910 = vmatprep.mubr.f32.mxu0 0.0
        %911 = vmatmul.mubr.f32.gmra.mxu0 %v587
        %v912 = vpop.f32.mrf.mxu0
        %v913 = vadd.f32 %v487, %v912
        %v914 = vpop.f32.mrf.mxu0
        %915 = vmatprep.mubr.f32.mxu0 0.0
        %916 = vmatmul.mubr.f32.gmra.mxu0 %v590
        %v917 = vpop.f32.mrf.mxu0
        %v918 = vadd.f32 %v487, %v917
        %v919 = vpop.f32.mrf.mxu0
        %920 = vmatprep.mubr.f32.mxu0 0.0
        %921 = vmatmul.mubr.f32.gmra.mxu0 %v593
        %v922 = vpop.f32.mrf.mxu0
        %v923 = vadd.f32 %v487, %v922
        %v924 = vpop.f32.mrf.mxu0
        %925 = vmatprep.mubr.f32.mxu0 0.0
        %926 = vmatmul.mubr.f32.gmra.mxu0 %v596
        %v927 = vpop.f32.mrf.mxu0
        %v928 = vadd.f32 %v487, %v927
        %v929 = vpop.f32.mrf.mxu0
        %930 = vmatprep.mubr.f32.mxu0 0.0
        %931 = vmatmul.mubr.f32.gmra.mxu0 %v599
        %v932 = vpop.f32.mrf.mxu0
        %v933 = vadd.f32 %v487, %v932
        %v934 = vpop.f32.mrf.mxu0
        %935 = vmatprep.mubr.f32.mxu0 0.0
        %936 = vmatmul.mubr.f32.gmra.mxu0 %v602
        %v937 = vpop.f32.mrf.mxu0
        %v938 = vadd.f32 %v487, %v937
        %v939 = vpop.f32.mrf.mxu0
        %940 = vmatprep.mubr.f32.mxu0 0.0
        %941 = vmatmul.mubr.f32.gmra.mxu0 %v605
        %v942 = vpop.f32.mrf.mxu0
        %v943 = vadd.f32 %v487, %v942
        %v944 = vpop.f32.mrf.mxu0
        %945 = vmatprep.mubr.f32.mxu0 0.0
        %946 = vmatmul.mubr.f32.gmra.mxu0 %v608
        %v947 = vpop.f32.mrf.mxu0
        %v948 = vadd.f32 %v487, %v947
        %v949 = vpop.f32.mrf.mxu0
        %950 = vmatprep.mubr.f32.mxu0 0.0
        %951 = vmatmul.mubr.f32.gmra.mxu0 %v611
        %v952 = vpop.f32.mrf.mxu0
        %v953 = vadd.f32 %v487, %v952
        %v954 = vpop.f32.mrf.mxu0
        %955 = vmatprep.mubr.f32.mxu0 0.0
        %956 = vmatmul.mubr.f32.gmra.mxu0 %v614
        %v957 = vpop.f32.mrf.mxu0
        %v958 = vadd.f32 %v487, %v957
        %v959 = vpop.f32.mrf.mxu0
        %960 = vmatprep.mubr.f32.mxu0 0.0
        %961 = vmatmul.mubr.f32.gmra.mxu0 %v617
        %v962 = vpop.f32.mrf.mxu0
        %v963 = vadd.f32 %v487, %v962
        %v964 = vpop.f32.mrf.mxu0
        %965 = vmatprep.mubr.f32.mxu0 0.0
        %966 = vmatmul.mubr.f32.gmra.mxu0 %v620
        %v967 = vpop.f32.mrf.mxu0
        %v968 = vadd.f32 %v487, %v967
        %v969 = vpop.f32.mrf.mxu0
        %970 = vmatprep.mubr.f32.mxu0 0.0
        %971 = vmatmul.mubr.f32.gmra.mxu0 %v623
        %v972 = vpop.f32.mrf.mxu0
        %v973 = vadd.f32 %v487, %v972
        %v974 = vpop.f32.mrf.mxu0
        %975 = vmatprep.mubr.f32.mxu0 0.0
        %976 = vmatmul.mubr.f32.gmra.mxu0 %v626
        %v977 = vpop.f32.mrf.mxu0
        %v978 = vadd.f32 %v487, %v977
        %v979 = vpop.f32.mrf.mxu0
        %980 = vmatprep.mubr.f32.mxu0 0.0
        %981 = vmatmul.mubr.f32.gmra.mxu0 %v629
        %v982 = vpop.f32.mrf.mxu0
        %v983 = vadd.f32 %v487, %v982
        %v984 = vpop.f32.mrf.mxu0
        %985 = vmatprep.mubr.f32.mxu0 0.0
        %986 = vmatmul.mubr.f32.gmra.mxu0 %v632
        %v987 = vpop.f32.mrf.mxu0
        %v988 = vadd.f32 %v487, %v987
        %v989 = vpop.f32.mrf.mxu0
        %990 = vmatprep.mubr.f32.mxu0 0.0
        %991 = vmatmul.mubr.f32.gmra.mxu0 %v635
        %v992 = vpop.f32.mrf.mxu0
        %v993 = vadd.f32 %v487, %v992
        %v994 = vpop.f32.mrf.mxu0
        %995 = vmatprep.mubr.f32.mxu0 0.0
        %996 = vmatmul.mubr.f32.gmra.mxu0 %v638
        %v997 = vpop.f32.mrf.mxu0
        %v998 = vadd.f32 %v487, %v997
        %v999 = vpop.f32.mrf.mxu0
        %1000 = vmatprep.mubr.f32.mxu0 0.0
        %1001 = vmatmul.mubr.f32.gmra.mxu0 %v641
        %v1002 = vpop.f32.mrf.mxu0
        %v1003 = vadd.f32 %v487, %v1002
        %v1004 = vpop.f32.mrf.mxu0
        %1005 = vmatprep.mubr.f32.mxu0 0.0
        %1006 = vmatmul.mubr.f32.gmra.mxu0 %v644
        %v1007 = vpop.f32.mrf.mxu0
        %v1008 = vadd.f32 %v487, %v1007
        %v1009 = vpop.f32.mrf.mxu0
        %1010 = vmatprep.mubr.f32.mxu0 0.0
        %1011 = vmatmul.mubr.f32.gmra.mxu0 %v647
        %v1012 = vpop.f32.mrf.mxu0
        %v1013 = vadd.f32 %v487, %v1012
        %v1014 = vpop.f32.mrf.mxu0
        %1015 = vmatprep.mubr.f32.mxu0 0.0
        %1016 = vmatmul.mubr.f32.gmra.mxu0 %v650
        %v1017 = vpop.f32.mrf.mxu0
        %v1018 = vadd.f32 %v487, %v1017
        %v1019 = vpop.f32.mrf.mxu0
        %1020 = vmatprep.mubr.f32.mxu0 0.0
        %1021 = vmatmul.mubr.f32.gmra.mxu0 %v653
        %v1022 = vpop.f32.mrf.mxu0
        %v1023 = vadd.f32 %v487, %v1022
        %v1024 = vpop.f32.mrf.mxu0
        %1025 = vmatprep.mubr.f32.mxu0 0.0
        %1026 = vmatmul.mubr.f32.gmra.mxu0 %v656
        %v1027 = vpop.f32.mrf.mxu0
        %v1028 = vadd.f32 %v487, %v1027
        %v1029 = vpop.f32.mrf.mxu0
        %1030 = vmatprep.mubr.f32.mxu0 0.0
        %1031 = vmatmul.mubr.f32.gmra.mxu0 %v659
        %v1032 = vpop.f32.mrf.mxu0
        %v1033 = vadd.f32 %v487, %v1032
        %v1034 = vpop.f32.mrf.mxu0
        %1035 = vmatprep.mubr.f32.mxu0 0.0
        %1036 = vmatmul.mubr.f32.gmra.mxu0 %v662
        %v1037 = vpop.f32.mrf.mxu0
        %v1038 = vadd.f32 %v487, %v1037
        %v1039 = vpop.f32.mrf.mxu0
        %1040 = vmatprep.mubr.f32.mxu0 0.0
        %1041 = vmatmul.mubr.f32.gmra.mxu0 %v665
        %v1042 = vpop.f32.mrf.mxu0
        %v1043 = vadd.f32 %v487, %v1042
        %v1044 = vpop.f32.mrf.mxu0
        %1045 = vmatprep.mubr.f32.mxu0 0.0
        %1046 = vmatmul.mubr.f32.gmra.mxu0 %v668
        %v1047 = vpop.f32.mrf.mxu0
        %v1048 = vadd.f32 %v487, %v1047
        %v1049 = vpop.f32.mrf.mxu0
        %1050 = vmatprep.mubr.f32.mxu0 0.0
        %1051 = vmatmul.mubr.f32.gmra.mxu0 %v671
        %v1052 = vpop.f32.mrf.mxu0
        %v1053 = vadd.f32 %v487, %v1052
        %v1054 = vpop.f32.mrf.mxu0
        %1055 = vmatprep.mubr.f32.mxu0 0.0
        %1056 = vmatmul.mubr.f32.gmra.mxu0 %v674
        %v1057 = vpop.f32.mrf.mxu0
        %v1058 = vadd.f32 %v487, %v1057
        %v1059 = vpop.f32.mrf.mxu0
        %1060 = vmatprep.mubr.f32.mxu0 0.0
        %1061 = vmatmul.mubr.f32.gmra.mxu0 %v677
        %v1062 = vpop.f32.mrf.mxu0
        %v1063 = vadd.f32 %v487, %v1062
        %v1064 = vpop.f32.mrf.mxu0
        %1065 = vmatprep.mubr.f32.mxu0 0.0
        %1066 = vmatmul.mubr.f32.gmra.mxu0 %v680
        %v1067 = vpop.f32.mrf.mxu0
        %v1068 = vadd.f32 %v487, %v1067
        %v1069 = vpop.f32.mrf.mxu0
        %1070 = vdwg.mxu0
        %v1071 = vld [vmem:[%s3] sm:$0xff]
        %v1072 = vld [vmem:[%s3 + $0x8] sm:$0xff]
        %v1073 = vld [vmem:[%s3 + $0x10] sm:$0xff]
        %v1074 = vld [vmem:[%s3 + $0x18] sm:$0xff]
        %v1075 = vld [vmem:[%s3 + $0x20] sm:$0xff]
        %v1076 = vld [vmem:[%s3 + $0x28] sm:$0xff]
        %v1077 = vld [vmem:[%s3 + $0x30] sm:$0xff]
        %v1078 = vld [vmem:[%s3 + $0x38] sm:$0xff]
        %v1079 = vld [vmem:[%s3 + $0x40] sm:$0xff]
        %v1080 = vld [vmem:[%s3 + $0x48] sm:$0xff]
        %v1081 = vld [vmem:[%s3 + $0x50] sm:$0xff]
        %v1082 = vld [vmem:[%s3 + $0x58] sm:$0xff]
        %v1083 = vld [vmem:[%s3 + $0x60] sm:$0xff]
        %v1084 = vld [vmem:[%s3 + $0x68] sm:$0xff]
        %v1085 = vld [vmem:[%s3 + $0x70] sm:$0xff]
        %v1086 = vld [vmem:[%s3 + $0x78] sm:$0xff]
        %v1087 = vld [vmem:[%s3 + $0x80] sm:$0xff]
        %v1088 = vld [vmem:[%s3 + $0x88] sm:$0xff]
        %v1089 = vld [vmem:[%s3 + $0x90] sm:$0xff]
        %v1090 = vld [vmem:[%s3 + $0x98] sm:$0xff]
        %v1091 = vld [vmem:[%s3 + $0xa0] sm:$0xff]
        %v1092 = vld [vmem:[%s3 + $0xa8] sm:$0xff]
        %v1093 = vld [vmem:[%s3 + $0xb0] sm:$0xff]
        %v1094 = vld [vmem:[%s3 + $0xb8] sm:$0xff]
        %v1095 = vld [vmem:[%s3 + $0xc0] sm:$0xff]
        %v1096 = vld [vmem:[%s3 + $0xc8] sm:$0xff]
        %v1097 = vld [vmem:[%s3 + $0xd0] sm:$0xff]
        %v1098 = vld [vmem:[%s3 + $0xd8] sm:$0xff]
        %v1099 = vld [vmem:[%s3 + $0xe0] sm:$0xff]
        %v1100 = vld [vmem:[%s3 + $0xe8] sm:$0xff]
        %v1101 = vld [vmem:[%s3 + $0xf0] sm:$0xff]
        %v1102 = vld [vmem:[%s3 + $0xf8] sm:$0xff]
        %v1103 = vld [vmem:[%s4] sm:$0x3]
        %v1105 = vlaneseq
        %v1106 = vshrl.u32 %v1105, 7
        %v1107 = vsub.s32 0, %v1106
        %v1108 = vrot.slane %v1103, %v1107
        %v1109 = vlaneseq
        %v1110 = vshrl.u32 %v1109, 7
        %v1111 = vsub.s32 1, %v1110
        %v1112 = vrot.slane %v1103, %v1111
        %1115 = vmatprep.subr.mxu0 %v1102
        %1116 = vmatpush1.msra.mxu0 %v1101
        %1117 = vmatprep.subr.mxu0 %v1100
        %1118 = vmatpush1.msra.mxu0 %v1099
        %1119 = vmatprep.subr.mxu0 %v1098
        %1120 = vmatpush1.msra.mxu0 %v1097
        %1121 = vmatprep.subr.mxu0 %v1096
        %1122 = vmatpush1.msra.mxu0 %v1095
        %1123 = vmatprep.subr.mxu0 %v1094
        %1124 = vmatpush1.msra.mxu0 %v1093
        %1125 = vmatprep.subr.mxu0 %v1092
        %1126 = vmatpush1.msra.mxu0 %v1091
        %1127 = vmatprep.subr.mxu0 %v1090
        %1128 = vmatpush1.msra.mxu0 %v1089
        %1129 = vmatprep.subr.mxu0 %v1088
        %1130 = vmatpush1.msra.mxu0 %v1087
        %1131 = vmatprep.subr.mxu0 %v1086
        %1132 = vmatpush1.msra.mxu0 %v1085
        %1133 = vmatprep.subr.mxu0 %v1084
        %1134 = vmatpush1.msra.mxu0 %v1083
        %1135 = vmatprep.subr.mxu0 %v1082
        %1136 = vmatpush1.msra.mxu0 %v1081
        %1137 = vmatprep.subr.mxu0 %v1080
        %1138 = vmatpush1.msra.mxu0 %v1079
        %1139 = vmatprep.subr.mxu0 %v1078
        %1140 = vmatpush1.msra.mxu0 %v1077
        %1141 = vmatprep.subr.mxu0 %v1076
        %1142 = vmatpush1.msra.mxu0 %v1075
        %1143 = vmatprep.subr.mxu0 %v1074
        %1144 = vmatpush1.msra.mxu0 %v1073
        %1145 = vmatprep.subr.mxu0 %v1072
        %1146 = vmatpush1.msra.mxu0 %v1071
        %1147 = vmatprep.subr.mxu0 0.0
        %1148 = vmatpush2.msra.mxu0 0.0
        %1149 = vmatprep.subr.mxu0 0.0
        %1150 = vmatpush2.msra.mxu0 0.0
        %1151 = vmatprep.subr.mxu0 0.0
        %1152 = vmatpush2.msra.mxu0 0.0
        %1153 = vmatprep.subr.mxu0 0.0
        %1154 = vmatpush2.msra.mxu0 0.0
        %1155 = vmatprep.subr.mxu0 0.0
        %1156 = vmatpush2.msra.mxu0 0.0
        %1157 = vmatprep.subr.mxu0 0.0
        %1158 = vmatpush2.msra.mxu0 0.0
        %1159 = vmatprep.subr.mxu0 0.0
        %1160 = vmatpush2.msra.mxu0 0.0
        %1161 = vmatprep.subr.mxu0 0.0
        %1162 = vmatpush2.msra.mxu0 0.0
        %1163 = vmatprep.subr.mxu0 0.0
        %1164 = vmatpush2.msra.mxu0 0.0
        %1165 = vmatprep.subr.mxu0 0.0
        %1166 = vmatpush2.msra.mxu0 0.0
        %1167 = vmatprep.subr.mxu0 0.0
        %1168 = vmatpush2.msra.mxu0 0.0
        %1169 = vmatprep.subr.mxu0 0.0
        %1170 = vmatpush2.msra.mxu0 0.0
        %1171 = vmatprep.subr.mxu0 0.0
        %1172 = vmatpush2.msra.mxu0 0.0
        %1173 = vmatprep.subr.mxu0 0.0
        %1174 = vmatpush2.msra.mxu0 0.0
        %1175 = vmatprep.subr.mxu0 0.0
        %1176 = vmatpush2.msra.mxu0 0.0
        %1177 = vmatprep.subr.mxu0 0.0
        %1178 = vmatpush2.msra.mxu0 0.0
        %1179 = vmatprep.mubr.f32.mxu0 0.0
        %1180 = vmatmul.mubr.f32.gmra.mxu0 %v753
        %v1181 = vpop.f32.mrf.mxu0
        %v1182 = vadd.f32 %v1108, %v1181
        %v1183 = vpop.f32.mrf.mxu0
        %v1184 = vadd.f32 %v1112, %v1183
        %1185 = vmatprep.mubr.f32.mxu0 0.0
        %1186 = vmatmul.mubr.f32.gmra.mxu0 %v758
        %v1187 = vpop.f32.mrf.mxu0
        %v1188 = vadd.f32 %v1108, %v1187
        %v1189 = vpop.f32.mrf.mxu0
        %v1190 = vadd.f32 %v1112, %v1189
        %1191 = vmatprep.mubr.f32.mxu0 0.0
        %1192 = vmatmul.mubr.f32.gmra.mxu0 %v763
        %v1193 = vpop.f32.mrf.mxu0
        %v1194 = vadd.f32 %v1108, %v1193
        %v1195 = vpop.f32.mrf.mxu0
        %v1196 = vadd.f32 %v1112, %v1195
        %1197 = vmatprep.mubr.f32.mxu0 0.0
        %1198 = vmatmul.mubr.f32.gmra.mxu0 %v768
        %v1199 = vpop.f32.mrf.mxu0
        %v1200 = vadd.f32 %v1108, %v1199
        %v1201 = vpop.f32.mrf.mxu0
        %v1202 = vadd.f32 %v1112, %v1201
        %1203 = vmatprep.mubr.f32.mxu0 0.0
        %1204 = vmatmul.mubr.f32.gmra.mxu0 %v773
        %v1205 = vpop.f32.mrf.mxu0
        %v1206 = vadd.f32 %v1108, %v1205
        %v1207 = vpop.f32.mrf.mxu0
        %v1208 = vadd.f32 %v1112, %v1207
        %1209 = vmatprep.mubr.f32.mxu0 0.0
        %1210 = vmatmul.mubr.f32.gmra.mxu0 %v778
        %v1211 = vpop.f32.mrf.mxu0
        %v1212 = vadd.f32 %v1108, %v1211
        %v1213 = vpop.f32.mrf.mxu0
        %v1214 = vadd.f32 %v1112, %v1213
        %1215 = vmatprep.mubr.f32.mxu0 0.0
        %1216 = vmatmul.mubr.f32.gmra.mxu0 %v783
        %v1217 = vpop.f32.mrf.mxu0
        %v1218 = vadd.f32 %v1108, %v1217
        %v1219 = vpop.f32.mrf.mxu0
        %v1220 = vadd.f32 %v1112, %v1219
        %1221 = vmatprep.mubr.f32.mxu0 0.0
        %1222 = vmatmul.mubr.f32.gmra.mxu0 %v788
        %v1223 = vpop.f32.mrf.mxu0
        %v1224 = vadd.f32 %v1108, %v1223
        %v1225 = vpop.f32.mrf.mxu0
        %v1226 = vadd.f32 %v1112, %v1225
        %1227 = vmatprep.mubr.f32.mxu0 0.0
        %1228 = vmatmul.mubr.f32.gmra.mxu0 %v793
        %v1229 = vpop.f32.mrf.mxu0
        %v1230 = vadd.f32 %v1108, %v1229
        %v1231 = vpop.f32.mrf.mxu0
        %v1232 = vadd.f32 %v1112, %v1231
        %1233 = vmatprep.mubr.f32.mxu0 0.0
        %1234 = vmatmul.mubr.f32.gmra.mxu0 %v798
        %v1235 = vpop.f32.mrf.mxu0
        %v1236 = vadd.f32 %v1108, %v1235
        %v1237 = vpop.f32.mrf.mxu0
        %v1238 = vadd.f32 %v1112, %v1237
        %1239 = vmatprep.mubr.f32.mxu0 0.0
        %1240 = vmatmul.mubr.f32.gmra.mxu0 %v803
        %v1241 = vpop.f32.mrf.mxu0
        %v1242 = vadd.f32 %v1108, %v1241
        %v1243 = vpop.f32.mrf.mxu0
        %v1244 = vadd.f32 %v1112, %v1243
        %1245 = vmatprep.mubr.f32.mxu0 0.0
        %1246 = vmatmul.mubr.f32.gmra.mxu0 %v808
        %v1247 = vpop.f32.mrf.mxu0
        %v1248 = vadd.f32 %v1108, %v1247
        %v1249 = vpop.f32.mrf.mxu0
        %v1250 = vadd.f32 %v1112, %v1249
        %1251 = vmatprep.mubr.f32.mxu0 0.0
        %1252 = vmatmul.mubr.f32.gmra.mxu0 %v813
        %v1253 = vpop.f32.mrf.mxu0
        %v1254 = vadd.f32 %v1108, %v1253
        %v1255 = vpop.f32.mrf.mxu0
        %v1256 = vadd.f32 %v1112, %v1255
        %1257 = vmatprep.mubr.f32.mxu0 0.0
        %1258 = vmatmul.mubr.f32.gmra.mxu0 %v818
        %v1259 = vpop.f32.mrf.mxu0
        %v1260 = vadd.f32 %v1108, %v1259
        %v1261 = vpop.f32.mrf.mxu0
        %v1262 = vadd.f32 %v1112, %v1261
        %1263 = vmatprep.mubr.f32.mxu0 0.0
        %1264 = vmatmul.mubr.f32.gmra.mxu0 %v823
        %v1265 = vpop.f32.mrf.mxu0
        %v1266 = vadd.f32 %v1108, %v1265
        %v1267 = vpop.f32.mrf.mxu0
        %v1268 = vadd.f32 %v1112, %v1267
        %1269 = vmatprep.mubr.f32.mxu0 0.0
        %1270 = vmatmul.mubr.f32.gmra.mxu0 %v828
        %v1271 = vpop.f32.mrf.mxu0
        %v1272 = vadd.f32 %v1108, %v1271
        %v1273 = vpop.f32.mrf.mxu0
        %v1274 = vadd.f32 %v1112, %v1273
        %1275 = vmatprep.mubr.f32.mxu0 0.0
        %1276 = vmatmul.mubr.f32.gmra.mxu0 %v833
        %v1277 = vpop.f32.mrf.mxu0
        %v1278 = vadd.f32 %v1108, %v1277
        %v1279 = vpop.f32.mrf.mxu0
        %v1280 = vadd.f32 %v1112, %v1279
        %1281 = vmatprep.mubr.f32.mxu0 0.0
        %1282 = vmatmul.mubr.f32.gmra.mxu0 %v838
        %v1283 = vpop.f32.mrf.mxu0
        %v1284 = vadd.f32 %v1108, %v1283
        %v1285 = vpop.f32.mrf.mxu0
        %v1286 = vadd.f32 %v1112, %v1285
        %1287 = vmatprep.mubr.f32.mxu0 0.0
        %1288 = vmatmul.mubr.f32.gmra.mxu0 %v843
        %v1289 = vpop.f32.mrf.mxu0
        %v1290 = vadd.f32 %v1108, %v1289
        %v1291 = vpop.f32.mrf.mxu0
        %v1292 = vadd.f32 %v1112, %v1291
        %1293 = vmatprep.mubr.f32.mxu0 0.0
        %1294 = vmatmul.mubr.f32.gmra.mxu0 %v848
        %v1295 = vpop.f32.mrf.mxu0
        %v1296 = vadd.f32 %v1108, %v1295
        %v1297 = vpop.f32.mrf.mxu0
        %v1298 = vadd.f32 %v1112, %v1297
        %1299 = vmatprep.mubr.f32.mxu0 0.0
        %1300 = vmatmul.mubr.f32.gmra.mxu0 %v853
        %v1301 = vpop.f32.mrf.mxu0
        %v1302 = vadd.f32 %v1108, %v1301
        %v1303 = vpop.f32.mrf.mxu0
        %v1304 = vadd.f32 %v1112, %v1303
        %1305 = vmatprep.mubr.f32.mxu0 0.0
        %1306 = vmatmul.mubr.f32.gmra.mxu0 %v858
        %v1307 = vpop.f32.mrf.mxu0
        %v1308 = vadd.f32 %v1108, %v1307
        %v1309 = vpop.f32.mrf.mxu0
        %v1310 = vadd.f32 %v1112, %v1309
        %1311 = vmatprep.mubr.f32.mxu0 0.0
        %1312 = vmatmul.mubr.f32.gmra.mxu0 %v863
        %v1313 = vpop.f32.mrf.mxu0
        %v1314 = vadd.f32 %v1108, %v1313
        %v1315 = vpop.f32.mrf.mxu0
        %v1316 = vadd.f32 %v1112, %v1315
        %1317 = vmatprep.mubr.f32.mxu0 0.0
        %1318 = vmatmul.mubr.f32.gmra.mxu0 %v868
        %v1319 = vpop.f32.mrf.mxu0
        %v1320 = vadd.f32 %v1108, %v1319
        %v1321 = vpop.f32.mrf.mxu0
        %v1322 = vadd.f32 %v1112, %v1321
        %1323 = vmatprep.mubr.f32.mxu0 0.0
        %1324 = vmatmul.mubr.f32.gmra.mxu0 %v873
        %v1325 = vpop.f32.mrf.mxu0
        %v1326 = vadd.f32 %v1108, %v1325
        %v1327 = vpop.f32.mrf.mxu0
        %v1328 = vadd.f32 %v1112, %v1327
        %1329 = vmatprep.mubr.f32.mxu0 0.0
        %1330 = vmatmul.mubr.f32.gmra.mxu0 %v878
        %v1331 = vpop.f32.mrf.mxu0
        %v1332 = vadd.f32 %v1108, %v1331
        %v1333 = vpop.f32.mrf.mxu0
        %v1334 = vadd.f32 %v1112, %v1333
        %1335 = vmatprep.mubr.f32.mxu0 0.0
        %1336 = vmatmul.mubr.f32.gmra.mxu0 %v883
        %v1337 = vpop.f32.mrf.mxu0
        %v1338 = vadd.f32 %v1108, %v1337
        %v1339 = vpop.f32.mrf.mxu0
        %v1340 = vadd.f32 %v1112, %v1339
        %1341 = vmatprep.mubr.f32.mxu0 0.0
        %1342 = vmatmul.mubr.f32.gmra.mxu0 %v888
        %v1343 = vpop.f32.mrf.mxu0
        %v1344 = vadd.f32 %v1108, %v1343
        %v1345 = vpop.f32.mrf.mxu0
        %v1346 = vadd.f32 %v1112, %v1345
        %1347 = vmatprep.mubr.f32.mxu0 0.0
        %1348 = vmatmul.mubr.f32.gmra.mxu0 %v893
        %v1349 = vpop.f32.mrf.mxu0
        %v1350 = vadd.f32 %v1108, %v1349
        %v1351 = vpop.f32.mrf.mxu0
        %v1352 = vadd.f32 %v1112, %v1351
        %1353 = vmatprep.mubr.f32.mxu0 0.0
        %1354 = vmatmul.mubr.f32.gmra.mxu0 %v898
        %v1355 = vpop.f32.mrf.mxu0
        %v1356 = vadd.f32 %v1108, %v1355
        %v1357 = vpop.f32.mrf.mxu0
        %v1358 = vadd.f32 %v1112, %v1357
        %1359 = vmatprep.mubr.f32.mxu0 0.0
        %1360 = vmatmul.mubr.f32.gmra.mxu0 %v903
        %v1361 = vpop.f32.mrf.mxu0
        %v1362 = vadd.f32 %v1108, %v1361
        %v1363 = vpop.f32.mrf.mxu0
        %v1364 = vadd.f32 %v1112, %v1363
        %1365 = vmatprep.mubr.f32.mxu0 0.0
        %1366 = vmatmul.mubr.f32.gmra.mxu0 %v908
        %v1367 = vpop.f32.mrf.mxu0
        %v1368 = vadd.f32 %v1108, %v1367
        %v1369 = vpop.f32.mrf.mxu0
        %v1370 = vadd.f32 %v1112, %v1369
        %1371 = vmatprep.mubr.f32.mxu0 0.0
        %1372 = vmatmul.mubr.f32.gmra.mxu0 %v913
        %v1373 = vpop.f32.mrf.mxu0
        %v1374 = vadd.f32 %v1108, %v1373
        %v1375 = vpop.f32.mrf.mxu0
        %v1376 = vadd.f32 %v1112, %v1375
        %1377 = vmatprep.mubr.f32.mxu0 0.0
        %1378 = vmatmul.mubr.f32.gmra.mxu0 %v918
        %v1379 = vpop.f32.mrf.mxu0
        %v1380 = vadd.f32 %v1108, %v1379
        %v1381 = vpop.f32.mrf.mxu0
        %v1382 = vadd.f32 %v1112, %v1381
        %1383 = vmatprep.mubr.f32.mxu0 0.0
        %1384 = vmatmul.mubr.f32.gmra.mxu0 %v923
        %v1385 = vpop.f32.mrf.mxu0
        %v1386 = vadd.f32 %v1108, %v1385
        %v1387 = vpop.f32.mrf.mxu0
        %v1388 = vadd.f32 %v1112, %v1387
        %1389 = vmatprep.mubr.f32.mxu0 0.0
        %1390 = vmatmul.mubr.f32.gmra.mxu0 %v928
        %v1391 = vpop.f32.mrf.mxu0
        %v1392 = vadd.f32 %v1108, %v1391
        %v1393 = vpop.f32.mrf.mxu0
        %v1394 = vadd.f32 %v1112, %v1393
        %1395 = vmatprep.mubr.f32.mxu0 0.0
        %1396 = vmatmul.mubr.f32.gmra.mxu0 %v933
        %v1397 = vpop.f32.mrf.mxu0
        %v1398 = vadd.f32 %v1108, %v1397
        %v1399 = vpop.f32.mrf.mxu0
        %v1400 = vadd.f32 %v1112, %v1399
        %1401 = vmatprep.mubr.f32.mxu0 0.0
        %1402 = vmatmul.mubr.f32.gmra.mxu0 %v938
        %v1403 = vpop.f32.mrf.mxu0
        %v1404 = vadd.f32 %v1108, %v1403
        %v1405 = vpop.f32.mrf.mxu0
        %v1406 = vadd.f32 %v1112, %v1405
        %1407 = vmatprep.mubr.f32.mxu0 0.0
        %1408 = vmatmul.mubr.f32.gmra.mxu0 %v943
        %v1409 = vpop.f32.mrf.mxu0
        %v1410 = vadd.f32 %v1108, %v1409
        %v1411 = vpop.f32.mrf.mxu0
        %v1412 = vadd.f32 %v1112, %v1411
        %1413 = vmatprep.mubr.f32.mxu0 0.0
        %1414 = vmatmul.mubr.f32.gmra.mxu0 %v948
        %v1415 = vpop.f32.mrf.mxu0
        %v1416 = vadd.f32 %v1108, %v1415
        %v1417 = vpop.f32.mrf.mxu0
        %v1418 = vadd.f32 %v1112, %v1417
        %1419 = vmatprep.mubr.f32.mxu0 0.0
        %1420 = vmatmul.mubr.f32.gmra.mxu0 %v953
        %v1421 = vpop.f32.mrf.mxu0
        %v1422 = vadd.f32 %v1108, %v1421
        %v1423 = vpop.f32.mrf.mxu0
        %v1424 = vadd.f32 %v1112, %v1423
        %1425 = vmatprep.mubr.f32.mxu0 0.0
        %1426 = vmatmul.mubr.f32.gmra.mxu0 %v958
        %v1427 = vpop.f32.mrf.mxu0
        %v1428 = vadd.f32 %v1108, %v1427
        %v1429 = vpop.f32.mrf.mxu0
        %v1430 = vadd.f32 %v1112, %v1429
        %1431 = vmatprep.mubr.f32.mxu0 0.0
        %1432 = vmatmul.mubr.f32.gmra.mxu0 %v963
        %v1433 = vpop.f32.mrf.mxu0
        %v1434 = vadd.f32 %v1108, %v1433
        %v1435 = vpop.f32.mrf.mxu0
        %v1436 = vadd.f32 %v1112, %v1435
        %1437 = vmatprep.mubr.f32.mxu0 0.0
        %1438 = vmatmul.mubr.f32.gmra.mxu0 %v968
        %v1439 = vpop.f32.mrf.mxu0
        %v1440 = vadd.f32 %v1108, %v1439
        %v1441 = vpop.f32.mrf.mxu0
        %v1442 = vadd.f32 %v1112, %v1441
        %1443 = vmatprep.mubr.f32.mxu0 0.0
        %1444 = vmatmul.mubr.f32.gmra.mxu0 %v973
        %v1445 = vpop.f32.mrf.mxu0
        %v1446 = vadd.f32 %v1108, %v1445
        %v1447 = vpop.f32.mrf.mxu0
        %v1448 = vadd.f32 %v1112, %v1447
        %1449 = vmatprep.mubr.f32.mxu0 0.0
        %1450 = vmatmul.mubr.f32.gmra.mxu0 %v978
        %v1451 = vpop.f32.mrf.mxu0
        %v1452 = vadd.f32 %v1108, %v1451
        %v1453 = vpop.f32.mrf.mxu0
        %v1454 = vadd.f32 %v1112, %v1453
        %1455 = vmatprep.mubr.f32.mxu0 0.0
        %1456 = vmatmul.mubr.f32.gmra.mxu0 %v983
        %v1457 = vpop.f32.mrf.mxu0
        %v1458 = vadd.f32 %v1108, %v1457
        %v1459 = vpop.f32.mrf.mxu0
        %v1460 = vadd.f32 %v1112, %v1459
        %1461 = vmatprep.mubr.f32.mxu0 0.0
        %1462 = vmatmul.mubr.f32.gmra.mxu0 %v988
        %v1463 = vpop.f32.mrf.mxu0
        %v1464 = vadd.f32 %v1108, %v1463
        %v1465 = vpop.f32.mrf.mxu0
        %v1466 = vadd.f32 %v1112, %v1465
        %1467 = vmatprep.mubr.f32.mxu0 0.0
        %1468 = vmatmul.mubr.f32.gmra.mxu0 %v993
        %v1469 = vpop.f32.mrf.mxu0
        %v1470 = vadd.f32 %v1108, %v1469
        %v1471 = vpop.f32.mrf.mxu0
        %v1472 = vadd.f32 %v1112, %v1471
        %1473 = vmatprep.mubr.f32.mxu0 0.0
        %1474 = vmatmul.mubr.f32.gmra.mxu0 %v998
        %v1475 = vpop.f32.mrf.mxu0
        %v1476 = vadd.f32 %v1108, %v1475
        %v1477 = vpop.f32.mrf.mxu0
        %v1478 = vadd.f32 %v1112, %v1477
        %1479 = vmatprep.mubr.f32.mxu0 0.0
        %1480 = vmatmul.mubr.f32.gmra.mxu0 %v1003
        %v1481 = vpop.f32.mrf.mxu0
        %v1482 = vadd.f32 %v1108, %v1481
        %v1483 = vpop.f32.mrf.mxu0
        %v1484 = vadd.f32 %v1112, %v1483
        %1485 = vmatprep.mubr.f32.mxu0 0.0
        %1486 = vmatmul.mubr.f32.gmra.mxu0 %v1008
        %v1487 = vpop.f32.mrf.mxu0
        %v1488 = vadd.f32 %v1108, %v1487
        %v1489 = vpop.f32.mrf.mxu0
        %v1490 = vadd.f32 %v1112, %v1489
        %1491 = vmatprep.mubr.f32.mxu0 0.0
        %1492 = vmatmul.mubr.f32.gmra.mxu0 %v1013
        %v1493 = vpop.f32.mrf.mxu0
        %v1494 = vadd.f32 %v1108, %v1493
        %v1495 = vpop.f32.mrf.mxu0
        %v1496 = vadd.f32 %v1112, %v1495
        %1497 = vmatprep.mubr.f32.mxu0 0.0
        %1498 = vmatmul.mubr.f32.gmra.mxu0 %v1018
        %v1499 = vpop.f32.mrf.mxu0
        %v1500 = vadd.f32 %v1108, %v1499
        %v1501 = vpop.f32.mrf.mxu0
        %v1502 = vadd.f32 %v1112, %v1501
        %1503 = vmatprep.mubr.f32.mxu0 0.0
        %1504 = vmatmul.mubr.f32.gmra.mxu0 %v1023
        %v1505 = vpop.f32.mrf.mxu0
        %v1506 = vadd.f32 %v1108, %v1505
        %v1507 = vpop.f32.mrf.mxu0
        %v1508 = vadd.f32 %v1112, %v1507
        %1509 = vmatprep.mubr.f32.mxu0 0.0
        %1510 = vmatmul.mubr.f32.gmra.mxu0 %v1028
        %v1511 = vpop.f32.mrf.mxu0
        %v1512 = vadd.f32 %v1108, %v1511
        %v1513 = vpop.f32.mrf.mxu0
        %v1514 = vadd.f32 %v1112, %v1513
        %1515 = vmatprep.mubr.f32.mxu0 0.0
        %1516 = vmatmul.mubr.f32.gmra.mxu0 %v1033
        %v1517 = vpop.f32.mrf.mxu0
        %v1518 = vadd.f32 %v1108, %v1517
        %v1519 = vpop.f32.mrf.mxu0
        %v1520 = vadd.f32 %v1112, %v1519
        %1521 = vmatprep.mubr.f32.mxu0 0.0
        %1522 = vmatmul.mubr.f32.gmra.mxu0 %v1038
        %v1523 = vpop.f32.mrf.mxu0
        %v1524 = vadd.f32 %v1108, %v1523
        %v1525 = vpop.f32.mrf.mxu0
        %v1526 = vadd.f32 %v1112, %v1525
        %1527 = vmatprep.mubr.f32.mxu0 0.0
        %1528 = vmatmul.mubr.f32.gmra.mxu0 %v1043
        %v1529 = vpop.f32.mrf.mxu0
        %v1530 = vadd.f32 %v1108, %v1529
        %v1531 = vpop.f32.mrf.mxu0
        %v1532 = vadd.f32 %v1112, %v1531
        %1533 = vmatprep.mubr.f32.mxu0 0.0
        %1534 = vmatmul.mubr.f32.gmra.mxu0 %v1048
        %v1535 = vpop.f32.mrf.mxu0
        %v1536 = vadd.f32 %v1108, %v1535
        %v1537 = vpop.f32.mrf.mxu0
        %v1538 = vadd.f32 %v1112, %v1537
        %1539 = vmatprep.mubr.f32.mxu0 0.0
        %1540 = vmatmul.mubr.f32.gmra.mxu0 %v1053
        %v1541 = vpop.f32.mrf.mxu0
        %v1542 = vadd.f32 %v1108, %v1541
        %v1543 = vpop.f32.mrf.mxu0
        %v1544 = vadd.f32 %v1112, %v1543
        %1545 = vmatprep.mubr.f32.mxu0 0.0
        %1546 = vmatmul.mubr.f32.gmra.mxu0 %v1058
        %v1547 = vpop.f32.mrf.mxu0
        %v1548 = vadd.f32 %v1108, %v1547
        %v1549 = vpop.f32.mrf.mxu0
        %v1550 = vadd.f32 %v1112, %v1549
        %1551 = vmatprep.mubr.f32.mxu0 0.0
        %1552 = vmatmul.mubr.f32.gmra.mxu0 %v1063
        %v1553 = vpop.f32.mrf.mxu0
        %v1554 = vadd.f32 %v1108, %v1553
        %v1555 = vpop.f32.mrf.mxu0
        %v1556 = vadd.f32 %v1112, %v1555
        %1557 = vmatprep.mubr.f32.mxu0 0.0
        %1558 = vmatmul.mubr.f32.gmra.mxu0 %v1068
        %v1559 = vpop.f32.mrf.mxu0
        %v1560 = vadd.f32 %v1108, %v1559
        %v1561 = vpop.f32.mrf.mxu0
        %v1562 = vadd.f32 %v1112, %v1561
        %1563 = vdwg.mxu0
        %v1564 = vld [vmem:[%s5] sm:$0xff]
        %v1565 = vld [vmem:[%s6] sm:$0xff]
        %v1566 = vld [vmem:[%s6 + $0x8] sm:$0xff]
        %v1567 = vld [vmem:[%s6 + $0x10] sm:$0xff]
        %v1568 = vld [vmem:[%s6 + $0x18] sm:$0xff]
        %v1569 = vld [vmem:[%s6 + $0x20] sm:$0xff]
        %v1570 = vld [vmem:[%s6 + $0x28] sm:$0xff]
        %v1571 = vld [vmem:[%s6 + $0x30] sm:$0xff]
        %v1572 = vld [vmem:[%s6 + $0x38] sm:$0xff]
        %v1573 = vld [vmem:[%s7] sm:$0xff]
        %v1574 = vld [vmem:[%s7 + $0x8] sm:$0xff]
        %v1575 = vld [vmem:[%s7 + $0x10] sm:$0xff]
        %v1576 = vld [vmem:[%s7 + $0x18] sm:$0xff]
        %v1577 = vld [vmem:[%s7 + $0x20] sm:$0xff]
        %v1578 = vld [vmem:[%s7 + $0x28] sm:$0xff]
        %v1579 = vld [vmem:[%s7 + $0x30] sm:$0xff]
        %v1580 = vld [vmem:[%s7 + $0x38] sm:$0xff]
        %1581 = vmatprep.subr.mxu0 0.0
        %1582 = vmatpush1.xpose.msra.mxu0 0.0
        %1583 = vmatprep.subr.mxu0 0.0
        %1584 = vmatpush1.xpose.msra.mxu0 0.0
        %1585 = vmatprep.subr.mxu0 0.0
        %1586 = vmatpush1.xpose.msra.mxu0 0.0
        %1587 = vmatprep.subr.mxu0 0.0
        %1588 = vmatpush1.xpose.msra.mxu0 0.0
        %1589 = vmatprep.subr.mxu0 0.0
        %1590 = vmatpush1.xpose.msra.mxu0 0.0
        %1591 = vmatprep.subr.mxu0 0.0
        %1592 = vmatpush1.xpose.msra.mxu0 0.0
        %1593 = vmatprep.subr.mxu0 0.0
        %1594 = vmatpush1.xpose.msra.mxu0 0.0
        %1595 = vmatprep.subr.mxu0 0.0
        %1596 = vmatpush1.xpose.msra.mxu0 0.0
        %1597 = vmatprep.subr.mxu0 0.0
        %1598 = vmatpush1.xpose.msra.mxu0 %v1224
        %1599 = vmatprep.subr.mxu0 0.0
        %1600 = vmatpush1.xpose.msra.mxu0 %v1218
        %1601 = vmatprep.subr.mxu0 0.0
        %1602 = vmatpush1.xpose.msra.mxu0 %v1212
        %1603 = vmatprep.subr.mxu0 0.0
        %1604 = vmatpush1.xpose.msra.mxu0 %v1206
        %1605 = vmatprep.subr.mxu0 0.0
        %1606 = vmatpush1.xpose.msra.mxu0 %v1200
        %1607 = vmatprep.subr.mxu0 0.0
        %1608 = vmatpush1.xpose.msra.mxu0 %v1194
        %1609 = vmatprep.subr.mxu0 0.0
        %1610 = vmatpush1.xpose.msra.mxu0 %v1188
        %1611 = vmatprep.subr.mxu0 0.0
        %1612 = vmatpush1.xpose.msra.mxu0 %v1182
        %1613 = vmatprep.subr.mxu0 0.0
        %1614 = vmatpush2.xpose.msra.mxu0 0.0
        %1615 = vmatprep.subr.mxu0 0.0
        %1616 = vmatpush2.xpose.msra.mxu0 0.0
        %1617 = vmatprep.subr.mxu0 0.0
        %1618 = vmatpush2.xpose.msra.mxu0 0.0
        %1619 = vmatprep.subr.mxu0 0.0
        %1620 = vmatpush2.xpose.msra.mxu0 0.0
        %1621 = vmatprep.subr.mxu0 0.0
        %1622 = vmatpush2.xpose.msra.mxu0 0.0
        %1623 = vmatprep.subr.mxu0 0.0
        %1624 = vmatpush2.xpose.msra.mxu0 0.0
        %1625 = vmatprep.subr.mxu0 0.0
        %1626 = vmatpush2.xpose.msra.mxu0 0.0
        %1627 = vmatprep.subr.mxu0 0.0
        %1628 = vmatpush2.xpose.msra.mxu0 0.0
        %1629 = vmatprep.subr.mxu0 0.0
        %1630 = vmatpush2.xpose.msra.mxu0 0.0
        %1631 = vmatprep.subr.mxu0 0.0
        %1632 = vmatpush2.xpose.msra.mxu0 0.0
        %1633 = vmatprep.subr.mxu0 0.0
        %1634 = vmatpush2.xpose.msra.mxu0 0.0
        %1635 = vmatprep.subr.mxu0 0.0
        %1636 = vmatpush2.xpose.msra.mxu0 0.0
        %1637 = vmatprep.subr.mxu0 0.0
        %1638 = vmatpush2.xpose.msra.mxu0 0.0
        %1639 = vmatprep.subr.mxu0 0.0
        %1640 = vmatpush2.xpose.msra.mxu0 0.0
        %1641 = vmatprep.subr.mxu0 0.0
        %1642 = vmatpush2.xpose.msra.mxu0 0.0
        %1643 = vmatprep.subr.mxu0 0.0
        %1644 = vmatpush2.xpose.msra.mxu0 0.0
        %1645 = vmatprep.mubr.f32.mxu0 0.0
        %1646 = vmatmul.mubr.f32.gmra.mxu0 %v1565
        %v1647 = vpop.f32.mrf.mxu0
        %v1648 = vadd.f32 0.0, %v1647
        %v1649 = vpop.f32.mrf.mxu0
        %1650 = vmatprep.mubr.f32.mxu0 0.0
        %1651 = vmatmul.mubr.f32.gmra.mxu0 %v1566
        %v1652 = vpop.f32.mrf.mxu0
        %v1653 = vadd.f32 0.0, %v1652
        %v1654 = vpop.f32.mrf.mxu0
        %1655 = vmatprep.mubr.f32.mxu0 0.0
        %1656 = vmatmul.mubr.f32.gmra.mxu0 %v1567
        %v1657 = vpop.f32.mrf.mxu0
        %v1658 = vadd.f32 0.0, %v1657
        %v1659 = vpop.f32.mrf.mxu0
        %1660 = vmatprep.mubr.f32.mxu0 0.0
        %1661 = vmatmul.mubr.f32.gmra.mxu0 %v1568
        %v1662 = vpop.f32.mrf.mxu0
        %v1663 = vadd.f32 0.0, %v1662
        %v1664 = vpop.f32.mrf.mxu0
        %1665 = vmatprep.mubr.f32.mxu0 0.0
        %1666 = vmatmul.mubr.f32.gmra.mxu0 %v1569
        %v1667 = vpop.f32.mrf.mxu0
        %v1668 = vadd.f32 0.0, %v1667
        %v1669 = vpop.f32.mrf.mxu0
        %1670 = vmatprep.mubr.f32.mxu0 0.0
        %1671 = vmatmul.mubr.f32.gmra.mxu0 %v1570
        %v1672 = vpop.f32.mrf.mxu0
        %v1673 = vadd.f32 0.0, %v1672
        %v1674 = vpop.f32.mrf.mxu0
        %1675 = vmatprep.mubr.f32.mxu0 0.0
        %1676 = vmatmul.mubr.f32.gmra.mxu0 %v1571
        %v1677 = vpop.f32.mrf.mxu0
        %v1678 = vadd.f32 0.0, %v1677
        %v1679 = vpop.f32.mrf.mxu0
        %1680 = vmatprep.mubr.f32.mxu0 0.0
        %1681 = vmatmul.mubr.f32.gmra.mxu0 %v1572
        %v1682 = vpop.f32.mrf.mxu0
        %v1683 = vadd.f32 0.0, %v1682
        %v1684 = vpop.f32.mrf.mxu0
        %1685 = vdwg.mxu0
        %vm1686 = vcmask 523264
        %v1687 = vsel %vm1686, %v1648, -inf
        %1688 = vmax.xlane.f32.xlu0 %v1687
        %v1689 = vpop.xlane.xlu0 %1688
        %v1690 = vsel %vm1686, %v1653, -inf
        %1691 = vmax.xlane.f32.xlu0 %v1690
        %v1692 = vpop.xlane.xlu0 %1691
        %v1693 = vsel %vm1686, %v1658, -inf
        %1694 = vmax.xlane.f32.xlu0 %v1693
        %v1695 = vpop.xlane.xlu0 %1694
        %v1696 = vsel %vm1686, %v1663, -inf
        %1697 = vmax.xlane.f32.xlu0 %v1696
        %v1698 = vpop.xlane.xlu0 %1697
        %v1699 = vsel %vm1686, %v1668, -inf
        %1700 = vmax.xlane.f32.xlu0 %v1699
        %v1701 = vpop.xlane.xlu0 %1700
        %v1702 = vsel %vm1686, %v1673, -inf
        %1703 = vmax.xlane.f32.xlu0 %v1702
        %v1704 = vpop.xlane.xlu0 %1703
        %v1705 = vsel %vm1686, %v1678, -inf
        %1706 = vmax.xlane.f32.xlu0 %v1705
        %v1707 = vpop.xlane.xlu0 %1706
        %v1708 = vsel %vm1686, %v1683, -inf
        %1709 = vmax.xlane.f32.xlu0 %v1708
        %v1710 = vpop.xlane.xlu0 %1709
        %v1711 = vsub.f32 %v1648, %v1689
        %v1712 = vsub.f32 %v1653, %v1692
        %v1713 = vsub.f32 %v1658, %v1695
        %v1714 = vsub.f32 %v1663, %v1698
        %v1715 = vsub.f32 %v1668, %v1701
        %v1716 = vsub.f32 %v1673, %v1704
        %v1717 = vsub.f32 %v1678, %v1707
        %v1718 = vsub.f32 %v1683, %v1710
        %v1719 = vmul.f32 %v1711, 1.442695
        %v1720 = vpow.pop %v1719
        %v1721 = vmul.f32 %v1712, 1.442695
        %v1722 = vpow.pop %v1721
        %v1723 = vmul.f32 %v1713, 1.442695
        %v1724 = vpow.pop %v1723
        %v1725 = vmul.f32 %v1714, 1.442695
        %v1726 = vpow.pop %v1725
        %v1727 = vmul.f32 %v1715, 1.442695
        %v1728 = vpow.pop %v1727
        %v1729 = vmul.f32 %v1716, 1.442695
        %v1730 = vpow.pop %v1729
        %v1731 = vmul.f32 %v1717, 1.442695
        %v1732 = vpow.pop %v1731
        %v1733 = vmul.f32 %v1718, 1.442695
        %v1734 = vpow.pop %v1733
        %v1735 = vsel %vm1686, %v1720, 0.0
        %1736 = vadd.xlane.f32.xlu0 %v1735
        %v1737 = vpop.xlane.xlu0 %1736
        %v1738 = vsel %vm1686, %v1722, 0.0
        %1739 = vadd.xlane.f32.xlu0 %v1738
        %v1740 = vpop.xlane.xlu0 %1739
        %v1741 = vsel %vm1686, %v1724, 0.0
        %1742 = vadd.xlane.f32.xlu0 %v1741
        %v1743 = vpop.xlane.xlu0 %1742
        %v1744 = vsel %vm1686, %v1726, 0.0
        %1745 = vadd.xlane.f32.xlu0 %v1744
        %v1746 = vpop.xlane.xlu0 %1745
        %v1747 = vsel %vm1686, %v1728, 0.0
        %1748 = vadd.xlane.f32.xlu0 %v1747
        %v1749 = vpop.xlane.xlu0 %1748
        %v1750 = vsel %vm1686, %v1730, 0.0
        %1751 = vadd.xlane.f32.xlu0 %v1750
        %v1752 = vpop.xlane.xlu0 %1751
        %v1753 = vsel %vm1686, %v1732, 0.0
        %1754 = vadd.xlane.f32.xlu0 %v1753
        %v1755 = vpop.xlane.xlu0 %1754
        %v1756 = vsel %vm1686, %v1734, 0.0
        %1757 = vadd.xlane.f32.xlu0 %v1756
        %v1758 = vpop.xlane.xlu0 %1757
        %v1759 = vrcp.pop %v1737
        %v1760 = vmul.f32 %v1720, %v1759
        %v1761 = vrcp.pop %v1740
        %v1762 = vmul.f32 %v1722, %v1761
        %v1763 = vrcp.pop %v1743
        %v1764 = vmul.f32 %v1724, %v1763
        %v1765 = vrcp.pop %v1746
        %v1766 = vmul.f32 %v1726, %v1765
        %v1767 = vrcp.pop %v1749
        %v1768 = vmul.f32 %v1728, %v1767
        %v1769 = vrcp.pop %v1752
        %v1770 = vmul.f32 %v1730, %v1769
        %v1771 = vrcp.pop %v1755
        %v1772 = vmul.f32 %v1732, %v1771
        %v1773 = vrcp.pop %v1758
        %v1774 = vmul.f32 %v1734, %v1773
        %v1776 = vsel %vm1686, %v1760, 0
        %v1779 = vsel %vm1686, %v1762, 0
        %v1782 = vsel %vm1686, %v1764, 0
        %v1785 = vsel %vm1686, %v1766, 0
        %v1788 = vsel %vm1686, %v1768, 0
        %v1791 = vsel %vm1686, %v1770, 0
        %v1794 = vsel %vm1686, %v1772, 0
        %v1797 = vsel %vm1686, %v1774, 0
        %1799 = vmatprep.subr.mxu0 0.0
        %1800 = vmatpush1.msra.mxu0 0.0
        %1801 = vmatprep.subr.mxu0 0.0
        %1802 = vmatpush1.msra.mxu0 0.0
        %1803 = vmatprep.subr.mxu0 0.0
        %1804 = vmatpush1.msra.mxu0 0.0
        %1805 = vmatprep.subr.mxu0 0.0
        %1806 = vmatpush1.msra.mxu0 0.0
        %1807 = vmatprep.subr.mxu0 0.0
        %1808 = vmatpush1.msra.mxu0 0.0
        %1809 = vmatprep.subr.mxu0 0.0
        %1810 = vmatpush1.msra.mxu0 0.0
        %1811 = vmatprep.subr.mxu0 0.0
        %1812 = vmatpush1.msra.mxu0 0.0
        %1813 = vmatprep.subr.mxu0 0.0
        %1814 = vmatpush1.msra.mxu0 0.0
        %1815 = vmatprep.subr.mxu0 0.0
        %1816 = vmatpush1.msra.mxu0 %v1226
        %1817 = vmatprep.subr.mxu0 0.0
        %1818 = vmatpush1.msra.mxu0 %v1220
        %1819 = vmatprep.subr.mxu0 0.0
        %1820 = vmatpush1.msra.mxu0 %v1214
        %1821 = vmatprep.subr.mxu0 0.0
        %1822 = vmatpush1.msra.mxu0 %v1208
        %1823 = vmatprep.subr.mxu0 0.0
        %1824 = vmatpush1.msra.mxu0 %v1202
        %1825 = vmatprep.subr.mxu0 0.0
        %1826 = vmatpush1.msra.mxu0 %v1196
        %1827 = vmatprep.subr.mxu0 0.0
        %1828 = vmatpush1.msra.mxu0 %v1190
        %1829 = vmatprep.subr.mxu0 0.0
        %1830 = vmatpush1.msra.mxu0 %v1184
        %1831 = vmatprep.subr.mxu0 0.0
        %1832 = vmatpush2.msra.mxu0 0.0
        %1833 = vmatprep.subr.mxu0 0.0
        %1834 = vmatpush2.msra.mxu0 0.0
        %1835 = vmatprep.subr.mxu0 0.0
        %1836 = vmatpush2.msra.mxu0 0.0
        %1837 = vmatprep.subr.mxu0 0.0
        %1838 = vmatpush2.msra.mxu0 0.0
        %1839 = vmatprep.subr.mxu0 0.0
        %1840 = vmatpush2.msra.mxu0 0.0
        %1841 = vmatprep.subr.mxu0 0.0
        %1842 = vmatpush2.msra.mxu0 0.0
        %1843 = vmatprep.subr.mxu0 0.0
        %1844 = vmatpush2.msra.mxu0 0.0
        %1845 = vmatprep.subr.mxu0 0.0
        %1846 = vmatpush2.msra.mxu0 0.0
        %1847 = vmatprep.subr.mxu0 0.0
        %1848 = vmatpush2.msra.mxu0 0.0
        %1849 = vmatprep.subr.mxu0 0.0
        %1850 = vmatpush2.msra.mxu0 0.0
        %1851 = vmatprep.subr.mxu0 0.0
        %1852 = vmatpush2.msra.mxu0 0.0
        %1853 = vmatprep.subr.mxu0 0.0
        %1854 = vmatpush2.msra.mxu0 0.0
        %1855 = vmatprep.subr.mxu0 0.0
        %1856 = vmatpush2.msra.mxu0 0.0
        %1857 = vmatprep.subr.mxu0 0.0
        %1858 = vmatpush2.msra.mxu0 0.0
        %1859 = vmatprep.subr.mxu0 0.0
        %1860 = vmatpush2.msra.mxu0 0.0
        %1861 = vmatprep.subr.mxu0 0.0
        %1862 = vmatpush2.msra.mxu0 0.0
        %1863 = vmatprep.mubr.f32.mxu0 0.0
        %1864 = vmatmul.mubr.f32.gmra.mxu0 %v1776
        %v1865 = vpop.f32.mrf.mxu0
        %v1866 = vadd.f32 0.0, %v1865
        %v1867 = vpop.f32.mrf.mxu0
        %1868 = vmatprep.mubr.f32.mxu0 0.0
        %1869 = vmatmul.mubr.f32.gmra.mxu0 %v1779
        %v1870 = vpop.f32.mrf.mxu0
        %v1871 = vadd.f32 0.0, %v1870
        %v1872 = vpop.f32.mrf.mxu0
        %1873 = vmatprep.mubr.f32.mxu0 0.0
        %1874 = vmatmul.mubr.f32.gmra.mxu0 %v1782
        %v1875 = vpop.f32.mrf.mxu0
        %v1876 = vadd.f32 0.0, %v1875
        %v1877 = vpop.f32.mrf.mxu0
        %1878 = vmatprep.mubr.f32.mxu0 0.0
        %1879 = vmatmul.mubr.f32.gmra.mxu0 %v1785
        %v1880 = vpop.f32.mrf.mxu0
        %v1881 = vadd.f32 0.0, %v1880
        %v1882 = vpop.f32.mrf.mxu0
        %1883 = vmatprep.mubr.f32.mxu0 0.0
        %1884 = vmatmul.mubr.f32.gmra.mxu0 %v1788
        %v1885 = vpop.f32.mrf.mxu0
        %v1886 = vadd.f32 0.0, %v1885
        %v1887 = vpop.f32.mrf.mxu0
        %1888 = vmatprep.mubr.f32.mxu0 0.0
        %1889 = vmatmul.mubr.f32.gmra.mxu0 %v1791
        %v1890 = vpop.f32.mrf.mxu0
        %v1891 = vadd.f32 0.0, %v1890
        %v1892 = vpop.f32.mrf.mxu0
        %1893 = vmatprep.mubr.f32.mxu0 0.0
        %1894 = vmatmul.mubr.f32.gmra.mxu0 %v1794
        %v1895 = vpop.f32.mrf.mxu0
        %v1896 = vadd.f32 0.0, %v1895
        %v1897 = vpop.f32.mrf.mxu0
        %1898 = vmatprep.mubr.f32.mxu0 0.0
        %1899 = vmatmul.mubr.f32.gmra.mxu0 %v1797
        %v1900 = vpop.f32.mrf.mxu0
        %v1901 = vadd.f32 0.0, %v1900
        %v1902 = vpop.f32.mrf.mxu0
        %1903 = vdwg.mxu0
        %v1904 = vmul.f32 %v1866, %v1573
        %v1905 = vmul.f32 %v1871, %v1574
        %v1906 = vmul.f32 %v1876, %v1575
        %v1907 = vmul.f32 %v1881, %v1576
        %v1908 = vmul.f32 %v1886, %v1577
        %v1909 = vmul.f32 %v1891, %v1578
        %v1910 = vmul.f32 %v1896, %v1579
        %v1911 = vmul.f32 %v1901, %v1580
        %v1912 = vadd.f32 %v1904, %v1905
        %v1913 = vadd.f32 %v1912, %v1906
        %v1914 = vadd.f32 %v1913, %v1907
        %v1915 = vadd.f32 %v1914, %v1908
        %v1916 = vadd.f32 %v1915, %v1909
        %v1917 = vadd.f32 %v1916, %v1910
        %v1918 = vadd.f32 %v1917, %v1911
        %v1919 = vadd.f32 %v1564, %v1918
        %1920 = vmatprep.subr.mxu0 0.0
        %1921 = vmatpush1.xpose.msra.mxu0 0.0
        %1922 = vmatprep.subr.mxu0 0.0
        %1923 = vmatpush1.xpose.msra.mxu0 0.0
        %1924 = vmatprep.subr.mxu0 0.0
        %1925 = vmatpush1.xpose.msra.mxu0 0.0
        %1926 = vmatprep.subr.mxu0 0.0
        %1927 = vmatpush1.xpose.msra.mxu0 0.0
        %1928 = vmatprep.subr.mxu0 0.0
        %1929 = vmatpush1.xpose.msra.mxu0 0.0
        %1930 = vmatprep.subr.mxu0 0.0
        %1931 = vmatpush1.xpose.msra.mxu0 0.0
        %1932 = vmatprep.subr.mxu0 0.0
        %1933 = vmatpush1.xpose.msra.mxu0 0.0
        %1934 = vmatprep.subr.mxu0 0.0
        %1935 = vmatpush1.xpose.msra.mxu0 0.0
        %1936 = vmatprep.subr.mxu0 0.0
        %1937 = vmatpush1.xpose.msra.mxu0 %v1272
        %1938 = vmatprep.subr.mxu0 0.0
        %1939 = vmatpush1.xpose.msra.mxu0 %v1266
        %1940 = vmatprep.subr.mxu0 0.0
        %1941 = vmatpush1.xpose.msra.mxu0 %v1260
        %1942 = vmatprep.subr.mxu0 0.0
        %1943 = vmatpush1.xpose.msra.mxu0 %v1254
        %1944 = vmatprep.subr.mxu0 0.0
        %1945 = vmatpush1.xpose.msra.mxu0 %v1248
        %1946 = vmatprep.subr.mxu0 0.0
        %1947 = vmatpush1.xpose.msra.mxu0 %v1242
        %1948 = vmatprep.subr.mxu0 0.0
        %1949 = vmatpush1.xpose.msra.mxu0 %v1236
        %1950 = vmatprep.subr.mxu0 0.0
        %1951 = vmatpush1.xpose.msra.mxu0 %v1230
        %1952 = vmatprep.subr.mxu0 0.0
        %1953 = vmatpush2.xpose.msra.mxu0 0.0
        %1954 = vmatprep.subr.mxu0 0.0
        %1955 = vmatpush2.xpose.msra.mxu0 0.0
        %1956 = vmatprep.subr.mxu0 0.0
        %1957 = vmatpush2.xpose.msra.mxu0 0.0
        %1958 = vmatprep.subr.mxu0 0.0
        %1959 = vmatpush2.xpose.msra.mxu0 0.0
        %1960 = vmatprep.subr.mxu0 0.0
        %1961 = vmatpush2.xpose.msra.mxu0 0.0
        %1962 = vmatprep.subr.mxu0 0.0
        %1963 = vmatpush2.xpose.msra.mxu0 0.0
        %1964 = vmatprep.subr.mxu0 0.0
        %1965 = vmatpush2.xpose.msra.mxu0 0.0
        %1966 = vmatprep.subr.mxu0 0.0
        %1967 = vmatpush2.xpose.msra.mxu0 0.0
        %1968 = vmatprep.subr.mxu0 0.0
        %1969 = vmatpush2.xpose.msra.mxu0 0.0
        %1970 = vmatprep.subr.mxu0 0.0
        %1971 = vmatpush2.xpose.msra.mxu0 0.0
        %1972 = vmatprep.subr.mxu0 0.0
        %1973 = vmatpush2.xpose.msra.mxu0 0.0
        %1974 = vmatprep.subr.mxu0 0.0
        %1975 = vmatpush2.xpose.msra.mxu0 0.0
        %1976 = vmatprep.subr.mxu0 0.0
        %1977 = vmatpush2.xpose.msra.mxu0 0.0
        %1978 = vmatprep.subr.mxu0 0.0
        %1979 = vmatpush2.xpose.msra.mxu0 0.0
        %1980 = vmatprep.subr.mxu0 0.0
        %1981 = vmatpush2.xpose.msra.mxu0 0.0
        %1982 = vmatprep.subr.mxu0 0.0
        %1983 = vmatpush2.xpose.msra.mxu0 0.0
        %1984 = vmatprep.mubr.f32.mxu0 0.0
        %1985 = vmatmul.mubr.f32.gmra.mxu0 %v1565
        %v1986 = vpop.f32.mrf.mxu0
        %v1987 = vadd.f32 0.0, %v1986
        %v1988 = vpop.f32.mrf.mxu0
        %1989 = vmatprep.mubr.f32.mxu0 0.0
        %1990 = vmatmul.mubr.f32.gmra.mxu0 %v1566
        %v1991 = vpop.f32.mrf.mxu0
        %v1992 = vadd.f32 0.0, %v1991
        %v1993 = vpop.f32.mrf.mxu0
        %1994 = vmatprep.mubr.f32.mxu0 0.0
        %1995 = vmatmul.mubr.f32.gmra.mxu0 %v1567
        %v1996 = vpop.f32.mrf.mxu0
        %v1997 = vadd.f32 0.0, %v1996
        %v1998 = vpop.f32.mrf.mxu0
        %1999 = vmatprep.mubr.f32.mxu0 0.0
        %2000 = vmatmul.mubr.f32.gmra.mxu0 %v1568
        %v2001 = vpop.f32.mrf.mxu0
        %v2002 = vadd.f32 0.0, %v2001
        %v2003 = vpop.f32.mrf.mxu0
        %2004 = vmatprep.mubr.f32.mxu0 0.0
        %2005 = vmatmul.mubr.f32.gmra.mxu0 %v1569
        %v2006 = vpop.f32.mrf.mxu0
        %v2007 = vadd.f32 0.0, %v2006
        %v2008 = vpop.f32.mrf.mxu0
        %2009 = vmatprep.mubr.f32.mxu0 0.0
        %2010 = vmatmul.mubr.f32.gmra.mxu0 %v1570
        %v2011 = vpop.f32.mrf.mxu0
        %v2012 = vadd.f32 0.0, %v2011
        %v2013 = vpop.f32.mrf.mxu0
        %2014 = vmatprep.mubr.f32.mxu0 0.0
        %2015 = vmatmul.mubr.f32.gmra.mxu0 %v1571
        %v2016 = vpop.f32.mrf.mxu0
        %v2017 = vadd.f32 0.0, %v2016
        %v2018 = vpop.f32.mrf.mxu0
        %2019 = vmatprep.mubr.f32.mxu0 0.0
        %2020 = vmatmul.mubr.f32.gmra.mxu0 %v1572
        %v2021 = vpop.f32.mrf.mxu0
        %v2022 = vadd.f32 0.0, %v2021
        %v2023 = vpop.f32.mrf.mxu0
        %2024 = vdwg.mxu0
        %v2025 = vsel %vm1686, %v1987, -inf
        %2026 = vmax.xlane.f32.xlu0 %v2025
        %v2027 = vpop.xlane.xlu0 %2026
        %v2028 = vsel %vm1686, %v1992, -inf
        %2029 = vmax.xlane.f32.xlu0 %v2028
        %v2030 = vpop.xlane.xlu0 %2029
        %v2031 = vsel %vm1686, %v1997, -inf
        %2032 = vmax.xlane.f32.xlu0 %v2031
        %v2033 = vpop.xlane.xlu0 %2032
        %v2034 = vsel %vm1686, %v2002, -inf
        %2035 = vmax.xlane.f32.xlu0 %v2034
        %v2036 = vpop.xlane.xlu0 %2035
        %v2037 = vsel %vm1686, %v2007, -inf
        %2038 = vmax.xlane.f32.xlu0 %v2037
        %v2039 = vpop.xlane.xlu0 %2038
        %v2040 = vsel %vm1686, %v2012, -inf
        %2041 = vmax.xlane.f32.xlu0 %v2040
        %v2042 = vpop.xlane.xlu0 %2041
        %v2043 = vsel %vm1686, %v2017, -inf
        %2044 = vmax.xlane.f32.xlu0 %v2043
        %v2045 = vpop.xlane.xlu0 %2044
        %v2046 = vsel %vm1686, %v2022, -inf
        %2047 = vmax.xlane.f32.xlu0 %v2046
        %v2048 = vpop.xlane.xlu0 %2047
        %v2049 = vsub.f32 %v1987, %v2027
        %v2050 = vsub.f32 %v1992, %v2030
        %v2051 = vsub.f32 %v1997, %v2033
        %v2052 = vsub.f32 %v2002, %v2036
        %v2053 = vsub.f32 %v2007, %v2039
        %v2054 = vsub.f32 %v2012, %v2042
        %v2055 = vsub.f32 %v2017, %v2045
        %v2056 = vsub.f32 %v2022, %v2048
        %v2057 = vmul.f32 %v2049, 1.442695
        %v2058 = vpow.pop %v2057
        %v2059 = vmul.f32 %v2050, 1.442695
        %v2060 = vpow.pop %v2059
        %v2061 = vmul.f32 %v2051, 1.442695
        %v2062 = vpow.pop %v2061
        %v2063 = vmul.f32 %v2052, 1.442695
        %v2064 = vpow.pop %v2063
        %v2065 = vmul.f32 %v2053, 1.442695
        %v2066 = vpow.pop %v2065
        %v2067 = vmul.f32 %v2054, 1.442695
        %v2068 = vpow.pop %v2067
        %v2069 = vmul.f32 %v2055, 1.442695
        %v2070 = vpow.pop %v2069
        %v2071 = vmul.f32 %v2056, 1.442695
        %v2072 = vpow.pop %v2071
        %v2073 = vsel %vm1686, %v2058, 0.0
        %2074 = vadd.xlane.f32.xlu0 %v2073
        %v2075 = vpop.xlane.xlu0 %2074
        %v2076 = vsel %vm1686, %v2060, 0.0
        %2077 = vadd.xlane.f32.xlu0 %v2076
        %v2078 = vpop.xlane.xlu0 %2077
        %v2079 = vsel %vm1686, %v2062, 0.0
        %2080 = vadd.xlane.f32.xlu0 %v2079
        %v2081 = vpop.xlane.xlu0 %2080
        %v2082 = vsel %vm1686, %v2064, 0.0
        %2083 = vadd.xlane.f32.xlu0 %v2082
        %v2084 = vpop.xlane.xlu0 %2083
        %v2085 = vsel %vm1686, %v2066, 0.0
        %2086 = vadd.xlane.f32.xlu0 %v2085
        %v2087 = vpop.xlane.xlu0 %2086
        %v2088 = vsel %vm1686, %v2068, 0.0
        %2089 = vadd.xlane.f32.xlu0 %v2088
        %v2090 = vpop.xlane.xlu0 %2089
        %v2091 = vsel %vm1686, %v2070, 0.0
        %2092 = vadd.xlane.f32.xlu0 %v2091
        %v2093 = vpop.xlane.xlu0 %2092
        %v2094 = vsel %vm1686, %v2072, 0.0
        %2095 = vadd.xlane.f32.xlu0 %v2094
        %v2096 = vpop.xlane.xlu0 %2095
        %v2097 = vrcp.pop %v2075
        %v2098 = vmul.f32 %v2058, %v2097
        %v2099 = vrcp.pop %v2078
        %v2100 = vmul.f32 %v2060, %v2099
        %v2101 = vrcp.pop %v2081
        %v2102 = vmul.f32 %v2062, %v2101
        %v2103 = vrcp.pop %v2084
        %v2104 = vmul.f32 %v2064, %v2103
        %v2105 = vrcp.pop %v2087
        %v2106 = vmul.f32 %v2066, %v2105
        %v2107 = vrcp.pop %v2090
        %v2108 = vmul.f32 %v2068, %v2107
        %v2109 = vrcp.pop %v2093
        %v2110 = vmul.f32 %v2070, %v2109
        %v2111 = vrcp.pop %v2096
        %v2112 = vmul.f32 %v2072, %v2111
        %v2114 = vsel %vm1686, %v2098, 0
        %v2117 = vsel %vm1686, %v2100, 0
        %v2120 = vsel %vm1686, %v2102, 0
        %v2123 = vsel %vm1686, %v2104, 0
        %v2126 = vsel %vm1686, %v2106, 0
        %v2129 = vsel %vm1686, %v2108, 0
        %v2132 = vsel %vm1686, %v2110, 0
        %v2135 = vsel %vm1686, %v2112, 0
        %2137 = vmatprep.subr.mxu0 0.0
        %2138 = vmatpush1.msra.mxu0 0.0
        %2139 = vmatprep.subr.mxu0 0.0
        %2140 = vmatpush1.msra.mxu0 0.0
        %2141 = vmatprep.subr.mxu0 0.0
        %2142 = vmatpush1.msra.mxu0 0.0
        %2143 = vmatprep.subr.mxu0 0.0
        %2144 = vmatpush1.msra.mxu0 0.0
        %2145 = vmatprep.subr.mxu0 0.0
        %2146 = vmatpush1.msra.mxu0 0.0
        %2147 = vmatprep.subr.mxu0 0.0
        %2148 = vmatpush1.msra.mxu0 0.0
        %2149 = vmatprep.subr.mxu0 0.0
        %2150 = vmatpush1.msra.mxu0 0.0
        %2151 = vmatprep.subr.mxu0 0.0
        %2152 = vmatpush1.msra.mxu0 0.0
        %2153 = vmatprep.subr.mxu0 0.0
        %2154 = vmatpush1.msra.mxu0 %v1274
        %2155 = vmatprep.subr.mxu0 0.0
        %2156 = vmatpush1.msra.mxu0 %v1268
        %2157 = vmatprep.subr.mxu0 0.0
        %2158 = vmatpush1.msra.mxu0 %v1262
        %2159 = vmatprep.subr.mxu0 0.0
        %2160 = vmatpush1.msra.mxu0 %v1256
        %2161 = vmatprep.subr.mxu0 0.0
        %2162 = vmatpush1.msra.mxu0 %v1250
        %2163 = vmatprep.subr.mxu0 0.0
        %2164 = vmatpush1.msra.mxu0 %v1244
        %2165 = vmatprep.subr.mxu0 0.0
        %2166 = vmatpush1.msra.mxu0 %v1238
        %2167 = vmatprep.subr.mxu0 0.0
        %2168 = vmatpush1.msra.mxu0 %v1232
        %2169 = vmatprep.subr.mxu0 0.0
        %2170 = vmatpush2.msra.mxu0 0.0
        %2171 = vmatprep.subr.mxu0 0.0
        %2172 = vmatpush2.msra.mxu0 0.0
        %2173 = vmatprep.subr.mxu0 0.0
        %2174 = vmatpush2.msra.mxu0 0.0
        %2175 = vmatprep.subr.mxu0 0.0
        %2176 = vmatpush2.msra.mxu0 0.0
        %2177 = vmatprep.subr.mxu0 0.0
        %2178 = vmatpush2.msra.mxu0 0.0
        %2179 = vmatprep.subr.mxu0 0.0
        %2180 = vmatpush2.msra.mxu0 0.0
        %2181 = vmatprep.subr.mxu0 0.0
        %2182 = vmatpush2.msra.mxu0 0.0
        %2183 = vmatprep.subr.mxu0 0.0
        %2184 = vmatpush2.msra.mxu0 0.0
        %2185 = vmatprep.subr.mxu0 0.0
        %2186 = vmatpush2.msra.mxu0 0.0
        %2187 = vmatprep.subr.mxu0 0.0
        %2188 = vmatpush2.msra.mxu0 0.0
        %2189 = vmatprep.subr.mxu0 0.0
        %2190 = vmatpush2.msra.mxu0 0.0
        %2191 = vmatprep.subr.mxu0 0.0
        %2192 = vmatpush2.msra.mxu0 0.0
        %2193 = vmatprep.subr.mxu0 0.0
        %2194 = vmatpush2.msra.mxu0 0.0
        %2195 = vmatprep.subr.mxu0 0.0
        %2196 = vmatpush2.msra.mxu0 0.0
        %2197 = vmatprep.subr.mxu0 0.0
        %2198 = vmatpush2.msra.mxu0 0.0
        %2199 = vmatprep.subr.mxu0 0.0
        %2200 = vmatpush2.msra.mxu0 0.0
        %2201 = vmatprep.mubr.f32.mxu0 0.0
        %2202 = vmatmul.mubr.f32.gmra.mxu0 %v2114
        %v2203 = vpop.f32.mrf.mxu0
        %v2204 = vadd.f32 0.0, %v2203
        %v2205 = vpop.f32.mrf.mxu0
        %2206 = vmatprep.mubr.f32.mxu0 0.0
        %2207 = vmatmul.mubr.f32.gmra.mxu0 %v2117
        %v2208 = vpop.f32.mrf.mxu0
        %v2209 = vadd.f32 0.0, %v2208
        %v2210 = vpop.f32.mrf.mxu0
        %2211 = vmatprep.mubr.f32.mxu0 0.0
        %2212 = vmatmul.mubr.f32.gmra.mxu0 %v2120
        %v2213 = vpop.f32.mrf.mxu0
        %v2214 = vadd.f32 0.0, %v2213
        %v2215 = vpop.f32.mrf.mxu0
        %2216 = vmatprep.mubr.f32.mxu0 0.0
        %2217 = vmatmul.mubr.f32.gmra.mxu0 %v2123
        %v2218 = vpop.f32.mrf.mxu0
        %v2219 = vadd.f32 0.0, %v2218
        %v2220 = vpop.f32.mrf.mxu0
        %2221 = vmatprep.mubr.f32.mxu0 0.0
        %2222 = vmatmul.mubr.f32.gmra.mxu0 %v2126
        %v2223 = vpop.f32.mrf.mxu0
        %v2224 = vadd.f32 0.0, %v2223
        %v2225 = vpop.f32.mrf.mxu0
        %2226 = vmatprep.mubr.f32.mxu0 0.0
        %2227 = vmatmul.mubr.f32.gmra.mxu0 %v2129
        %v2228 = vpop.f32.mrf.mxu0
        %v2229 = vadd.f32 0.0, %v2228
        %v2230 = vpop.f32.mrf.mxu0
        %2231 = vmatprep.mubr.f32.mxu0 0.0
        %2232 = vmatmul.mubr.f32.gmra.mxu0 %v2132
        %v2233 = vpop.f32.mrf.mxu0
        %v2234 = vadd.f32 0.0, %v2233
        %v2235 = vpop.f32.mrf.mxu0
        %2236 = vmatprep.mubr.f32.mxu0 0.0
        %2237 = vmatmul.mubr.f32.gmra.mxu0 %v2135
        %v2238 = vpop.f32.mrf.mxu0
        %v2239 = vadd.f32 0.0, %v2238
        %v2240 = vpop.f32.mrf.mxu0
        %2241 = vdwg.mxu0
        %v2242 = vmul.f32 %v2204, %v1573
        %v2243 = vmul.f32 %v2209, %v1574
        %v2244 = vmul.f32 %v2214, %v1575
        %v2245 = vmul.f32 %v2219, %v1576
        %v2246 = vmul.f32 %v2224, %v1577
        %v2247 = vmul.f32 %v2229, %v1578
        %v2248 = vmul.f32 %v2234, %v1579
        %v2249 = vmul.f32 %v2239, %v1580
        %v2250 = vadd.f32 %v2242, %v2243
        %v2251 = vadd.f32 %v2250, %v2244
        %v2252 = vadd.f32 %v2251, %v2245
        %v2253 = vadd.f32 %v2252, %v2246
        %v2254 = vadd.f32 %v2253, %v2247
        %v2255 = vadd.f32 %v2254, %v2248
        %v2256 = vadd.f32 %v2255, %v2249
        %v2257 = vadd.f32 %v1564, %v2256
        %2258 = vmatprep.subr.mxu0 0.0
        %2259 = vmatpush1.xpose.msra.mxu0 0.0
        %2260 = vmatprep.subr.mxu0 0.0
        %2261 = vmatpush1.xpose.msra.mxu0 0.0
        %2262 = vmatprep.subr.mxu0 0.0
        %2263 = vmatpush1.xpose.msra.mxu0 0.0
        %2264 = vmatprep.subr.mxu0 0.0
        %2265 = vmatpush1.xpose.msra.mxu0 0.0
        %2266 = vmatprep.subr.mxu0 0.0
        %2267 = vmatpush1.xpose.msra.mxu0 0.0
        %2268 = vmatprep.subr.mxu0 0.0
        %2269 = vmatpush1.xpose.msra.mxu0 0.0
        %2270 = vmatprep.subr.mxu0 0.0
        %2271 = vmatpush1.xpose.msra.mxu0 0.0
        %2272 = vmatprep.subr.mxu0 0.0
        %2273 = vmatpush1.xpose.msra.mxu0 0.0
        %2274 = vmatprep.subr.mxu0 0.0
        %2275 = vmatpush1.xpose.msra.mxu0 %v1320
        %2276 = vmatprep.subr.mxu0 0.0
        %2277 = vmatpush1.xpose.msra.mxu0 %v1314
        %2278 = vmatprep.subr.mxu0 0.0
        %2279 = vmatpush1.xpose.msra.mxu0 %v1308
        %2280 = vmatprep.subr.mxu0 0.0
        %2281 = vmatpush1.xpose.msra.mxu0 %v1302
        %2282 = vmatprep.subr.mxu0 0.0
        %2283 = vmatpush1.xpose.msra.mxu0 %v1296
        %2284 = vmatprep.subr.mxu0 0.0
        %2285 = vmatpush1.xpose.msra.mxu0 %v1290
        %2286 = vmatprep.subr.mxu0 0.0
        %2287 = vmatpush1.xpose.msra.mxu0 %v1284
        %2288 = vmatprep.subr.mxu0 0.0
        %2289 = vmatpush1.xpose.msra.mxu0 %v1278
        %2290 = vmatprep.subr.mxu0 0.0
        %2291 = vmatpush2.xpose.msra.mxu0 0.0
        %2292 = vmatprep.subr.mxu0 0.0
        %2293 = vmatpush2.xpose.msra.mxu0 0.0
        %2294 = vmatprep.subr.mxu0 0.0
        %2295 = vmatpush2.xpose.msra.mxu0 0.0
        %2296 = vmatprep.subr.mxu0 0.0
        %2297 = vmatpush2.xpose.msra.mxu0 0.0
        %2298 = vmatprep.subr.mxu0 0.0
        %2299 = vmatpush2.xpose.msra.mxu0 0.0
        %2300 = vmatprep.subr.mxu0 0.0
        %2301 = vmatpush2.xpose.msra.mxu0 0.0
        %2302 = vmatprep.subr.mxu0 0.0
        %2303 = vmatpush2.xpose.msra.mxu0 0.0
        %2304 = vmatprep.subr.mxu0 0.0
        %2305 = vmatpush2.xpose.msra.mxu0 0.0
        %2306 = vmatprep.subr.mxu0 0.0
        %2307 = vmatpush2.xpose.msra.mxu0 0.0
        %2308 = vmatprep.subr.mxu0 0.0
        %2309 = vmatpush2.xpose.msra.mxu0 0.0
        %2310 = vmatprep.subr.mxu0 0.0
        %2311 = vmatpush2.xpose.msra.mxu0 0.0
        %2312 = vmatprep.subr.mxu0 0.0
        %2313 = vmatpush2.xpose.msra.mxu0 0.0
        %2314 = vmatprep.subr.mxu0 0.0
        %2315 = vmatpush2.xpose.msra.mxu0 0.0
        %2316 = vmatprep.subr.mxu0 0.0
        %2317 = vmatpush2.xpose.msra.mxu0 0.0
        %2318 = vmatprep.subr.mxu0 0.0
        %2319 = vmatpush2.xpose.msra.mxu0 0.0
        %2320 = vmatprep.subr.mxu0 0.0
        %2321 = vmatpush2.xpose.msra.mxu0 0.0
        %2322 = vmatprep.mubr.f32.mxu0 0.0
        %2323 = vmatmul.mubr.f32.gmra.mxu0 %v1565
        %v2324 = vpop.f32.mrf.mxu0
        %v2325 = vadd.f32 0.0, %v2324
        %v2326 = vpop.f32.mrf.mxu0
        %2327 = vmatprep.mubr.f32.mxu0 0.0
        %2328 = vmatmul.mubr.f32.gmra.mxu0 %v1566
        %v2329 = vpop.f32.mrf.mxu0
        %v2330 = vadd.f32 0.0, %v2329
        %v2331 = vpop.f32.mrf.mxu0
        %2332 = vmatprep.mubr.f32.mxu0 0.0
        %2333 = vmatmul.mubr.f32.gmra.mxu0 %v1567
        %v2334 = vpop.f32.mrf.mxu0
        %v2335 = vadd.f32 0.0, %v2334
        %v2336 = vpop.f32.mrf.mxu0
        %2337 = vmatprep.mubr.f32.mxu0 0.0
        %2338 = vmatmul.mubr.f32.gmra.mxu0 %v1568
        %v2339 = vpop.f32.mrf.mxu0
        %v2340 = vadd.f32 0.0, %v2339
        %v2341 = vpop.f32.mrf.mxu0
        %2342 = vmatprep.mubr.f32.mxu0 0.0
        %2343 = vmatmul.mubr.f32.gmra.mxu0 %v1569
        %v2344 = vpop.f32.mrf.mxu0
        %v2345 = vadd.f32 0.0, %v2344
        %v2346 = vpop.f32.mrf.mxu0
        %2347 = vmatprep.mubr.f32.mxu0 0.0
        %2348 = vmatmul.mubr.f32.gmra.mxu0 %v1570
        %v2349 = vpop.f32.mrf.mxu0
        %v2350 = vadd.f32 0.0, %v2349
        %v2351 = vpop.f32.mrf.mxu0
        %2352 = vmatprep.mubr.f32.mxu0 0.0
        %2353 = vmatmul.mubr.f32.gmra.mxu0 %v1571
        %v2354 = vpop.f32.mrf.mxu0
        %v2355 = vadd.f32 0.0, %v2354
        %v2356 = vpop.f32.mrf.mxu0
        %2357 = vmatprep.mubr.f32.mxu0 0.0
        %2358 = vmatmul.mubr.f32.gmra.mxu0 %v1572
        %v2359 = vpop.f32.mrf.mxu0
        %v2360 = vadd.f32 0.0, %v2359
        %v2361 = vpop.f32.mrf.mxu0
        %2362 = vdwg.mxu0
        %v2363 = vsel %vm1686, %v2325, -inf
        %2364 = vmax.xlane.f32.xlu0 %v2363
        %v2365 = vpop.xlane.xlu0 %2364
        %v2366 = vsel %vm1686, %v2330, -inf
        %2367 = vmax.xlane.f32.xlu0 %v2366
        %v2368 = vpop.xlane.xlu0 %2367
        %v2369 = vsel %vm1686, %v2335, -inf
        %2370 = vmax.xlane.f32.xlu0 %v2369
        %v2371 = vpop.xlane.xlu0 %2370
        %v2372 = vsel %vm1686, %v2340, -inf
        %2373 = vmax.xlane.f32.xlu0 %v2372
        %v2374 = vpop.xlane.xlu0 %2373
        %v2375 = vsel %vm1686, %v2345, -inf
        %2376 = vmax.xlane.f32.xlu0 %v2375
        %v2377 = vpop.xlane.xlu0 %2376
        %v2378 = vsel %vm1686, %v2350, -inf
        %2379 = vmax.xlane.f32.xlu0 %v2378
        %v2380 = vpop.xlane.xlu0 %2379
        %v2381 = vsel %vm1686, %v2355, -inf
        %2382 = vmax.xlane.f32.xlu0 %v2381
        %v2383 = vpop.xlane.xlu0 %2382
        %v2384 = vsel %vm1686, %v2360, -inf
        %2385 = vmax.xlane.f32.xlu0 %v2384
        %v2386 = vpop.xlane.xlu0 %2385
        %v2387 = vsub.f32 %v2325, %v2365
        %v2388 = vsub.f32 %v2330, %v2368
        %v2389 = vsub.f32 %v2335, %v2371
        %v2390 = vsub.f32 %v2340, %v2374
        %v2391 = vsub.f32 %v2345, %v2377
        %v2392 = vsub.f32 %v2350, %v2380
        %v2393 = vsub.f32 %v2355, %v2383
        %v2394 = vsub.f32 %v2360, %v2386
        %v2395 = vmul.f32 %v2387, 1.442695
        %v2396 = vpow.pop %v2395
        %v2397 = vmul.f32 %v2388, 1.442695
        %v2398 = vpow.pop %v2397
        %v2399 = vmul.f32 %v2389, 1.442695
        %v2400 = vpow.pop %v2399
        %v2401 = vmul.f32 %v2390, 1.442695
        %v2402 = vpow.pop %v2401
        %v2403 = vmul.f32 %v2391, 1.442695
        %v2404 = vpow.pop %v2403
        %v2405 = vmul.f32 %v2392, 1.442695
        %v2406 = vpow.pop %v2405
        %v2407 = vmul.f32 %v2393, 1.442695
        %v2408 = vpow.pop %v2407
        %v2409 = vmul.f32 %v2394, 1.442695
        %v2410 = vpow.pop %v2409
        %v2411 = vsel %vm1686, %v2396, 0.0
        %2412 = vadd.xlane.f32.xlu0 %v2411
        %v2413 = vpop.xlane.xlu0 %2412
        %v2414 = vsel %vm1686, %v2398, 0.0
        %2415 = vadd.xlane.f32.xlu0 %v2414
        %v2416 = vpop.xlane.xlu0 %2415
        %v2417 = vsel %vm1686, %v2400, 0.0
        %2418 = vadd.xlane.f32.xlu0 %v2417
        %v2419 = vpop.xlane.xlu0 %2418
        %v2420 = vsel %vm1686, %v2402, 0.0
        %2421 = vadd.xlane.f32.xlu0 %v2420
        %v2422 = vpop.xlane.xlu0 %2421
        %v2423 = vsel %vm1686, %v2404, 0.0
        %2424 = vadd.xlane.f32.xlu0 %v2423
        %v2425 = vpop.xlane.xlu0 %2424
        %v2426 = vsel %vm1686, %v2406, 0.0
        %2427 = vadd.xlane.f32.xlu0 %v2426
        %v2428 = vpop.xlane.xlu0 %2427
        %v2429 = vsel %vm1686, %v2408, 0.0
        %2430 = vadd.xlane.f32.xlu0 %v2429
        %v2431 = vpop.xlane.xlu0 %2430
        %v2432 = vsel %vm1686, %v2410, 0.0
        %2433 = vadd.xlane.f32.xlu0 %v2432
        %v2434 = vpop.xlane.xlu0 %2433
        %v2435 = vrcp.pop %v2413
        %v2436 = vmul.f32 %v2396, %v2435
        %v2437 = vrcp.pop %v2416
        %v2438 = vmul.f32 %v2398, %v2437
        %v2439 = vrcp.pop %v2419
        %v2440 = vmul.f32 %v2400, %v2439
        %v2441 = vrcp.pop %v2422
        %v2442 = vmul.f32 %v2402, %v2441
        %v2443 = vrcp.pop %v2425
        %v2444 = vmul.f32 %v2404, %v2443
        %v2445 = vrcp.pop %v2428
        %v2446 = vmul.f32 %v2406, %v2445
        %v2447 = vrcp.pop %v2431
        %v2448 = vmul.f32 %v2408, %v2447
        %v2449 = vrcp.pop %v2434
        %v2450 = vmul.f32 %v2410, %v2449
        %v2452 = vsel %vm1686, %v2436, 0
        %v2455 = vsel %vm1686, %v2438, 0
        %v2458 = vsel %vm1686, %v2440, 0
        %v2461 = vsel %vm1686, %v2442, 0
        %v2464 = vsel %vm1686, %v2444, 0
        %v2467 = vsel %vm1686, %v2446, 0
        %v2470 = vsel %vm1686, %v2448, 0
        %v2473 = vsel %vm1686, %v2450, 0
        %2475 = vmatprep.subr.mxu0 0.0
        %2476 = vmatpush1.msra.mxu0 0.0
        %2477 = vmatprep.subr.mxu0 0.0
        %2478 = vmatpush1.msra.mxu0 0.0
        %2479 = vmatprep.subr.mxu0 0.0
        %2480 = vmatpush1.msra.mxu0 0.0
        %2481 = vmatprep.subr.mxu0 0.0
        %2482 = vmatpush1.msra.mxu0 0.0
        %2483 = vmatprep.subr.mxu0 0.0
        %2484 = vmatpush1.msra.mxu0 0.0
        %2485 = vmatprep.subr.mxu0 0.0
        %2486 = vmatpush1.msra.mxu0 0.0
        %2487 = vmatprep.subr.mxu0 0.0
        %2488 = vmatpush1.msra.mxu0 0.0
        %2489 = vmatprep.subr.mxu0 0.0
        %2490 = vmatpush1.msra.mxu0 0.0
        %2491 = vmatprep.subr.mxu0 0.0
        %2492 = vmatpush1.msra.mxu0 %v1322
        %2493 = vmatprep.subr.mxu0 0.0
        %2494 = vmatpush1.msra.mxu0 %v1316
        %2495 = vmatprep.subr.mxu0 0.0
        %2496 = vmatpush1.msra.mxu0 %v1310
        %2497 = vmatprep.subr.mxu0 0.0
        %2498 = vmatpush1.msra.mxu0 %v1304
        %2499 = vmatprep.subr.mxu0 0.0
        %2500 = vmatpush1.msra.mxu0 %v1298
        %2501 = vmatprep.subr.mxu0 0.0
        %2502 = vmatpush1.msra.mxu0 %v1292
        %2503 = vmatprep.subr.mxu0 0.0
        %2504 = vmatpush1.msra.mxu0 %v1286
        %2505 = vmatprep.subr.mxu0 0.0
        %2506 = vmatpush1.msra.mxu0 %v1280
        %2507 = vmatprep.subr.mxu0 0.0
        %2508 = vmatpush2.msra.mxu0 0.0
        %2509 = vmatprep.subr.mxu0 0.0
        %2510 = vmatpush2.msra.mxu0 0.0
        %2511 = vmatprep.subr.mxu0 0.0
        %2512 = vmatpush2.msra.mxu0 0.0
        %2513 = vmatprep.subr.mxu0 0.0
        %2514 = vmatpush2.msra.mxu0 0.0
        %2515 = vmatprep.subr.mxu0 0.0
        %2516 = vmatpush2.msra.mxu0 0.0
        %2517 = vmatprep.subr.mxu0 0.0
        %2518 = vmatpush2.msra.mxu0 0.0
        %2519 = vmatprep.subr.mxu0 0.0
        %2520 = vmatpush2.msra.mxu0 0.0
        %2521 = vmatprep.subr.mxu0 0.0
        %2522 = vmatpush2.msra.mxu0 0.0
        %2523 = vmatprep.subr.mxu0 0.0
        %2524 = vmatpush2.msra.mxu0 0.0
        %2525 = vmatprep.subr.mxu0 0.0
        %2526 = vmatpush2.msra.mxu0 0.0
        %2527 = vmatprep.subr.mxu0 0.0
        %2528 = vmatpush2.msra.mxu0 0.0
        %2529 = vmatprep.subr.mxu0 0.0
        %2530 = vmatpush2.msra.mxu0 0.0
        %2531 = vmatprep.subr.mxu0 0.0
        %2532 = vmatpush2.msra.mxu0 0.0
        %2533 = vmatprep.subr.mxu0 0.0
        %2534 = vmatpush2.msra.mxu0 0.0
        %2535 = vmatprep.subr.mxu0 0.0
        %2536 = vmatpush2.msra.mxu0 0.0
        %2537 = vmatprep.subr.mxu0 0.0
        %2538 = vmatpush2.msra.mxu0 0.0
        %2539 = vmatprep.mubr.f32.mxu0 0.0
        %2540 = vmatmul.mubr.f32.gmra.mxu0 %v2452
        %v2541 = vpop.f32.mrf.mxu0
        %v2542 = vadd.f32 0.0, %v2541
        %v2543 = vpop.f32.mrf.mxu0
        %2544 = vmatprep.mubr.f32.mxu0 0.0
        %2545 = vmatmul.mubr.f32.gmra.mxu0 %v2455
        %v2546 = vpop.f32.mrf.mxu0
        %v2547 = vadd.f32 0.0, %v2546
        %v2548 = vpop.f32.mrf.mxu0
        %2549 = vmatprep.mubr.f32.mxu0 0.0
        %2550 = vmatmul.mubr.f32.gmra.mxu0 %v2458
        %v2551 = vpop.f32.mrf.mxu0
        %v2552 = vadd.f32 0.0, %v2551
        %v2553 = vpop.f32.mrf.mxu0
        %2554 = vmatprep.mubr.f32.mxu0 0.0
        %2555 = vmatmul.mubr.f32.gmra.mxu0 %v2461
        %v2556 = vpop.f32.mrf.mxu0
        %v2557 = vadd.f32 0.0, %v2556
        %v2558 = vpop.f32.mrf.mxu0
        %2559 = vmatprep.mubr.f32.mxu0 0.0
        %2560 = vmatmul.mubr.f32.gmra.mxu0 %v2464
        %v2561 = vpop.f32.mrf.mxu0
        %v2562 = vadd.f32 0.0, %v2561
        %v2563 = vpop.f32.mrf.mxu0
        %2564 = vmatprep.mubr.f32.mxu0 0.0
        %2565 = vmatmul.mubr.f32.gmra.mxu0 %v2467
        %v2566 = vpop.f32.mrf.mxu0
        %v2567 = vadd.f32 0.0, %v2566
        %v2568 = vpop.f32.mrf.mxu0
        %2569 = vmatprep.mubr.f32.mxu0 0.0
        %2570 = vmatmul.mubr.f32.gmra.mxu0 %v2470
        %v2571 = vpop.f32.mrf.mxu0
        %v2572 = vadd.f32 0.0, %v2571
        %v2573 = vpop.f32.mrf.mxu0
        %2574 = vmatprep.mubr.f32.mxu0 0.0
        %2575 = vmatmul.mubr.f32.gmra.mxu0 %v2473
        %v2576 = vpop.f32.mrf.mxu0
        %v2577 = vadd.f32 0.0, %v2576
        %v2578 = vpop.f32.mrf.mxu0
        %2579 = vdwg.mxu0
        %v2580 = vmul.f32 %v2542, %v1573
        %v2581 = vmul.f32 %v2547, %v1574
        %v2582 = vmul.f32 %v2552, %v1575
        %v2583 = vmul.f32 %v2557, %v1576
        %v2584 = vmul.f32 %v2562, %v1577
        %v2585 = vmul.f32 %v2567, %v1578
        %v2586 = vmul.f32 %v2572, %v1579
        %v2587 = vmul.f32 %v2577, %v1580
        %v2588 = vadd.f32 %v2580, %v2581
        %v2589 = vadd.f32 %v2588, %v2582
        %v2590 = vadd.f32 %v2589, %v2583
        %v2591 = vadd.f32 %v2590, %v2584
        %v2592 = vadd.f32 %v2591, %v2585
        %v2593 = vadd.f32 %v2592, %v2586
        %v2594 = vadd.f32 %v2593, %v2587
        %v2595 = vadd.f32 %v1564, %v2594
        %2596 = vmatprep.subr.mxu0 0.0
        %2597 = vmatpush1.xpose.msra.mxu0 0.0
        %2598 = vmatprep.subr.mxu0 0.0
        %2599 = vmatpush1.xpose.msra.mxu0 0.0
        %2600 = vmatprep.subr.mxu0 0.0
        %2601 = vmatpush1.xpose.msra.mxu0 0.0
        %2602 = vmatprep.subr.mxu0 0.0
        %2603 = vmatpush1.xpose.msra.mxu0 0.0
        %2604 = vmatprep.subr.mxu0 0.0
        %2605 = vmatpush1.xpose.msra.mxu0 0.0
        %2606 = vmatprep.subr.mxu0 0.0
        %2607 = vmatpush1.xpose.msra.mxu0 0.0
        %2608 = vmatprep.subr.mxu0 0.0
        %2609 = vmatpush1.xpose.msra.mxu0 0.0
        %2610 = vmatprep.subr.mxu0 0.0
        %2611 = vmatpush1.xpose.msra.mxu0 0.0
        %2612 = vmatprep.subr.mxu0 0.0
        %2613 = vmatpush1.xpose.msra.mxu0 %v1368
        %2614 = vmatprep.subr.mxu0 0.0
        %2615 = vmatpush1.xpose.msra.mxu0 %v1362
        %2616 = vmatprep.subr.mxu0 0.0
        %2617 = vmatpush1.xpose.msra.mxu0 %v1356
        %2618 = vmatprep.subr.mxu0 0.0
        %2619 = vmatpush1.xpose.msra.mxu0 %v1350
        %2620 = vmatprep.subr.mxu0 0.0
        %2621 = vmatpush1.xpose.msra.mxu0 %v1344
        %2622 = vmatprep.subr.mxu0 0.0
        %2623 = vmatpush1.xpose.msra.mxu0 %v1338
        %2624 = vmatprep.subr.mxu0 0.0
        %2625 = vmatpush1.xpose.msra.mxu0 %v1332
        %2626 = vmatprep.subr.mxu0 0.0
        %2627 = vmatpush1.xpose.msra.mxu0 %v1326
        %2628 = vmatprep.subr.mxu0 0.0
        %2629 = vmatpush2.xpose.msra.mxu0 0.0
        %2630 = vmatprep.subr.mxu0 0.0
        %2631 = vmatpush2.xpose.msra.mxu0 0.0
        %2632 = vmatprep.subr.mxu0 0.0
        %2633 = vmatpush2.xpose.msra.mxu0 0.0
        %2634 = vmatprep.subr.mxu0 0.0
        %2635 = vmatpush2.xpose.msra.mxu0 0.0
        %2636 = vmatprep.subr.mxu0 0.0
        %2637 = vmatpush2.xpose.msra.mxu0 0.0
        %2638 = vmatprep.subr.mxu0 0.0
        %2639 = vmatpush2.xpose.msra.mxu0 0.0
        %2640 = vmatprep.subr.mxu0 0.0
        %2641 = vmatpush2.xpose.msra.mxu0 0.0
        %2642 = vmatprep.subr.mxu0 0.0
        %2643 = vmatpush2.xpose.msra.mxu0 0.0
        %2644 = vmatprep.subr.mxu0 0.0
        %2645 = vmatpush2.xpose.msra.mxu0 0.0
        %2646 = vmatprep.subr.mxu0 0.0
        %2647 = vmatpush2.xpose.msra.mxu0 0.0
        %2648 = vmatprep.subr.mxu0 0.0
        %2649 = vmatpush2.xpose.msra.mxu0 0.0
        %2650 = vmatprep.subr.mxu0 0.0
        %2651 = vmatpush2.xpose.msra.mxu0 0.0
        %2652 = vmatprep.subr.mxu0 0.0
        %2653 = vmatpush2.xpose.msra.mxu0 0.0
        %2654 = vmatprep.subr.mxu0 0.0
        %2655 = vmatpush2.xpose.msra.mxu0 0.0
        %2656 = vmatprep.subr.mxu0 0.0
        %2657 = vmatpush2.xpose.msra.mxu0 0.0
        %2658 = vmatprep.subr.mxu0 0.0
        %2659 = vmatpush2.xpose.msra.mxu0 0.0
        %2660 = vmatprep.mubr.f32.mxu0 0.0
        %2661 = vmatmul.mubr.f32.gmra.mxu0 %v1565
        %v2662 = vpop.f32.mrf.mxu0
        %v2663 = vadd.f32 0.0, %v2662
        %v2664 = vpop.f32.mrf.mxu0
        %2665 = vmatprep.mubr.f32.mxu0 0.0
        %2666 = vmatmul.mubr.f32.gmra.mxu0 %v1566
        %v2667 = vpop.f32.mrf.mxu0
        %v2668 = vadd.f32 0.0, %v2667
        %v2669 = vpop.f32.mrf.mxu0
        %2670 = vmatprep.mubr.f32.mxu0 0.0
        %2671 = vmatmul.mubr.f32.gmra.mxu0 %v1567
        %v2672 = vpop.f32.mrf.mxu0
        %v2673 = vadd.f32 0.0, %v2672
        %v2674 = vpop.f32.mrf.mxu0
        %2675 = vmatprep.mubr.f32.mxu0 0.0
        %2676 = vmatmul.mubr.f32.gmra.mxu0 %v1568
        %v2677 = vpop.f32.mrf.mxu0
        %v2678 = vadd.f32 0.0, %v2677
        %v2679 = vpop.f32.mrf.mxu0
        %2680 = vmatprep.mubr.f32.mxu0 0.0
        %2681 = vmatmul.mubr.f32.gmra.mxu0 %v1569
        %v2682 = vpop.f32.mrf.mxu0
        %v2683 = vadd.f32 0.0, %v2682
        %v2684 = vpop.f32.mrf.mxu0
        %2685 = vmatprep.mubr.f32.mxu0 0.0
        %2686 = vmatmul.mubr.f32.gmra.mxu0 %v1570
        %v2687 = vpop.f32.mrf.mxu0
        %v2688 = vadd.f32 0.0, %v2687
        %v2689 = vpop.f32.mrf.mxu0
        %2690 = vmatprep.mubr.f32.mxu0 0.0
        %2691 = vmatmul.mubr.f32.gmra.mxu0 %v1571
        %v2692 = vpop.f32.mrf.mxu0
        %v2693 = vadd.f32 0.0, %v2692
        %v2694 = vpop.f32.mrf.mxu0
        %2695 = vmatprep.mubr.f32.mxu0 0.0
        %2696 = vmatmul.mubr.f32.gmra.mxu0 %v1572
        %v2697 = vpop.f32.mrf.mxu0
        %v2698 = vadd.f32 0.0, %v2697
        %v2699 = vpop.f32.mrf.mxu0
        %2700 = vdwg.mxu0
        %v2701 = vsel %vm1686, %v2663, -inf
        %2702 = vmax.xlane.f32.xlu0 %v2701
        %v2703 = vpop.xlane.xlu0 %2702
        %v2704 = vsel %vm1686, %v2668, -inf
        %2705 = vmax.xlane.f32.xlu0 %v2704
        %v2706 = vpop.xlane.xlu0 %2705
        %v2707 = vsel %vm1686, %v2673, -inf
        %2708 = vmax.xlane.f32.xlu0 %v2707
        %v2709 = vpop.xlane.xlu0 %2708
        %v2710 = vsel %vm1686, %v2678, -inf
        %2711 = vmax.xlane.f32.xlu0 %v2710
        %v2712 = vpop.xlane.xlu0 %2711
        %v2713 = vsel %vm1686, %v2683, -inf
        %2714 = vmax.xlane.f32.xlu0 %v2713
        %v2715 = vpop.xlane.xlu0 %2714
        %v2716 = vsel %vm1686, %v2688, -inf
        %2717 = vmax.xlane.f32.xlu0 %v2716
        %v2718 = vpop.xlane.xlu0 %2717
        %v2719 = vsel %vm1686, %v2693, -inf
        %2720 = vmax.xlane.f32.xlu0 %v2719
        %v2721 = vpop.xlane.xlu0 %2720
        %v2722 = vsel %vm1686, %v2698, -inf
        %2723 = vmax.xlane.f32.xlu0 %v2722
        %v2724 = vpop.xlane.xlu0 %2723
        %v2725 = vsub.f32 %v2663, %v2703
        %v2726 = vsub.f32 %v2668, %v2706
        %v2727 = vsub.f32 %v2673, %v2709
        %v2728 = vsub.f32 %v2678, %v2712
        %v2729 = vsub.f32 %v2683, %v2715
        %v2730 = vsub.f32 %v2688, %v2718
        %v2731 = vsub.f32 %v2693, %v2721
        %v2732 = vsub.f32 %v2698, %v2724
        %v2733 = vmul.f32 %v2725, 1.442695
        %v2734 = vpow.pop %v2733
        %v2735 = vmul.f32 %v2726, 1.442695
        %v2736 = vpow.pop %v2735
        %v2737 = vmul.f32 %v2727, 1.442695
        %v2738 = vpow.pop %v2737
        %v2739 = vmul.f32 %v2728, 1.442695
        %v2740 = vpow.pop %v2739
        %v2741 = vmul.f32 %v2729, 1.442695
        %v2742 = vpow.pop %v2741
        %v2743 = vmul.f32 %v2730, 1.442695
        %v2744 = vpow.pop %v2743
        %v2745 = vmul.f32 %v2731, 1.442695
        %v2746 = vpow.pop %v2745
        %v2747 = vmul.f32 %v2732, 1.442695
        %v2748 = vpow.pop %v2747
        %v2749 = vsel %vm1686, %v2734, 0.0
        %2750 = vadd.xlane.f32.xlu0 %v2749
        %v2751 = vpop.xlane.xlu0 %2750
        %v2752 = vsel %vm1686, %v2736, 0.0
        %2753 = vadd.xlane.f32.xlu0 %v2752
        %v2754 = vpop.xlane.xlu0 %2753
        %v2755 = vsel %vm1686, %v2738, 0.0
        %2756 = vadd.xlane.f32.xlu0 %v2755
        %v2757 = vpop.xlane.xlu0 %2756
        %v2758 = vsel %vm1686, %v2740, 0.0
        %2759 = vadd.xlane.f32.xlu0 %v2758
        %v2760 = vpop.xlane.xlu0 %2759
        %v2761 = vsel %vm1686, %v2742, 0.0
        %2762 = vadd.xlane.f32.xlu0 %v2761
        %v2763 = vpop.xlane.xlu0 %2762
        %v2764 = vsel %vm1686, %v2744, 0.0
        %2765 = vadd.xlane.f32.xlu0 %v2764
        %v2766 = vpop.xlane.xlu0 %2765
        %v2767 = vsel %vm1686, %v2746, 0.0
        %2768 = vadd.xlane.f32.xlu0 %v2767
        %v2769 = vpop.xlane.xlu0 %2768
        %v2770 = vsel %vm1686, %v2748, 0.0
        %2771 = vadd.xlane.f32.xlu0 %v2770
        %v2772 = vpop.xlane.xlu0 %2771
        %v2773 = vrcp.pop %v2751
        %v2774 = vmul.f32 %v2734, %v2773
        %v2775 = vrcp.pop %v2754
        %v2776 = vmul.f32 %v2736, %v2775
        %v2777 = vrcp.pop %v2757
        %v2778 = vmul.f32 %v2738, %v2777
        %v2779 = vrcp.pop %v2760
        %v2780 = vmul.f32 %v2740, %v2779
        %v2781 = vrcp.pop %v2763
        %v2782 = vmul.f32 %v2742, %v2781
        %v2783 = vrcp.pop %v2766
        %v2784 = vmul.f32 %v2744, %v2783
        %v2785 = vrcp.pop %v2769
        %v2786 = vmul.f32 %v2746, %v2785
        %v2787 = vrcp.pop %v2772
        %v2788 = vmul.f32 %v2748, %v2787
        %v2790 = vsel %vm1686, %v2774, 0
        %v2793 = vsel %vm1686, %v2776, 0
        %v2796 = vsel %vm1686, %v2778, 0
        %v2799 = vsel %vm1686, %v2780, 0
        %v2802 = vsel %vm1686, %v2782, 0
        %v2805 = vsel %vm1686, %v2784, 0
        %v2808 = vsel %vm1686, %v2786, 0
        %v2811 = vsel %vm1686, %v2788, 0
        %2813 = vmatprep.subr.mxu0 0.0
        %2814 = vmatpush1.msra.mxu0 0.0
        %2815 = vmatprep.subr.mxu0 0.0
        %2816 = vmatpush1.msra.mxu0 0.0
        %2817 = vmatprep.subr.mxu0 0.0
        %2818 = vmatpush1.msra.mxu0 0.0
        %2819 = vmatprep.subr.mxu0 0.0
        %2820 = vmatpush1.msra.mxu0 0.0
        %2821 = vmatprep.subr.mxu0 0.0
        %2822 = vmatpush1.msra.mxu0 0.0
        %2823 = vmatprep.subr.mxu0 0.0
        %2824 = vmatpush1.msra.mxu0 0.0
        %2825 = vmatprep.subr.mxu0 0.0
        %2826 = vmatpush1.msra.mxu0 0.0
        %2827 = vmatprep.subr.mxu0 0.0
        %2828 = vmatpush1.msra.mxu0 0.0
        %2829 = vmatprep.subr.mxu0 0.0
        %2830 = vmatpush1.msra.mxu0 %v1370
        %2831 = vmatprep.subr.mxu0 0.0
        %2832 = vmatpush1.msra.mxu0 %v1364
        %2833 = vmatprep.subr.mxu0 0.0
        %2834 = vmatpush1.msra.mxu0 %v1358
        %2835 = vmatprep.subr.mxu0 0.0
        %2836 = vmatpush1.msra.mxu0 %v1352
        %2837 = vmatprep.subr.mxu0 0.0
        %2838 = vmatpush1.msra.mxu0 %v1346
        %2839 = vmatprep.subr.mxu0 0.0
        %2840 = vmatpush1.msra.mxu0 %v1340
        %2841 = vmatprep.subr.mxu0 0.0
        %2842 = vmatpush1.msra.mxu0 %v1334
        %2843 = vmatprep.subr.mxu0 0.0
        %2844 = vmatpush1.msra.mxu0 %v1328
        %2845 = vmatprep.subr.mxu0 0.0
        %2846 = vmatpush2.msra.mxu0 0.0
        %2847 = vmatprep.subr.mxu0 0.0
        %2848 = vmatpush2.msra.mxu0 0.0
        %2849 = vmatprep.subr.mxu0 0.0
        %2850 = vmatpush2.msra.mxu0 0.0
        %2851 = vmatprep.subr.mxu0 0.0
        %2852 = vmatpush2.msra.mxu0 0.0
        %2853 = vmatprep.subr.mxu0 0.0
        %2854 = vmatpush2.msra.mxu0 0.0
        %2855 = vmatprep.subr.mxu0 0.0
        %2856 = vmatpush2.msra.mxu0 0.0
        %2857 = vmatprep.subr.mxu0 0.0
        %2858 = vmatpush2.msra.mxu0 0.0
        %2859 = vmatprep.subr.mxu0 0.0
        %2860 = vmatpush2.msra.mxu0 0.0
        %2861 = vmatprep.subr.mxu0 0.0
        %2862 = vmatpush2.msra.mxu0 0.0
        %2863 = vmatprep.subr.mxu0 0.0
        %2864 = vmatpush2.msra.mxu0 0.0
        %2865 = vmatprep.subr.mxu0 0.0
        %2866 = vmatpush2.msra.mxu0 0.0
        %2867 = vmatprep.subr.mxu0 0.0
        %2868 = vmatpush2.msra.mxu0 0.0
        %2869 = vmatprep.subr.mxu0 0.0
        %2870 = vmatpush2.msra.mxu0 0.0
        %2871 = vmatprep.subr.mxu0 0.0
        %2872 = vmatpush2.msra.mxu0 0.0
        %2873 = vmatprep.subr.mxu0 0.0
        %2874 = vmatpush2.msra.mxu0 0.0
        %2875 = vmatprep.subr.mxu0 0.0
        %2876 = vmatpush2.msra.mxu0 0.0
        %2877 = vmatprep.mubr.f32.mxu0 0.0
        %2878 = vmatmul.mubr.f32.gmra.mxu0 %v2790
        %v2879 = vpop.f32.mrf.mxu0
        %v2880 = vadd.f32 0.0, %v2879
        %v2881 = vpop.f32.mrf.mxu0
        %2882 = vmatprep.mubr.f32.mxu0 0.0
        %2883 = vmatmul.mubr.f32.gmra.mxu0 %v2793
        %v2884 = vpop.f32.mrf.mxu0
        %v2885 = vadd.f32 0.0, %v2884
        %v2886 = vpop.f32.mrf.mxu0
        %2887 = vmatprep.mubr.f32.mxu0 0.0
        %2888 = vmatmul.mubr.f32.gmra.mxu0 %v2796
        %v2889 = vpop.f32.mrf.mxu0
        %v2890 = vadd.f32 0.0, %v2889
        %v2891 = vpop.f32.mrf.mxu0
        %2892 = vmatprep.mubr.f32.mxu0 0.0
        %2893 = vmatmul.mubr.f32.gmra.mxu0 %v2799
        %v2894 = vpop.f32.mrf.mxu0
        %v2895 = vadd.f32 0.0, %v2894
        %v2896 = vpop.f32.mrf.mxu0
        %2897 = vmatprep.mubr.f32.mxu0 0.0
        %2898 = vmatmul.mubr.f32.gmra.mxu0 %v2802
        %v2899 = vpop.f32.mrf.mxu0
        %v2900 = vadd.f32 0.0, %v2899
        %v2901 = vpop.f32.mrf.mxu0
        %2902 = vmatprep.mubr.f32.mxu0 0.0
        %2903 = vmatmul.mubr.f32.gmra.mxu0 %v2805
        %v2904 = vpop.f32.mrf.mxu0
        %v2905 = vadd.f32 0.0, %v2904
        %v2906 = vpop.f32.mrf.mxu0
        %2907 = vmatprep.mubr.f32.mxu0 0.0
        %2908 = vmatmul.mubr.f32.gmra.mxu0 %v2808
        %v2909 = vpop.f32.mrf.mxu0
        %v2910 = vadd.f32 0.0, %v2909
        %v2911 = vpop.f32.mrf.mxu0
        %2912 = vmatprep.mubr.f32.mxu0 0.0
        %2913 = vmatmul.mubr.f32.gmra.mxu0 %v2811
        %v2914 = vpop.f32.mrf.mxu0
        %v2915 = vadd.f32 0.0, %v2914
        %v2916 = vpop.f32.mrf.mxu0
        %2917 = vdwg.mxu0
        %v2918 = vmul.f32 %v2880, %v1573
        %v2919 = vmul.f32 %v2885, %v1574
        %v2920 = vmul.f32 %v2890, %v1575
        %v2921 = vmul.f32 %v2895, %v1576
        %v2922 = vmul.f32 %v2900, %v1577
        %v2923 = vmul.f32 %v2905, %v1578
        %v2924 = vmul.f32 %v2910, %v1579
        %v2925 = vmul.f32 %v2915, %v1580
        %v2926 = vadd.f32 %v2918, %v2919
        %v2927 = vadd.f32 %v2926, %v2920
        %v2928 = vadd.f32 %v2927, %v2921
        %v2929 = vadd.f32 %v2928, %v2922
        %v2930 = vadd.f32 %v2929, %v2923
        %v2931 = vadd.f32 %v2930, %v2924
        %v2932 = vadd.f32 %v2931, %v2925
        %v2933 = vadd.f32 %v1564, %v2932
        %2934 = vmatprep.subr.mxu0 0.0
        %2935 = vmatpush1.xpose.msra.mxu0 0.0
        %2936 = vmatprep.subr.mxu0 0.0
        %2937 = vmatpush1.xpose.msra.mxu0 0.0
        %2938 = vmatprep.subr.mxu0 0.0
        %2939 = vmatpush1.xpose.msra.mxu0 0.0
        %2940 = vmatprep.subr.mxu0 0.0
        %2941 = vmatpush1.xpose.msra.mxu0 0.0
        %2942 = vmatprep.subr.mxu0 0.0
        %2943 = vmatpush1.xpose.msra.mxu0 0.0
        %2944 = vmatprep.subr.mxu0 0.0
        %2945 = vmatpush1.xpose.msra.mxu0 0.0
        %2946 = vmatprep.subr.mxu0 0.0
        %2947 = vmatpush1.xpose.msra.mxu0 0.0
        %2948 = vmatprep.subr.mxu0 0.0
        %2949 = vmatpush1.xpose.msra.mxu0 0.0
        %2950 = vmatprep.subr.mxu0 0.0
        %2951 = vmatpush1.xpose.msra.mxu0 %v1416
        %2952 = vmatprep.subr.mxu0 0.0
        %2953 = vmatpush1.xpose.msra.mxu0 %v1410
        %2954 = vmatprep.subr.mxu0 0.0
        %2955 = vmatpush1.xpose.msra.mxu0 %v1404
        %2956 = vmatprep.subr.mxu0 0.0
        %2957 = vmatpush1.xpose.msra.mxu0 %v1398
        %2958 = vmatprep.subr.mxu0 0.0
        %2959 = vmatpush1.xpose.msra.mxu0 %v1392
        %2960 = vmatprep.subr.mxu0 0.0
        %2961 = vmatpush1.xpose.msra.mxu0 %v1386
        %2962 = vmatprep.subr.mxu0 0.0
        %2963 = vmatpush1.xpose.msra.mxu0 %v1380
        %2964 = vmatprep.subr.mxu0 0.0
        %2965 = vmatpush1.xpose.msra.mxu0 %v1374
        %2966 = vmatprep.subr.mxu0 0.0
        %2967 = vmatpush2.xpose.msra.mxu0 0.0
        %2968 = vmatprep.subr.mxu0 0.0
        %2969 = vmatpush2.xpose.msra.mxu0 0.0
        %2970 = vmatprep.subr.mxu0 0.0
        %2971 = vmatpush2.xpose.msra.mxu0 0.0
        %2972 = vmatprep.subr.mxu0 0.0
        %2973 = vmatpush2.xpose.msra.mxu0 0.0
        %2974 = vmatprep.subr.mxu0 0.0
        %2975 = vmatpush2.xpose.msra.mxu0 0.0
        %2976 = vmatprep.subr.mxu0 0.0
        %2977 = vmatpush2.xpose.msra.mxu0 0.0
        %2978 = vmatprep.subr.mxu0 0.0
        %2979 = vmatpush2.xpose.msra.mxu0 0.0
        %2980 = vmatprep.subr.mxu0 0.0
        %2981 = vmatpush2.xpose.msra.mxu0 0.0
        %2982 = vmatprep.subr.mxu0 0.0
        %2983 = vmatpush2.xpose.msra.mxu0 0.0
        %2984 = vmatprep.subr.mxu0 0.0
        %2985 = vmatpush2.xpose.msra.mxu0 0.0
        %2986 = vmatprep.subr.mxu0 0.0
        %2987 = vmatpush2.xpose.msra.mxu0 0.0
        %2988 = vmatprep.subr.mxu0 0.0
        %2989 = vmatpush2.xpose.msra.mxu0 0.0
        %2990 = vmatprep.subr.mxu0 0.0
        %2991 = vmatpush2.xpose.msra.mxu0 0.0
        %2992 = vmatprep.subr.mxu0 0.0
        %2993 = vmatpush2.xpose.msra.mxu0 0.0
        %2994 = vmatprep.subr.mxu0 0.0
        %2995 = vmatpush2.xpose.msra.mxu0 0.0
        %2996 = vmatprep.subr.mxu0 0.0
        %2997 = vmatpush2.xpose.msra.mxu0 0.0
        %2998 = vmatprep.mubr.f32.mxu0 0.0
        %2999 = vmatmul.mubr.f32.gmra.mxu0 %v1565
        %v3000 = vpop.f32.mrf.mxu0
        %v3001 = vadd.f32 0.0, %v3000
        %v3002 = vpop.f32.mrf.mxu0
        %3003 = vmatprep.mubr.f32.mxu0 0.0
        %3004 = vmatmul.mubr.f32.gmra.mxu0 %v1566
        %v3005 = vpop.f32.mrf.mxu0
        %v3006 = vadd.f32 0.0, %v3005
        %v3007 = vpop.f32.mrf.mxu0
        %3008 = vmatprep.mubr.f32.mxu0 0.0
        %3009 = vmatmul.mubr.f32.gmra.mxu0 %v1567
        %v3010 = vpop.f32.mrf.mxu0
        %v3011 = vadd.f32 0.0, %v3010
        %v3012 = vpop.f32.mrf.mxu0
        %3013 = vmatprep.mubr.f32.mxu0 0.0
        %3014 = vmatmul.mubr.f32.gmra.mxu0 %v1568
        %v3015 = vpop.f32.mrf.mxu0
        %v3016 = vadd.f32 0.0, %v3015
        %v3017 = vpop.f32.mrf.mxu0
        %3018 = vmatprep.mubr.f32.mxu0 0.0
        %3019 = vmatmul.mubr.f32.gmra.mxu0 %v1569
        %v3020 = vpop.f32.mrf.mxu0
        %v3021 = vadd.f32 0.0, %v3020
        %v3022 = vpop.f32.mrf.mxu0
        %3023 = vmatprep.mubr.f32.mxu0 0.0
        %3024 = vmatmul.mubr.f32.gmra.mxu0 %v1570
        %v3025 = vpop.f32.mrf.mxu0
        %v3026 = vadd.f32 0.0, %v3025
        %v3027 = vpop.f32.mrf.mxu0
        %3028 = vmatprep.mubr.f32.mxu0 0.0
        %3029 = vmatmul.mubr.f32.gmra.mxu0 %v1571
        %v3030 = vpop.f32.mrf.mxu0
        %v3031 = vadd.f32 0.0, %v3030
        %v3032 = vpop.f32.mrf.mxu0
        %3033 = vmatprep.mubr.f32.mxu0 0.0
        %3034 = vmatmul.mubr.f32.gmra.mxu0 %v1572
        %v3035 = vpop.f32.mrf.mxu0
        %v3036 = vadd.f32 0.0, %v3035
        %v3037 = vpop.f32.mrf.mxu0
        %3038 = vdwg.mxu0
        %v3039 = vsel %vm1686, %v3001, -inf
        %3040 = vmax.xlane.f32.xlu0 %v3039
        %v3041 = vpop.xlane.xlu0 %3040
        %v3042 = vsel %vm1686, %v3006, -inf
        %3043 = vmax.xlane.f32.xlu0 %v3042
        %v3044 = vpop.xlane.xlu0 %3043
        %v3045 = vsel %vm1686, %v3011, -inf
        %3046 = vmax.xlane.f32.xlu0 %v3045
        %v3047 = vpop.xlane.xlu0 %3046
        %v3048 = vsel %vm1686, %v3016, -inf
        %3049 = vmax.xlane.f32.xlu0 %v3048
        %v3050 = vpop.xlane.xlu0 %3049
        %v3051 = vsel %vm1686, %v3021, -inf
        %3052 = vmax.xlane.f32.xlu0 %v3051
        %v3053 = vpop.xlane.xlu0 %3052
        %v3054 = vsel %vm1686, %v3026, -inf
        %3055 = vmax.xlane.f32.xlu0 %v3054
        %v3056 = vpop.xlane.xlu0 %3055
        %v3057 = vsel %vm1686, %v3031, -inf
        %3058 = vmax.xlane.f32.xlu0 %v3057
        %v3059 = vpop.xlane.xlu0 %3058
        %v3060 = vsel %vm1686, %v3036, -inf
        %3061 = vmax.xlane.f32.xlu0 %v3060
        %v3062 = vpop.xlane.xlu0 %3061
        %v3063 = vsub.f32 %v3001, %v3041
        %v3064 = vsub.f32 %v3006, %v3044
        %v3065 = vsub.f32 %v3011, %v3047
        %v3066 = vsub.f32 %v3016, %v3050
        %v3067 = vsub.f32 %v3021, %v3053
        %v3068 = vsub.f32 %v3026, %v3056
        %v3069 = vsub.f32 %v3031, %v3059
        %v3070 = vsub.f32 %v3036, %v3062
        %v3071 = vmul.f32 %v3063, 1.442695
        %v3072 = vpow.pop %v3071
        %v3073 = vmul.f32 %v3064, 1.442695
        %v3074 = vpow.pop %v3073
        %v3075 = vmul.f32 %v3065, 1.442695
        %v3076 = vpow.pop %v3075
        %v3077 = vmul.f32 %v3066, 1.442695
        %v3078 = vpow.pop %v3077
        %v3079 = vmul.f32 %v3067, 1.442695
        %v3080 = vpow.pop %v3079
        %v3081 = vmul.f32 %v3068, 1.442695
        %v3082 = vpow.pop %v3081
        %v3083 = vmul.f32 %v3069, 1.442695
        %v3084 = vpow.pop %v3083
        %v3085 = vmul.f32 %v3070, 1.442695
        %v3086 = vpow.pop %v3085
        %v3087 = vsel %vm1686, %v3072, 0.0
        %3088 = vadd.xlane.f32.xlu0 %v3087
        %v3089 = vpop.xlane.xlu0 %3088
        %v3090 = vsel %vm1686, %v3074, 0.0
        %3091 = vadd.xlane.f32.xlu0 %v3090
        %v3092 = vpop.xlane.xlu0 %3091
        %v3093 = vsel %vm1686, %v3076, 0.0
        %3094 = vadd.xlane.f32.xlu0 %v3093
        %v3095 = vpop.xlane.xlu0 %3094
        %v3096 = vsel %vm1686, %v3078, 0.0
        %3097 = vadd.xlane.f32.xlu0 %v3096
        %v3098 = vpop.xlane.xlu0 %3097
        %v3099 = vsel %vm1686, %v3080, 0.0
        %3100 = vadd.xlane.f32.xlu0 %v3099
        %v3101 = vpop.xlane.xlu0 %3100
        %v3102 = vsel %vm1686, %v3082, 0.0
        %3103 = vadd.xlane.f32.xlu0 %v3102
        %v3104 = vpop.xlane.xlu0 %3103
        %v3105 = vsel %vm1686, %v3084, 0.0
        %3106 = vadd.xlane.f32.xlu0 %v3105
        %v3107 = vpop.xlane.xlu0 %3106
        %v3108 = vsel %vm1686, %v3086, 0.0
        %3109 = vadd.xlane.f32.xlu0 %v3108
        %v3110 = vpop.xlane.xlu0 %3109
        %v3111 = vrcp.pop %v3089
        %v3112 = vmul.f32 %v3072, %v3111
        %v3113 = vrcp.pop %v3092
        %v3114 = vmul.f32 %v3074, %v3113
        %v3115 = vrcp.pop %v3095
        %v3116 = vmul.f32 %v3076, %v3115
        %v3117 = vrcp.pop %v3098
        %v3118 = vmul.f32 %v3078, %v3117
        %v3119 = vrcp.pop %v3101
        %v3120 = vmul.f32 %v3080, %v3119
        %v3121 = vrcp.pop %v3104
        %v3122 = vmul.f32 %v3082, %v3121
        %v3123 = vrcp.pop %v3107
        %v3124 = vmul.f32 %v3084, %v3123
        %v3125 = vrcp.pop %v3110
        %v3126 = vmul.f32 %v3086, %v3125
        %v3128 = vsel %vm1686, %v3112, 0
        %v3131 = vsel %vm1686, %v3114, 0
        %v3134 = vsel %vm1686, %v3116, 0
        %v3137 = vsel %vm1686, %v3118, 0
        %v3140 = vsel %vm1686, %v3120, 0
        %v3143 = vsel %vm1686, %v3122, 0
        %v3146 = vsel %vm1686, %v3124, 0
        %v3149 = vsel %vm1686, %v3126, 0
        %3151 = vmatprep.subr.mxu0 0.0
        %3152 = vmatpush1.msra.mxu0 0.0
        %3153 = vmatprep.subr.mxu0 0.0
        %3154 = vmatpush1.msra.mxu0 0.0
        %3155 = vmatprep.subr.mxu0 0.0
        %3156 = vmatpush1.msra.mxu0 0.0
        %3157 = vmatprep.subr.mxu0 0.0
        %3158 = vmatpush1.msra.mxu0 0.0
        %3159 = vmatprep.subr.mxu0 0.0
        %3160 = vmatpush1.msra.mxu0 0.0
        %3161 = vmatprep.subr.mxu0 0.0
        %3162 = vmatpush1.msra.mxu0 0.0
        %3163 = vmatprep.subr.mxu0 0.0
        %3164 = vmatpush1.msra.mxu0 0.0
        %3165 = vmatprep.subr.mxu0 0.0
        %3166 = vmatpush1.msra.mxu0 0.0
        %3167 = vmatprep.subr.mxu0 0.0
        %3168 = vmatpush1.msra.mxu0 %v1418
        %3169 = vmatprep.subr.mxu0 0.0
        %3170 = vmatpush1.msra.mxu0 %v1412
        %3171 = vmatprep.subr.mxu0 0.0
        %3172 = vmatpush1.msra.mxu0 %v1406
        %3173 = vmatprep.subr.mxu0 0.0
        %3174 = vmatpush1.msra.mxu0 %v1400
        %3175 = vmatprep.subr.mxu0 0.0
        %3176 = vmatpush1.msra.mxu0 %v1394
        %3177 = vmatprep.subr.mxu0 0.0
        %3178 = vmatpush1.msra.mxu0 %v1388
        %3179 = vmatprep.subr.mxu0 0.0
        %3180 = vmatpush1.msra.mxu0 %v1382
        %3181 = vmatprep.subr.mxu0 0.0
        %3182 = vmatpush1.msra.mxu0 %v1376
        %3183 = vmatprep.subr.mxu0 0.0
        %3184 = vmatpush2.msra.mxu0 0.0
        %3185 = vmatprep.subr.mxu0 0.0
        %3186 = vmatpush2.msra.mxu0 0.0
        %3187 = vmatprep.subr.mxu0 0.0
        %3188 = vmatpush2.msra.mxu0 0.0
        %3189 = vmatprep.subr.mxu0 0.0
        %3190 = vmatpush2.msra.mxu0 0.0
        %3191 = vmatprep.subr.mxu0 0.0
        %3192 = vmatpush2.msra.mxu0 0.0
        %3193 = vmatprep.subr.mxu0 0.0
        %3194 = vmatpush2.msra.mxu0 0.0
        %3195 = vmatprep.subr.mxu0 0.0
        %3196 = vmatpush2.msra.mxu0 0.0
        %3197 = vmatprep.subr.mxu0 0.0
        %3198 = vmatpush2.msra.mxu0 0.0
        %3199 = vmatprep.subr.mxu0 0.0
        %3200 = vmatpush2.msra.mxu0 0.0
        %3201 = vmatprep.subr.mxu0 0.0
        %3202 = vmatpush2.msra.mxu0 0.0
        %3203 = vmatprep.subr.mxu0 0.0
        %3204 = vmatpush2.msra.mxu0 0.0
        %3205 = vmatprep.subr.mxu0 0.0
        %3206 = vmatpush2.msra.mxu0 0.0
        %3207 = vmatprep.subr.mxu0 0.0
        %3208 = vmatpush2.msra.mxu0 0.0
        %3209 = vmatprep.subr.mxu0 0.0
        %3210 = vmatpush2.msra.mxu0 0.0
        %3211 = vmatprep.subr.mxu0 0.0
        %3212 = vmatpush2.msra.mxu0 0.0
        %3213 = vmatprep.subr.mxu0 0.0
        %3214 = vmatpush2.msra.mxu0 0.0
        %3215 = vmatprep.mubr.f32.mxu0 0.0
        %3216 = vmatmul.mubr.f32.gmra.mxu0 %v3128
        %v3217 = vpop.f32.mrf.mxu0
        %v3218 = vadd.f32 0.0, %v3217
        %v3219 = vpop.f32.mrf.mxu0
        %3220 = vmatprep.mubr.f32.mxu0 0.0
        %3221 = vmatmul.mubr.f32.gmra.mxu0 %v3131
        %v3222 = vpop.f32.mrf.mxu0
        %v3223 = vadd.f32 0.0, %v3222
        %v3224 = vpop.f32.mrf.mxu0
        %3225 = vmatprep.mubr.f32.mxu0 0.0
        %3226 = vmatmul.mubr.f32.gmra.mxu0 %v3134
        %v3227 = vpop.f32.mrf.mxu0
        %v3228 = vadd.f32 0.0, %v3227
        %v3229 = vpop.f32.mrf.mxu0
        %3230 = vmatprep.mubr.f32.mxu0 0.0
        %3231 = vmatmul.mubr.f32.gmra.mxu0 %v3137
        %v3232 = vpop.f32.mrf.mxu0
        %v3233 = vadd.f32 0.0, %v3232
        %v3234 = vpop.f32.mrf.mxu0
        %3235 = vmatprep.mubr.f32.mxu0 0.0
        %3236 = vmatmul.mubr.f32.gmra.mxu0 %v3140
        %v3237 = vpop.f32.mrf.mxu0
        %v3238 = vadd.f32 0.0, %v3237
        %v3239 = vpop.f32.mrf.mxu0
        %3240 = vmatprep.mubr.f32.mxu0 0.0
        %3241 = vmatmul.mubr.f32.gmra.mxu0 %v3143
        %v3242 = vpop.f32.mrf.mxu0
        %v3243 = vadd.f32 0.0, %v3242
        %v3244 = vpop.f32.mrf.mxu0
        %3245 = vmatprep.mubr.f32.mxu0 0.0
        %3246 = vmatmul.mubr.f32.gmra.mxu0 %v3146
        %v3247 = vpop.f32.mrf.mxu0
        %v3248 = vadd.f32 0.0, %v3247
        %v3249 = vpop.f32.mrf.mxu0
        %3250 = vmatprep.mubr.f32.mxu0 0.0
        %3251 = vmatmul.mubr.f32.gmra.mxu0 %v3149
        %v3252 = vpop.f32.mrf.mxu0
        %v3253 = vadd.f32 0.0, %v3252
        %v3254 = vpop.f32.mrf.mxu0
        %3255 = vdwg.mxu0
        %v3256 = vmul.f32 %v3218, %v1573
        %v3257 = vmul.f32 %v3223, %v1574
        %v3258 = vmul.f32 %v3228, %v1575
        %v3259 = vmul.f32 %v3233, %v1576
        %v3260 = vmul.f32 %v3238, %v1577
        %v3261 = vmul.f32 %v3243, %v1578
        %v3262 = vmul.f32 %v3248, %v1579
        %v3263 = vmul.f32 %v3253, %v1580
        %v3264 = vadd.f32 %v3256, %v3257
        %v3265 = vadd.f32 %v3264, %v3258
        %v3266 = vadd.f32 %v3265, %v3259
        %v3267 = vadd.f32 %v3266, %v3260
        %v3268 = vadd.f32 %v3267, %v3261
        %v3269 = vadd.f32 %v3268, %v3262
        %v3270 = vadd.f32 %v3269, %v3263
        %v3271 = vadd.f32 %v1564, %v3270
        %3272 = vmatprep.subr.mxu0 0.0
        %3273 = vmatpush1.xpose.msra.mxu0 0.0
        %3274 = vmatprep.subr.mxu0 0.0
        %3275 = vmatpush1.xpose.msra.mxu0 0.0
        %3276 = vmatprep.subr.mxu0 0.0
        %3277 = vmatpush1.xpose.msra.mxu0 0.0
        %3278 = vmatprep.subr.mxu0 0.0
        %3279 = vmatpush1.xpose.msra.mxu0 0.0
        %3280 = vmatprep.subr.mxu0 0.0
        %3281 = vmatpush1.xpose.msra.mxu0 0.0
        %3282 = vmatprep.subr.mxu0 0.0
        %3283 = vmatpush1.xpose.msra.mxu0 0.0
        %3284 = vmatprep.subr.mxu0 0.0
        %3285 = vmatpush1.xpose.msra.mxu0 0.0
        %3286 = vmatprep.subr.mxu0 0.0
        %3287 = vmatpush1.xpose.msra.mxu0 0.0
        %3288 = vmatprep.subr.mxu0 0.0
        %3289 = vmatpush1.xpose.msra.mxu0 %v1464
        %3290 = vmatprep.subr.mxu0 0.0
        %3291 = vmatpush1.xpose.msra.mxu0 %v1458
        %3292 = vmatprep.subr.mxu0 0.0
        %3293 = vmatpush1.xpose.msra.mxu0 %v1452
        %3294 = vmatprep.subr.mxu0 0.0
        %3295 = vmatpush1.xpose.msra.mxu0 %v1446
        %3296 = vmatprep.subr.mxu0 0.0
        %3297 = vmatpush1.xpose.msra.mxu0 %v1440
        %3298 = vmatprep.subr.mxu0 0.0
        %3299 = vmatpush1.xpose.msra.mxu0 %v1434
        %3300 = vmatprep.subr.mxu0 0.0
        %3301 = vmatpush1.xpose.msra.mxu0 %v1428
        %3302 = vmatprep.subr.mxu0 0.0
        %3303 = vmatpush1.xpose.msra.mxu0 %v1422
        %3304 = vmatprep.subr.mxu0 0.0
        %3305 = vmatpush2.xpose.msra.mxu0 0.0
        %3306 = vmatprep.subr.mxu0 0.0
        %3307 = vmatpush2.xpose.msra.mxu0 0.0
        %3308 = vmatprep.subr.mxu0 0.0
        %3309 = vmatpush2.xpose.msra.mxu0 0.0
        %3310 = vmatprep.subr.mxu0 0.0
        %3311 = vmatpush2.xpose.msra.mxu0 0.0
        %3312 = vmatprep.subr.mxu0 0.0
        %3313 = vmatpush2.xpose.msra.mxu0 0.0
        %3314 = vmatprep.subr.mxu0 0.0
        %3315 = vmatpush2.xpose.msra.mxu0 0.0
        %3316 = vmatprep.subr.mxu0 0.0
        %3317 = vmatpush2.xpose.msra.mxu0 0.0
        %3318 = vmatprep.subr.mxu0 0.0
        %3319 = vmatpush2.xpose.msra.mxu0 0.0
        %3320 = vmatprep.subr.mxu0 0.0
        %3321 = vmatpush2.xpose.msra.mxu0 0.0
        %3322 = vmatprep.subr.mxu0 0.0
        %3323 = vmatpush2.xpose.msra.mxu0 0.0
        %3324 = vmatprep.subr.mxu0 0.0
        %3325 = vmatpush2.xpose.msra.mxu0 0.0
        %3326 = vmatprep.subr.mxu0 0.0
        %3327 = vmatpush2.xpose.msra.mxu0 0.0
        %3328 = vmatprep.subr.mxu0 0.0
        %3329 = vmatpush2.xpose.msra.mxu0 0.0
        %3330 = vmatprep.subr.mxu0 0.0
        %3331 = vmatpush2.xpose.msra.mxu0 0.0
        %3332 = vmatprep.subr.mxu0 0.0
        %3333 = vmatpush2.xpose.msra.mxu0 0.0
        %3334 = vmatprep.subr.mxu0 0.0
        %3335 = vmatpush2.xpose.msra.mxu0 0.0
        %3336 = vmatprep.mubr.f32.mxu0 0.0
        %3337 = vmatmul.mubr.f32.gmra.mxu0 %v1565
        %v3338 = vpop.f32.mrf.mxu0
        %v3339 = vadd.f32 0.0, %v3338
        %v3340 = vpop.f32.mrf.mxu0
        %3341 = vmatprep.mubr.f32.mxu0 0.0
        %3342 = vmatmul.mubr.f32.gmra.mxu0 %v1566
        %v3343 = vpop.f32.mrf.mxu0
        %v3344 = vadd.f32 0.0, %v3343
        %v3345 = vpop.f32.mrf.mxu0
        %3346 = vmatprep.mubr.f32.mxu0 0.0
        %3347 = vmatmul.mubr.f32.gmra.mxu0 %v1567
        %v3348 = vpop.f32.mrf.mxu0
        %v3349 = vadd.f32 0.0, %v3348
        %v3350 = vpop.f32.mrf.mxu0
        %3351 = vmatprep.mubr.f32.mxu0 0.0
        %3352 = vmatmul.mubr.f32.gmra.mxu0 %v1568
        %v3353 = vpop.f32.mrf.mxu0
        %v3354 = vadd.f32 0.0, %v3353
        %v3355 = vpop.f32.mrf.mxu0
        %3356 = vmatprep.mubr.f32.mxu0 0.0
        %3357 = vmatmul.mubr.f32.gmra.mxu0 %v1569
        %v3358 = vpop.f32.mrf.mxu0
        %v3359 = vadd.f32 0.0, %v3358
        %v3360 = vpop.f32.mrf.mxu0
        %3361 = vmatprep.mubr.f32.mxu0 0.0
        %3362 = vmatmul.mubr.f32.gmra.mxu0 %v1570
        %v3363 = vpop.f32.mrf.mxu0
        %v3364 = vadd.f32 0.0, %v3363
        %v3365 = vpop.f32.mrf.mxu0
        %3366 = vmatprep.mubr.f32.mxu0 0.0
        %3367 = vmatmul.mubr.f32.gmra.mxu0 %v1571
        %v3368 = vpop.f32.mrf.mxu0
        %v3369 = vadd.f32 0.0, %v3368
        %v3370 = vpop.f32.mrf.mxu0
        %3371 = vmatprep.mubr.f32.mxu0 0.0
        %3372 = vmatmul.mubr.f32.gmra.mxu0 %v1572
        %v3373 = vpop.f32.mrf.mxu0
        %v3374 = vadd.f32 0.0, %v3373
        %v3375 = vpop.f32.mrf.mxu0
        %3376 = vdwg.mxu0
        %v3377 = vsel %vm1686, %v3339, -inf
        %3378 = vmax.xlane.f32.xlu0 %v3377
        %v3379 = vpop.xlane.xlu0 %3378
        %v3380 = vsel %vm1686, %v3344, -inf
        %3381 = vmax.xlane.f32.xlu0 %v3380
        %v3382 = vpop.xlane.xlu0 %3381
        %v3383 = vsel %vm1686, %v3349, -inf
        %3384 = vmax.xlane.f32.xlu0 %v3383
        %v3385 = vpop.xlane.xlu0 %3384
        %v3386 = vsel %vm1686, %v3354, -inf
        %3387 = vmax.xlane.f32.xlu0 %v3386
        %v3388 = vpop.xlane.xlu0 %3387
        %v3389 = vsel %vm1686, %v3359, -inf
        %3390 = vmax.xlane.f32.xlu0 %v3389
        %v3391 = vpop.xlane.xlu0 %3390
        %v3392 = vsel %vm1686, %v3364, -inf
        %3393 = vmax.xlane.f32.xlu0 %v3392
        %v3394 = vpop.xlane.xlu0 %3393
        %v3395 = vsel %vm1686, %v3369, -inf
        %3396 = vmax.xlane.f32.xlu0 %v3395
        %v3397 = vpop.xlane.xlu0 %3396
        %v3398 = vsel %vm1686, %v3374, -inf
        %3399 = vmax.xlane.f32.xlu0 %v3398
        %v3400 = vpop.xlane.xlu0 %3399
        %v3401 = vsub.f32 %v3339, %v3379
        %v3402 = vsub.f32 %v3344, %v3382
        %v3403 = vsub.f32 %v3349, %v3385
        %v3404 = vsub.f32 %v3354, %v3388
        %v3405 = vsub.f32 %v3359, %v3391
        %v3406 = vsub.f32 %v3364, %v3394
        %v3407 = vsub.f32 %v3369, %v3397
        %v3408 = vsub.f32 %v3374, %v3400
        %v3409 = vmul.f32 %v3401, 1.442695
        %v3410 = vpow.pop %v3409
        %v3411 = vmul.f32 %v3402, 1.442695
        %v3412 = vpow.pop %v3411
        %v3413 = vmul.f32 %v3403, 1.442695
        %v3414 = vpow.pop %v3413
        %v3415 = vmul.f32 %v3404, 1.442695
        %v3416 = vpow.pop %v3415
        %v3417 = vmul.f32 %v3405, 1.442695
        %v3418 = vpow.pop %v3417
        %v3419 = vmul.f32 %v3406, 1.442695
        %v3420 = vpow.pop %v3419
        %v3421 = vmul.f32 %v3407, 1.442695
        %v3422 = vpow.pop %v3421
        %v3423 = vmul.f32 %v3408, 1.442695
        %v3424 = vpow.pop %v3423
        %v3425 = vsel %vm1686, %v3410, 0.0
        %3426 = vadd.xlane.f32.xlu0 %v3425
        %v3427 = vpop.xlane.xlu0 %3426
        %v3428 = vsel %vm1686, %v3412, 0.0
        %3429 = vadd.xlane.f32.xlu0 %v3428
        %v3430 = vpop.xlane.xlu0 %3429
        %v3431 = vsel %vm1686, %v3414, 0.0
        %3432 = vadd.xlane.f32.xlu0 %v3431
        %v3433 = vpop.xlane.xlu0 %3432
        %v3434 = vsel %vm1686, %v3416, 0.0
        %3435 = vadd.xlane.f32.xlu0 %v3434
        %v3436 = vpop.xlane.xlu0 %3435
        %v3437 = vsel %vm1686, %v3418, 0.0
        %3438 = vadd.xlane.f32.xlu0 %v3437
        %v3439 = vpop.xlane.xlu0 %3438
        %v3440 = vsel %vm1686, %v3420, 0.0
        %3441 = vadd.xlane.f32.xlu0 %v3440
        %v3442 = vpop.xlane.xlu0 %3441
        %v3443 = vsel %vm1686, %v3422, 0.0
        %3444 = vadd.xlane.f32.xlu0 %v3443
        %v3445 = vpop.xlane.xlu0 %3444
        %v3446 = vsel %vm1686, %v3424, 0.0
        %3447 = vadd.xlane.f32.xlu0 %v3446
        %v3448 = vpop.xlane.xlu0 %3447
        %v3449 = vrcp.pop %v3427
        %v3450 = vmul.f32 %v3410, %v3449
        %v3451 = vrcp.pop %v3430
        %v3452 = vmul.f32 %v3412, %v3451
        %v3453 = vrcp.pop %v3433
        %v3454 = vmul.f32 %v3414, %v3453
        %v3455 = vrcp.pop %v3436
        %v3456 = vmul.f32 %v3416, %v3455
        %v3457 = vrcp.pop %v3439
        %v3458 = vmul.f32 %v3418, %v3457
        %v3459 = vrcp.pop %v3442
        %v3460 = vmul.f32 %v3420, %v3459
        %v3461 = vrcp.pop %v3445
        %v3462 = vmul.f32 %v3422, %v3461
        %v3463 = vrcp.pop %v3448
        %v3464 = vmul.f32 %v3424, %v3463
        %v3466 = vsel %vm1686, %v3450, 0
        %v3469 = vsel %vm1686, %v3452, 0
        %v3472 = vsel %vm1686, %v3454, 0
        %v3475 = vsel %vm1686, %v3456, 0
        %v3478 = vsel %vm1686, %v3458, 0
        %v3481 = vsel %vm1686, %v3460, 0
        %v3484 = vsel %vm1686, %v3462, 0
        %v3487 = vsel %vm1686, %v3464, 0
        %3489 = vmatprep.subr.mxu0 0.0
        %3490 = vmatpush1.msra.mxu0 0.0
        %3491 = vmatprep.subr.mxu0 0.0
        %3492 = vmatpush1.msra.mxu0 0.0
        %3493 = vmatprep.subr.mxu0 0.0
        %3494 = vmatpush1.msra.mxu0 0.0
        %3495 = vmatprep.subr.mxu0 0.0
        %3496 = vmatpush1.msra.mxu0 0.0
        %3497 = vmatprep.subr.mxu0 0.0
        %3498 = vmatpush1.msra.mxu0 0.0
        %3499 = vmatprep.subr.mxu0 0.0
        %3500 = vmatpush1.msra.mxu0 0.0
        %3501 = vmatprep.subr.mxu0 0.0
        %3502 = vmatpush1.msra.mxu0 0.0
        %3503 = vmatprep.subr.mxu0 0.0
        %3504 = vmatpush1.msra.mxu0 0.0
        %3505 = vmatprep.subr.mxu0 0.0
        %3506 = vmatpush1.msra.mxu0 %v1466
        %3507 = vmatprep.subr.mxu0 0.0
        %3508 = vmatpush1.msra.mxu0 %v1460
        %3509 = vmatprep.subr.mxu0 0.0
        %3510 = vmatpush1.msra.mxu0 %v1454
        %3511 = vmatprep.subr.mxu0 0.0
        %3512 = vmatpush1.msra.mxu0 %v1448
        %3513 = vmatprep.subr.mxu0 0.0
        %3514 = vmatpush1.msra.mxu0 %v1442
        %3515 = vmatprep.subr.mxu0 0.0
        %3516 = vmatpush1.msra.mxu0 %v1436
        %3517 = vmatprep.subr.mxu0 0.0
        %3518 = vmatpush1.msra.mxu0 %v1430
        %3519 = vmatprep.subr.mxu0 0.0
        %3520 = vmatpush1.msra.mxu0 %v1424
        %3521 = vmatprep.subr.mxu0 0.0
        %3522 = vmatpush2.msra.mxu0 0.0
        %3523 = vmatprep.subr.mxu0 0.0
        %3524 = vmatpush2.msra.mxu0 0.0
        %3525 = vmatprep.subr.mxu0 0.0
        %3526 = vmatpush2.msra.mxu0 0.0
        %3527 = vmatprep.subr.mxu0 0.0
        %3528 = vmatpush2.msra.mxu0 0.0
        %3529 = vmatprep.subr.mxu0 0.0
        %3530 = vmatpush2.msra.mxu0 0.0
        %3531 = vmatprep.subr.mxu0 0.0
        %3532 = vmatpush2.msra.mxu0 0.0
        %3533 = vmatprep.subr.mxu0 0.0
        %3534 = vmatpush2.msra.mxu0 0.0
        %3535 = vmatprep.subr.mxu0 0.0
        %3536 = vmatpush2.msra.mxu0 0.0
        %3537 = vmatprep.subr.mxu0 0.0
        %3538 = vmatpush2.msra.mxu0 0.0
        %3539 = vmatprep.subr.mxu0 0.0
        %3540 = vmatpush2.msra.mxu0 0.0
        %3541 = vmatprep.subr.mxu0 0.0
        %3542 = vmatpush2.msra.mxu0 0.0
        %3543 = vmatprep.subr.mxu0 0.0
        %3544 = vmatpush2.msra.mxu0 0.0
        %3545 = vmatprep.subr.mxu0 0.0
        %3546 = vmatpush2.msra.mxu0 0.0
        %3547 = vmatprep.subr.mxu0 0.0
        %3548 = vmatpush2.msra.mxu0 0.0
        %3549 = vmatprep.subr.mxu0 0.0
        %3550 = vmatpush2.msra.mxu0 0.0
        %3551 = vmatprep.subr.mxu0 0.0
        %3552 = vmatpush2.msra.mxu0 0.0
        %3553 = vmatprep.mubr.f32.mxu0 0.0
        %3554 = vmatmul.mubr.f32.gmra.mxu0 %v3466
        %v3555 = vpop.f32.mrf.mxu0
        %v3556 = vadd.f32 0.0, %v3555
        %v3557 = vpop.f32.mrf.mxu0
        %3558 = vmatprep.mubr.f32.mxu0 0.0
        %3559 = vmatmul.mubr.f32.gmra.mxu0 %v3469
        %v3560 = vpop.f32.mrf.mxu0
        %v3561 = vadd.f32 0.0, %v3560
        %v3562 = vpop.f32.mrf.mxu0
        %3563 = vmatprep.mubr.f32.mxu0 0.0
        %3564 = vmatmul.mubr.f32.gmra.mxu0 %v3472
        %v3565 = vpop.f32.mrf.mxu0
        %v3566 = vadd.f32 0.0, %v3565
        %v3567 = vpop.f32.mrf.mxu0
        %3568 = vmatprep.mubr.f32.mxu0 0.0
        %3569 = vmatmul.mubr.f32.gmra.mxu0 %v3475
        %v3570 = vpop.f32.mrf.mxu0
        %v3571 = vadd.f32 0.0, %v3570
        %v3572 = vpop.f32.mrf.mxu0
        %3573 = vmatprep.mubr.f32.mxu0 0.0
        %3574 = vmatmul.mubr.f32.gmra.mxu0 %v3478
        %v3575 = vpop.f32.mrf.mxu0
        %v3576 = vadd.f32 0.0, %v3575
        %v3577 = vpop.f32.mrf.mxu0
        %3578 = vmatprep.mubr.f32.mxu0 0.0
        %3579 = vmatmul.mubr.f32.gmra.mxu0 %v3481
        %v3580 = vpop.f32.mrf.mxu0
        %v3581 = vadd.f32 0.0, %v3580
        %v3582 = vpop.f32.mrf.mxu0
        %3583 = vmatprep.mubr.f32.mxu0 0.0
        %3584 = vmatmul.mubr.f32.gmra.mxu0 %v3484
        %v3585 = vpop.f32.mrf.mxu0
        %v3586 = vadd.f32 0.0, %v3585
        %v3587 = vpop.f32.mrf.mxu0
        %3588 = vmatprep.mubr.f32.mxu0 0.0
        %3589 = vmatmul.mubr.f32.gmra.mxu0 %v3487
        %v3590 = vpop.f32.mrf.mxu0
        %v3591 = vadd.f32 0.0, %v3590
        %v3592 = vpop.f32.mrf.mxu0
        %3593 = vdwg.mxu0
        %v3594 = vmul.f32 %v3556, %v1573
        %v3595 = vmul.f32 %v3561, %v1574
        %v3596 = vmul.f32 %v3566, %v1575
        %v3597 = vmul.f32 %v3571, %v1576
        %v3598 = vmul.f32 %v3576, %v1577
        %v3599 = vmul.f32 %v3581, %v1578
        %v3600 = vmul.f32 %v3586, %v1579
        %v3601 = vmul.f32 %v3591, %v1580
        %v3602 = vadd.f32 %v3594, %v3595
        %v3603 = vadd.f32 %v3602, %v3596
        %v3604 = vadd.f32 %v3603, %v3597
        %v3605 = vadd.f32 %v3604, %v3598
        %v3606 = vadd.f32 %v3605, %v3599
        %v3607 = vadd.f32 %v3606, %v3600
        %v3608 = vadd.f32 %v3607, %v3601
        %v3609 = vadd.f32 %v1564, %v3608
        %3610 = vmatprep.subr.mxu0 0.0
        %3611 = vmatpush1.xpose.msra.mxu0 0.0
        %3612 = vmatprep.subr.mxu0 0.0
        %3613 = vmatpush1.xpose.msra.mxu0 0.0
        %3614 = vmatprep.subr.mxu0 0.0
        %3615 = vmatpush1.xpose.msra.mxu0 0.0
        %3616 = vmatprep.subr.mxu0 0.0
        %3617 = vmatpush1.xpose.msra.mxu0 0.0
        %3618 = vmatprep.subr.mxu0 0.0
        %3619 = vmatpush1.xpose.msra.mxu0 0.0
        %3620 = vmatprep.subr.mxu0 0.0
        %3621 = vmatpush1.xpose.msra.mxu0 0.0
        %3622 = vmatprep.subr.mxu0 0.0
        %3623 = vmatpush1.xpose.msra.mxu0 0.0
        %3624 = vmatprep.subr.mxu0 0.0
        %3625 = vmatpush1.xpose.msra.mxu0 0.0
        %3626 = vmatprep.subr.mxu0 0.0
        %3627 = vmatpush1.xpose.msra.mxu0 %v1512
        %3628 = vmatprep.subr.mxu0 0.0
        %3629 = vmatpush1.xpose.msra.mxu0 %v1506
        %3630 = vmatprep.subr.mxu0 0.0
        %3631 = vmatpush1.xpose.msra.mxu0 %v1500
        %3632 = vmatprep.subr.mxu0 0.0
        %3633 = vmatpush1.xpose.msra.mxu0 %v1494
        %3634 = vmatprep.subr.mxu0 0.0
        %3635 = vmatpush1.xpose.msra.mxu0 %v1488
        %3636 = vmatprep.subr.mxu0 0.0
        %3637 = vmatpush1.xpose.msra.mxu0 %v1482
        %3638 = vmatprep.subr.mxu0 0.0
        %3639 = vmatpush1.xpose.msra.mxu0 %v1476
        %3640 = vmatprep.subr.mxu0 0.0
        %3641 = vmatpush1.xpose.msra.mxu0 %v1470
        %3642 = vmatprep.subr.mxu0 0.0
        %3643 = vmatpush2.xpose.msra.mxu0 0.0
        %3644 = vmatprep.subr.mxu0 0.0
        %3645 = vmatpush2.xpose.msra.mxu0 0.0
        %3646 = vmatprep.subr.mxu0 0.0
        %3647 = vmatpush2.xpose.msra.mxu0 0.0
        %3648 = vmatprep.subr.mxu0 0.0
        %3649 = vmatpush2.xpose.msra.mxu0 0.0
        %3650 = vmatprep.subr.mxu0 0.0
        %3651 = vmatpush2.xpose.msra.mxu0 0.0
        %3652 = vmatprep.subr.mxu0 0.0
        %3653 = vmatpush2.xpose.msra.mxu0 0.0
        %3654 = vmatprep.subr.mxu0 0.0
        %3655 = vmatpush2.xpose.msra.mxu0 0.0
        %3656 = vmatprep.subr.mxu0 0.0
        %3657 = vmatpush2.xpose.msra.mxu0 0.0
        %3658 = vmatprep.subr.mxu0 0.0
        %3659 = vmatpush2.xpose.msra.mxu0 0.0
        %3660 = vmatprep.subr.mxu0 0.0
        %3661 = vmatpush2.xpose.msra.mxu0 0.0
        %3662 = vmatprep.subr.mxu0 0.0
        %3663 = vmatpush2.xpose.msra.mxu0 0.0
        %3664 = vmatprep.subr.mxu0 0.0
        %3665 = vmatpush2.xpose.msra.mxu0 0.0
        %3666 = vmatprep.subr.mxu0 0.0
        %3667 = vmatpush2.xpose.msra.mxu0 0.0
        %3668 = vmatprep.subr.mxu0 0.0
        %3669 = vmatpush2.xpose.msra.mxu0 0.0
        %3670 = vmatprep.subr.mxu0 0.0
        %3671 = vmatpush2.xpose.msra.mxu0 0.0
        %3672 = vmatprep.subr.mxu0 0.0
        %3673 = vmatpush2.xpose.msra.mxu0 0.0
        %3674 = vmatprep.mubr.f32.mxu0 0.0
        %3675 = vmatmul.mubr.f32.gmra.mxu0 %v1565
        %v3676 = vpop.f32.mrf.mxu0
        %v3677 = vadd.f32 0.0, %v3676
        %v3678 = vpop.f32.mrf.mxu0
        %3679 = vmatprep.mubr.f32.mxu0 0.0
        %3680 = vmatmul.mubr.f32.gmra.mxu0 %v1566
        %v3681 = vpop.f32.mrf.mxu0
        %v3682 = vadd.f32 0.0, %v3681
        %v3683 = vpop.f32.mrf.mxu0
        %3684 = vmatprep.mubr.f32.mxu0 0.0
        %3685 = vmatmul.mubr.f32.gmra.mxu0 %v1567
        %v3686 = vpop.f32.mrf.mxu0
        %v3687 = vadd.f32 0.0, %v3686
        %v3688 = vpop.f32.mrf.mxu0
        %3689 = vmatprep.mubr.f32.mxu0 0.0
        %3690 = vmatmul.mubr.f32.gmra.mxu0 %v1568
        %v3691 = vpop.f32.mrf.mxu0
        %v3692 = vadd.f32 0.0, %v3691
        %v3693 = vpop.f32.mrf.mxu0
        %3694 = vmatprep.mubr.f32.mxu0 0.0
        %3695 = vmatmul.mubr.f32.gmra.mxu0 %v1569
        %v3696 = vpop.f32.mrf.mxu0
        %v3697 = vadd.f32 0.0, %v3696
        %v3698 = vpop.f32.mrf.mxu0
        %3699 = vmatprep.mubr.f32.mxu0 0.0
        %3700 = vmatmul.mubr.f32.gmra.mxu0 %v1570
        %v3701 = vpop.f32.mrf.mxu0
        %v3702 = vadd.f32 0.0, %v3701
        %v3703 = vpop.f32.mrf.mxu0
        %3704 = vmatprep.mubr.f32.mxu0 0.0
        %3705 = vmatmul.mubr.f32.gmra.mxu0 %v1571
        %v3706 = vpop.f32.mrf.mxu0
        %v3707 = vadd.f32 0.0, %v3706
        %v3708 = vpop.f32.mrf.mxu0
        %3709 = vmatprep.mubr.f32.mxu0 0.0
        %3710 = vmatmul.mubr.f32.gmra.mxu0 %v1572
        %v3711 = vpop.f32.mrf.mxu0
        %v3712 = vadd.f32 0.0, %v3711
        %v3713 = vpop.f32.mrf.mxu0
        %3714 = vdwg.mxu0
        %v3715 = vsel %vm1686, %v3677, -inf
        %3716 = vmax.xlane.f32.xlu0 %v3715
        %v3717 = vpop.xlane.xlu0 %3716
        %v3718 = vsel %vm1686, %v3682, -inf
        %3719 = vmax.xlane.f32.xlu0 %v3718
        %v3720 = vpop.xlane.xlu0 %3719
        %v3721 = vsel %vm1686, %v3687, -inf
        %3722 = vmax.xlane.f32.xlu0 %v3721
        %v3723 = vpop.xlane.xlu0 %3722
        %v3724 = vsel %vm1686, %v3692, -inf
        %3725 = vmax.xlane.f32.xlu0 %v3724
        %v3726 = vpop.xlane.xlu0 %3725
        %v3727 = vsel %vm1686, %v3697, -inf
        %3728 = vmax.xlane.f32.xlu0 %v3727
        %v3729 = vpop.xlane.xlu0 %3728
        %v3730 = vsel %vm1686, %v3702, -inf
        %3731 = vmax.xlane.f32.xlu0 %v3730
        %v3732 = vpop.xlane.xlu0 %3731
        %v3733 = vsel %vm1686, %v3707, -inf
        %3734 = vmax.xlane.f32.xlu0 %v3733
        %v3735 = vpop.xlane.xlu0 %3734
        %v3736 = vsel %vm1686, %v3712, -inf
        %3737 = vmax.xlane.f32.xlu0 %v3736
        %v3738 = vpop.xlane.xlu0 %3737
        %v3739 = vsub.f32 %v3677, %v3717
        %v3740 = vsub.f32 %v3682, %v3720
        %v3741 = vsub.f32 %v3687, %v3723
        %v3742 = vsub.f32 %v3692, %v3726
        %v3743 = vsub.f32 %v3697, %v3729
        %v3744 = vsub.f32 %v3702, %v3732
        %v3745 = vsub.f32 %v3707, %v3735
        %v3746 = vsub.f32 %v3712, %v3738
        %v3747 = vmul.f32 %v3739, 1.442695
        %v3748 = vpow.pop %v3747
        %v3749 = vmul.f32 %v3740, 1.442695
        %v3750 = vpow.pop %v3749
        %v3751 = vmul.f32 %v3741, 1.442695
        %v3752 = vpow.pop %v3751
        %v3753 = vmul.f32 %v3742, 1.442695
        %v3754 = vpow.pop %v3753
        %v3755 = vmul.f32 %v3743, 1.442695
        %v3756 = vpow.pop %v3755
        %v3757 = vmul.f32 %v3744, 1.442695
        %v3758 = vpow.pop %v3757
        %v3759 = vmul.f32 %v3745, 1.442695
        %v3760 = vpow.pop %v3759
        %v3761 = vmul.f32 %v3746, 1.442695
        %v3762 = vpow.pop %v3761
        %v3763 = vsel %vm1686, %v3748, 0.0
        %3764 = vadd.xlane.f32.xlu0 %v3763
        %v3765 = vpop.xlane.xlu0 %3764
        %v3766 = vsel %vm1686, %v3750, 0.0
        %3767 = vadd.xlane.f32.xlu0 %v3766
        %v3768 = vpop.xlane.xlu0 %3767
        %v3769 = vsel %vm1686, %v3752, 0.0
        %3770 = vadd.xlane.f32.xlu0 %v3769
        %v3771 = vpop.xlane.xlu0 %3770
        %v3772 = vsel %vm1686, %v3754, 0.0
        %3773 = vadd.xlane.f32.xlu0 %v3772
        %v3774 = vpop.xlane.xlu0 %3773
        %v3775 = vsel %vm1686, %v3756, 0.0
        %3776 = vadd.xlane.f32.xlu0 %v3775
        %v3777 = vpop.xlane.xlu0 %3776
        %v3778 = vsel %vm1686, %v3758, 0.0
        %3779 = vadd.xlane.f32.xlu0 %v3778
        %v3780 = vpop.xlane.xlu0 %3779
        %v3781 = vsel %vm1686, %v3760, 0.0
        %3782 = vadd.xlane.f32.xlu0 %v3781
        %v3783 = vpop.xlane.xlu0 %3782
        %v3784 = vsel %vm1686, %v3762, 0.0
        %3785 = vadd.xlane.f32.xlu0 %v3784
        %v3786 = vpop.xlane.xlu0 %3785
        %v3787 = vrcp.pop %v3765
        %v3788 = vmul.f32 %v3748, %v3787
        %v3789 = vrcp.pop %v3768
        %v3790 = vmul.f32 %v3750, %v3789
        %v3791 = vrcp.pop %v3771
        %v3792 = vmul.f32 %v3752, %v3791
        %v3793 = vrcp.pop %v3774
        %v3794 = vmul.f32 %v3754, %v3793
        %v3795 = vrcp.pop %v3777
        %v3796 = vmul.f32 %v3756, %v3795
        %v3797 = vrcp.pop %v3780
        %v3798 = vmul.f32 %v3758, %v3797
        %v3799 = vrcp.pop %v3783
        %v3800 = vmul.f32 %v3760, %v3799
        %v3801 = vrcp.pop %v3786
        %v3802 = vmul.f32 %v3762, %v3801
        %v3804 = vsel %vm1686, %v3788, 0
        %v3807 = vsel %vm1686, %v3790, 0
        %v3810 = vsel %vm1686, %v3792, 0
        %v3813 = vsel %vm1686, %v3794, 0
        %v3816 = vsel %vm1686, %v3796, 0
        %v3819 = vsel %vm1686, %v3798, 0
        %v3822 = vsel %vm1686, %v3800, 0
        %v3825 = vsel %vm1686, %v3802, 0
        %3827 = vmatprep.subr.mxu0 0.0
        %3828 = vmatpush1.msra.mxu0 0.0
        %3829 = vmatprep.subr.mxu0 0.0
        %3830 = vmatpush1.msra.mxu0 0.0
        %3831 = vmatprep.subr.mxu0 0.0
        %3832 = vmatpush1.msra.mxu0 0.0
        %3833 = vmatprep.subr.mxu0 0.0
        %3834 = vmatpush1.msra.mxu0 0.0
        %3835 = vmatprep.subr.mxu0 0.0
        %3836 = vmatpush1.msra.mxu0 0.0
        %3837 = vmatprep.subr.mxu0 0.0
        %3838 = vmatpush1.msra.mxu0 0.0
        %3839 = vmatprep.subr.mxu0 0.0
        %3840 = vmatpush1.msra.mxu0 0.0
        %3841 = vmatprep.subr.mxu0 0.0
        %3842 = vmatpush1.msra.mxu0 0.0
        %3843 = vmatprep.subr.mxu0 0.0
        %3844 = vmatpush1.msra.mxu0 %v1514
        %3845 = vmatprep.subr.mxu0 0.0
        %3846 = vmatpush1.msra.mxu0 %v1508
        %3847 = vmatprep.subr.mxu0 0.0
        %3848 = vmatpush1.msra.mxu0 %v1502
        %3849 = vmatprep.subr.mxu0 0.0
        %3850 = vmatpush1.msra.mxu0 %v1496
        %3851 = vmatprep.subr.mxu0 0.0
        %3852 = vmatpush1.msra.mxu0 %v1490
        %3853 = vmatprep.subr.mxu0 0.0
        %3854 = vmatpush1.msra.mxu0 %v1484
        %3855 = vmatprep.subr.mxu0 0.0
        %3856 = vmatpush1.msra.mxu0 %v1478
        %3857 = vmatprep.subr.mxu0 0.0
        %3858 = vmatpush1.msra.mxu0 %v1472
        %3859 = vmatprep.subr.mxu0 0.0
        %3860 = vmatpush2.msra.mxu0 0.0
        %3861 = vmatprep.subr.mxu0 0.0
        %3862 = vmatpush2.msra.mxu0 0.0
        %3863 = vmatprep.subr.mxu0 0.0
        %3864 = vmatpush2.msra.mxu0 0.0
        %3865 = vmatprep.subr.mxu0 0.0
        %3866 = vmatpush2.msra.mxu0 0.0
        %3867 = vmatprep.subr.mxu0 0.0
        %3868 = vmatpush2.msra.mxu0 0.0
        %3869 = vmatprep.subr.mxu0 0.0
        %3870 = vmatpush2.msra.mxu0 0.0
        %3871 = vmatprep.subr.mxu0 0.0
        %3872 = vmatpush2.msra.mxu0 0.0
        %3873 = vmatprep.subr.mxu0 0.0
        %3874 = vmatpush2.msra.mxu0 0.0
        %3875 = vmatprep.subr.mxu0 0.0
        %3876 = vmatpush2.msra.mxu0 0.0
        %3877 = vmatprep.subr.mxu0 0.0
        %3878 = vmatpush2.msra.mxu0 0.0
        %3879 = vmatprep.subr.mxu0 0.0
        %3880 = vmatpush2.msra.mxu0 0.0
        %3881 = vmatprep.subr.mxu0 0.0
        %3882 = vmatpush2.msra.mxu0 0.0
        %3883 = vmatprep.subr.mxu0 0.0
        %3884 = vmatpush2.msra.mxu0 0.0
        %3885 = vmatprep.subr.mxu0 0.0
        %3886 = vmatpush2.msra.mxu0 0.0
        %3887 = vmatprep.subr.mxu0 0.0
        %3888 = vmatpush2.msra.mxu0 0.0
        %3889 = vmatprep.subr.mxu0 0.0
        %3890 = vmatpush2.msra.mxu0 0.0
        %3891 = vmatprep.mubr.f32.mxu0 0.0
        %3892 = vmatmul.mubr.f32.gmra.mxu0 %v3804
        %v3893 = vpop.f32.mrf.mxu0
        %v3894 = vadd.f32 0.0, %v3893
        %v3895 = vpop.f32.mrf.mxu0
        %3896 = vmatprep.mubr.f32.mxu0 0.0
        %3897 = vmatmul.mubr.f32.gmra.mxu0 %v3807
        %v3898 = vpop.f32.mrf.mxu0
        %v3899 = vadd.f32 0.0, %v3898
        %v3900 = vpop.f32.mrf.mxu0
        %3901 = vmatprep.mubr.f32.mxu0 0.0
        %3902 = vmatmul.mubr.f32.gmra.mxu0 %v3810
        %v3903 = vpop.f32.mrf.mxu0
        %v3904 = vadd.f32 0.0, %v3903
        %v3905 = vpop.f32.mrf.mxu0
        %3906 = vmatprep.mubr.f32.mxu0 0.0
        %3907 = vmatmul.mubr.f32.gmra.mxu0 %v3813
        %v3908 = vpop.f32.mrf.mxu0
        %v3909 = vadd.f32 0.0, %v3908
        %v3910 = vpop.f32.mrf.mxu0
        %3911 = vmatprep.mubr.f32.mxu0 0.0
        %3912 = vmatmul.mubr.f32.gmra.mxu0 %v3816
        %v3913 = vpop.f32.mrf.mxu0
        %v3914 = vadd.f32 0.0, %v3913
        %v3915 = vpop.f32.mrf.mxu0
        %3916 = vmatprep.mubr.f32.mxu0 0.0
        %3917 = vmatmul.mubr.f32.gmra.mxu0 %v3819
        %v3918 = vpop.f32.mrf.mxu0
        %v3919 = vadd.f32 0.0, %v3918
        %v3920 = vpop.f32.mrf.mxu0
        %3921 = vmatprep.mubr.f32.mxu0 0.0
        %3922 = vmatmul.mubr.f32.gmra.mxu0 %v3822
        %v3923 = vpop.f32.mrf.mxu0
        %v3924 = vadd.f32 0.0, %v3923
        %v3925 = vpop.f32.mrf.mxu0
        %3926 = vmatprep.mubr.f32.mxu0 0.0
        %3927 = vmatmul.mubr.f32.gmra.mxu0 %v3825
        %v3928 = vpop.f32.mrf.mxu0
        %v3929 = vadd.f32 0.0, %v3928
        %v3930 = vpop.f32.mrf.mxu0
        %3931 = vdwg.mxu0
        %v3932 = vmul.f32 %v3894, %v1573
        %v3933 = vmul.f32 %v3899, %v1574
        %v3934 = vmul.f32 %v3904, %v1575
        %v3935 = vmul.f32 %v3909, %v1576
        %v3936 = vmul.f32 %v3914, %v1577
        %v3937 = vmul.f32 %v3919, %v1578
        %v3938 = vmul.f32 %v3924, %v1579
        %v3939 = vmul.f32 %v3929, %v1580
        %v3940 = vadd.f32 %v3932, %v3933
        %v3941 = vadd.f32 %v3940, %v3934
        %v3942 = vadd.f32 %v3941, %v3935
        %v3943 = vadd.f32 %v3942, %v3936
        %v3944 = vadd.f32 %v3943, %v3937
        %v3945 = vadd.f32 %v3944, %v3938
        %v3946 = vadd.f32 %v3945, %v3939
        %v3947 = vadd.f32 %v1564, %v3946
        %3948 = vmatprep.subr.mxu0 0.0
        %3949 = vmatpush1.xpose.msra.mxu0 0.0
        %3950 = vmatprep.subr.mxu0 0.0
        %3951 = vmatpush1.xpose.msra.mxu0 0.0
        %3952 = vmatprep.subr.mxu0 0.0
        %3953 = vmatpush1.xpose.msra.mxu0 0.0
        %3954 = vmatprep.subr.mxu0 0.0
        %3955 = vmatpush1.xpose.msra.mxu0 0.0
        %3956 = vmatprep.subr.mxu0 0.0
        %3957 = vmatpush1.xpose.msra.mxu0 0.0
        %3958 = vmatprep.subr.mxu0 0.0
        %3959 = vmatpush1.xpose.msra.mxu0 0.0
        %3960 = vmatprep.subr.mxu0 0.0
        %3961 = vmatpush1.xpose.msra.mxu0 0.0
        %3962 = vmatprep.subr.mxu0 0.0
        %3963 = vmatpush1.xpose.msra.mxu0 0.0
        %3964 = vmatprep.subr.mxu0 0.0
        %3965 = vmatpush1.xpose.msra.mxu0 %v1560
        %3966 = vmatprep.subr.mxu0 0.0
        %3967 = vmatpush1.xpose.msra.mxu0 %v1554
        %3968 = vmatprep.subr.mxu0 0.0
        %3969 = vmatpush1.xpose.msra.mxu0 %v1548
        %3970 = vmatprep.subr.mxu0 0.0
        %3971 = vmatpush1.xpose.msra.mxu0 %v1542
        %3972 = vmatprep.subr.mxu0 0.0
        %3973 = vmatpush1.xpose.msra.mxu0 %v1536
        %3974 = vmatprep.subr.mxu0 0.0
        %3975 = vmatpush1.xpose.msra.mxu0 %v1530
        %3976 = vmatprep.subr.mxu0 0.0
        %3977 = vmatpush1.xpose.msra.mxu0 %v1524
        %3978 = vmatprep.subr.mxu0 0.0
        %3979 = vmatpush1.xpose.msra.mxu0 %v1518
        %3980 = vmatprep.subr.mxu0 0.0
        %3981 = vmatpush2.xpose.msra.mxu0 0.0
        %3982 = vmatprep.subr.mxu0 0.0
        %3983 = vmatpush2.xpose.msra.mxu0 0.0
        %3984 = vmatprep.subr.mxu0 0.0
        %3985 = vmatpush2.xpose.msra.mxu0 0.0
        %3986 = vmatprep.subr.mxu0 0.0
        %3987 = vmatpush2.xpose.msra.mxu0 0.0
        %3988 = vmatprep.subr.mxu0 0.0
        %3989 = vmatpush2.xpose.msra.mxu0 0.0
        %3990 = vmatprep.subr.mxu0 0.0
        %3991 = vmatpush2.xpose.msra.mxu0 0.0
        %3992 = vmatprep.subr.mxu0 0.0
        %3993 = vmatpush2.xpose.msra.mxu0 0.0
        %3994 = vmatprep.subr.mxu0 0.0
        %3995 = vmatpush2.xpose.msra.mxu0 0.0
        %3996 = vmatprep.subr.mxu0 0.0
        %3997 = vmatpush2.xpose.msra.mxu0 0.0
        %3998 = vmatprep.subr.mxu0 0.0
        %3999 = vmatpush2.xpose.msra.mxu0 0.0
        %4000 = vmatprep.subr.mxu0 0.0
        %4001 = vmatpush2.xpose.msra.mxu0 0.0
        %4002 = vmatprep.subr.mxu0 0.0
        %4003 = vmatpush2.xpose.msra.mxu0 0.0
        %4004 = vmatprep.subr.mxu0 0.0
        %4005 = vmatpush2.xpose.msra.mxu0 0.0
        %4006 = vmatprep.subr.mxu0 0.0
        %4007 = vmatpush2.xpose.msra.mxu0 0.0
        %4008 = vmatprep.subr.mxu0 0.0
        %4009 = vmatpush2.xpose.msra.mxu0 0.0
        %4010 = vmatprep.subr.mxu0 0.0
        %4011 = vmatpush2.xpose.msra.mxu0 0.0
        %4012 = vmatprep.mubr.f32.mxu0 0.0
        %4013 = vmatmul.mubr.f32.gmra.mxu0 %v1565
        %v4014 = vpop.f32.mrf.mxu0
        %v4015 = vadd.f32 0.0, %v4014
        %v4016 = vpop.f32.mrf.mxu0
        %4017 = vmatprep.mubr.f32.mxu0 0.0
        %4018 = vmatmul.mubr.f32.gmra.mxu0 %v1566
        %v4019 = vpop.f32.mrf.mxu0
        %v4020 = vadd.f32 0.0, %v4019
        %v4021 = vpop.f32.mrf.mxu0
        %4022 = vmatprep.mubr.f32.mxu0 0.0
        %4023 = vmatmul.mubr.f32.gmra.mxu0 %v1567
        %v4024 = vpop.f32.mrf.mxu0
        %v4025 = vadd.f32 0.0, %v4024
        %v4026 = vpop.f32.mrf.mxu0
        %4027 = vmatprep.mubr.f32.mxu0 0.0
        %4028 = vmatmul.mubr.f32.gmra.mxu0 %v1568
        %v4029 = vpop.f32.mrf.mxu0
        %v4030 = vadd.f32 0.0, %v4029
        %v4031 = vpop.f32.mrf.mxu0
        %4032 = vmatprep.mubr.f32.mxu0 0.0
        %4033 = vmatmul.mubr.f32.gmra.mxu0 %v1569
        %v4034 = vpop.f32.mrf.mxu0
        %v4035 = vadd.f32 0.0, %v4034
        %v4036 = vpop.f32.mrf.mxu0
        %4037 = vmatprep.mubr.f32.mxu0 0.0
        %4038 = vmatmul.mubr.f32.gmra.mxu0 %v1570
        %v4039 = vpop.f32.mrf.mxu0
        %v4040 = vadd.f32 0.0, %v4039
        %v4041 = vpop.f32.mrf.mxu0
        %4042 = vmatprep.mubr.f32.mxu0 0.0
        %4043 = vmatmul.mubr.f32.gmra.mxu0 %v1571
        %v4044 = vpop.f32.mrf.mxu0
        %v4045 = vadd.f32 0.0, %v4044
        %v4046 = vpop.f32.mrf.mxu0
        %4047 = vmatprep.mubr.f32.mxu0 0.0
        %4048 = vmatmul.mubr.f32.gmra.mxu0 %v1572
        %v4049 = vpop.f32.mrf.mxu0
        %v4050 = vadd.f32 0.0, %v4049
        %v4051 = vpop.f32.mrf.mxu0
        %4052 = vdwg.mxu0
        %v4053 = vsel %vm1686, %v4015, -inf
        %4054 = vmax.xlane.f32.xlu0 %v4053
        %v4055 = vpop.xlane.xlu0 %4054
        %v4056 = vsel %vm1686, %v4020, -inf
        %4057 = vmax.xlane.f32.xlu0 %v4056
        %v4058 = vpop.xlane.xlu0 %4057
        %v4059 = vsel %vm1686, %v4025, -inf
        %4060 = vmax.xlane.f32.xlu0 %v4059
        %v4061 = vpop.xlane.xlu0 %4060
        %v4062 = vsel %vm1686, %v4030, -inf
        %4063 = vmax.xlane.f32.xlu0 %v4062
        %v4064 = vpop.xlane.xlu0 %4063
        %v4065 = vsel %vm1686, %v4035, -inf
        %4066 = vmax.xlane.f32.xlu0 %v4065
        %v4067 = vpop.xlane.xlu0 %4066
        %v4068 = vsel %vm1686, %v4040, -inf
        %4069 = vmax.xlane.f32.xlu0 %v4068
        %v4070 = vpop.xlane.xlu0 %4069
        %v4071 = vsel %vm1686, %v4045, -inf
        %4072 = vmax.xlane.f32.xlu0 %v4071
        %v4073 = vpop.xlane.xlu0 %4072
        %v4074 = vsel %vm1686, %v4050, -inf
        %4075 = vmax.xlane.f32.xlu0 %v4074
        %v4076 = vpop.xlane.xlu0 %4075
        %v4077 = vsub.f32 %v4015, %v4055
        %v4078 = vsub.f32 %v4020, %v4058
        %v4079 = vsub.f32 %v4025, %v4061
        %v4080 = vsub.f32 %v4030, %v4064
        %v4081 = vsub.f32 %v4035, %v4067
        %v4082 = vsub.f32 %v4040, %v4070
        %v4083 = vsub.f32 %v4045, %v4073
        %v4084 = vsub.f32 %v4050, %v4076
        %v4085 = vmul.f32 %v4077, 1.442695
        %v4086 = vpow.pop %v4085
        %v4087 = vmul.f32 %v4078, 1.442695
        %v4088 = vpow.pop %v4087
        %v4089 = vmul.f32 %v4079, 1.442695
        %v4090 = vpow.pop %v4089
        %v4091 = vmul.f32 %v4080, 1.442695
        %v4092 = vpow.pop %v4091
        %v4093 = vmul.f32 %v4081, 1.442695
        %v4094 = vpow.pop %v4093
        %v4095 = vmul.f32 %v4082, 1.442695
        %v4096 = vpow.pop %v4095
        %v4097 = vmul.f32 %v4083, 1.442695
        %v4098 = vpow.pop %v4097
        %v4099 = vmul.f32 %v4084, 1.442695
        %v4100 = vpow.pop %v4099
        %v4101 = vsel %vm1686, %v4086, 0.0
        %4102 = vadd.xlane.f32.xlu0 %v4101
        %v4103 = vpop.xlane.xlu0 %4102
        %v4104 = vsel %vm1686, %v4088, 0.0
        %4105 = vadd.xlane.f32.xlu0 %v4104
        %v4106 = vpop.xlane.xlu0 %4105
        %v4107 = vsel %vm1686, %v4090, 0.0
        %4108 = vadd.xlane.f32.xlu0 %v4107
        %v4109 = vpop.xlane.xlu0 %4108
        %v4110 = vsel %vm1686, %v4092, 0.0
        %4111 = vadd.xlane.f32.xlu0 %v4110
        %v4112 = vpop.xlane.xlu0 %4111
        %v4113 = vsel %vm1686, %v4094, 0.0
        %4114 = vadd.xlane.f32.xlu0 %v4113
        %v4115 = vpop.xlane.xlu0 %4114
        %v4116 = vsel %vm1686, %v4096, 0.0
        %4117 = vadd.xlane.f32.xlu0 %v4116
        %v4118 = vpop.xlane.xlu0 %4117
        %v4119 = vsel %vm1686, %v4098, 0.0
        %4120 = vadd.xlane.f32.xlu0 %v4119
        %v4121 = vpop.xlane.xlu0 %4120
        %v4122 = vsel %vm1686, %v4100, 0.0
        %4123 = vadd.xlane.f32.xlu0 %v4122
        %v4124 = vpop.xlane.xlu0 %4123
        %v4125 = vrcp.pop %v4103
        %v4126 = vmul.f32 %v4086, %v4125
        %v4127 = vrcp.pop %v4106
        %v4128 = vmul.f32 %v4088, %v4127
        %v4129 = vrcp.pop %v4109
        %v4130 = vmul.f32 %v4090, %v4129
        %v4131 = vrcp.pop %v4112
        %v4132 = vmul.f32 %v4092, %v4131
        %v4133 = vrcp.pop %v4115
        %v4134 = vmul.f32 %v4094, %v4133
        %v4135 = vrcp.pop %v4118
        %v4136 = vmul.f32 %v4096, %v4135
        %v4137 = vrcp.pop %v4121
        %v4138 = vmul.f32 %v4098, %v4137
        %v4139 = vrcp.pop %v4124
        %v4140 = vmul.f32 %v4100, %v4139
        %v4142 = vsel %vm1686, %v4126, 0
        %v4145 = vsel %vm1686, %v4128, 0
        %v4148 = vsel %vm1686, %v4130, 0
        %v4151 = vsel %vm1686, %v4132, 0
        %v4154 = vsel %vm1686, %v4134, 0
        %v4157 = vsel %vm1686, %v4136, 0
        %v4160 = vsel %vm1686, %v4138, 0
        %v4163 = vsel %vm1686, %v4140, 0
        %4165 = vmatprep.subr.mxu0 0.0
        %4166 = vmatpush1.msra.mxu0 0.0
        %4167 = vmatprep.subr.mxu0 0.0
        %4168 = vmatpush1.msra.mxu0 0.0
        %4169 = vmatprep.subr.mxu0 0.0
        %4170 = vmatpush1.msra.mxu0 0.0
        %4171 = vmatprep.subr.mxu0 0.0
        %4172 = vmatpush1.msra.mxu0 0.0
        %4173 = vmatprep.subr.mxu0 0.0
        %4174 = vmatpush1.msra.mxu0 0.0
        %4175 = vmatprep.subr.mxu0 0.0
        %4176 = vmatpush1.msra.mxu0 0.0
        %4177 = vmatprep.subr.mxu0 0.0
        %4178 = vmatpush1.msra.mxu0 0.0
        %4179 = vmatprep.subr.mxu0 0.0
        %4180 = vmatpush1.msra.mxu0 0.0
        %4181 = vmatprep.subr.mxu0 0.0
        %4182 = vmatpush1.msra.mxu0 %v1562
        %4183 = vmatprep.subr.mxu0 0.0
        %4184 = vmatpush1.msra.mxu0 %v1556
        %4185 = vmatprep.subr.mxu0 0.0
        %4186 = vmatpush1.msra.mxu0 %v1550
        %4187 = vmatprep.subr.mxu0 0.0
        %4188 = vmatpush1.msra.mxu0 %v1544
        %4189 = vmatprep.subr.mxu0 0.0
        %4190 = vmatpush1.msra.mxu0 %v1538
        %4191 = vmatprep.subr.mxu0 0.0
        %4192 = vmatpush1.msra.mxu0 %v1532
        %4193 = vmatprep.subr.mxu0 0.0
        %4194 = vmatpush1.msra.mxu0 %v1526
        %4195 = vmatprep.subr.mxu0 0.0
        %4196 = vmatpush1.msra.mxu0 %v1520
        %4197 = vmatprep.subr.mxu0 0.0
        %4198 = vmatpush2.msra.mxu0 0.0
        %4199 = vmatprep.subr.mxu0 0.0
        %4200 = vmatpush2.msra.mxu0 0.0
        %4201 = vmatprep.subr.mxu0 0.0
        %4202 = vmatpush2.msra.mxu0 0.0
        %4203 = vmatprep.subr.mxu0 0.0
        %4204 = vmatpush2.msra.mxu0 0.0
        %4205 = vmatprep.subr.mxu0 0.0
        %4206 = vmatpush2.msra.mxu0 0.0
        %4207 = vmatprep.subr.mxu0 0.0
        %4208 = vmatpush2.msra.mxu0 0.0
        %4209 = vmatprep.subr.mxu0 0.0
        %4210 = vmatpush2.msra.mxu0 0.0
        %4211 = vmatprep.subr.mxu0 0.0
        %4212 = vmatpush2.msra.mxu0 0.0
        %4213 = vmatprep.subr.mxu0 0.0
        %4214 = vmatpush2.msra.mxu0 0.0
        %4215 = vmatprep.subr.mxu0 0.0
        %4216 = vmatpush2.msra.mxu0 0.0
        %4217 = vmatprep.subr.mxu0 0.0
        %4218 = vmatpush2.msra.mxu0 0.0
        %4219 = vmatprep.subr.mxu0 0.0
        %4220 = vmatpush2.msra.mxu0 0.0
        %4221 = vmatprep.subr.mxu0 0.0
        %4222 = vmatpush2.msra.mxu0 0.0
        %4223 = vmatprep.subr.mxu0 0.0
        %4224 = vmatpush2.msra.mxu0 0.0
        %4225 = vmatprep.subr.mxu0 0.0
        %4226 = vmatpush2.msra.mxu0 0.0
        %4227 = vmatprep.subr.mxu0 0.0
        %4228 = vmatpush2.msra.mxu0 0.0
        %4229 = vmatprep.mubr.f32.mxu0 0.0
        %4230 = vmatmul.mubr.f32.gmra.mxu0 %v4142
        %v4231 = vpop.f32.mrf.mxu0
        %v4232 = vadd.f32 0.0, %v4231
        %v4233 = vpop.f32.mrf.mxu0
        %4234 = vmatprep.mubr.f32.mxu0 0.0
        %4235 = vmatmul.mubr.f32.gmra.mxu0 %v4145
        %v4236 = vpop.f32.mrf.mxu0
        %v4237 = vadd.f32 0.0, %v4236
        %v4238 = vpop.f32.mrf.mxu0
        %4239 = vmatprep.mubr.f32.mxu0 0.0
        %4240 = vmatmul.mubr.f32.gmra.mxu0 %v4148
        %v4241 = vpop.f32.mrf.mxu0
        %v4242 = vadd.f32 0.0, %v4241
        %v4243 = vpop.f32.mrf.mxu0
        %4244 = vmatprep.mubr.f32.mxu0 0.0
        %4245 = vmatmul.mubr.f32.gmra.mxu0 %v4151
        %v4246 = vpop.f32.mrf.mxu0
        %v4247 = vadd.f32 0.0, %v4246
        %v4248 = vpop.f32.mrf.mxu0
        %4249 = vmatprep.mubr.f32.mxu0 0.0
        %4250 = vmatmul.mubr.f32.gmra.mxu0 %v4154
        %v4251 = vpop.f32.mrf.mxu0
        %v4252 = vadd.f32 0.0, %v4251
        %v4253 = vpop.f32.mrf.mxu0
        %4254 = vmatprep.mubr.f32.mxu0 0.0
        %4255 = vmatmul.mubr.f32.gmra.mxu0 %v4157
        %v4256 = vpop.f32.mrf.mxu0
        %v4257 = vadd.f32 0.0, %v4256
        %v4258 = vpop.f32.mrf.mxu0
        %4259 = vmatprep.mubr.f32.mxu0 0.0
        %4260 = vmatmul.mubr.f32.gmra.mxu0 %v4160
        %v4261 = vpop.f32.mrf.mxu0
        %v4262 = vadd.f32 0.0, %v4261
        %v4263 = vpop.f32.mrf.mxu0
        %4264 = vmatprep.mubr.f32.mxu0 0.0
        %4265 = vmatmul.mubr.f32.gmra.mxu0 %v4163
        %v4266 = vpop.f32.mrf.mxu0
        %v4267 = vadd.f32 0.0, %v4266
        %v4268 = vpop.f32.mrf.mxu0
        %4269 = vdwg.mxu0
        %v4270 = vmul.f32 %v4232, %v1573
        %v4271 = vmul.f32 %v4237, %v1574
        %v4272 = vmul.f32 %v4242, %v1575
        %v4273 = vmul.f32 %v4247, %v1576
        %v4274 = vmul.f32 %v4252, %v1577
        %v4275 = vmul.f32 %v4257, %v1578
        %v4276 = vmul.f32 %v4262, %v1579
        %v4277 = vmul.f32 %v4267, %v1580
        %v4278 = vadd.f32 %v4270, %v4271
        %v4279 = vadd.f32 %v4278, %v4272
        %v4280 = vadd.f32 %v4279, %v4273
        %v4281 = vadd.f32 %v4280, %v4274
        %v4282 = vadd.f32 %v4281, %v4275
        %v4283 = vadd.f32 %v4282, %v4276
        %v4284 = vadd.f32 %v4283, %v4277
        %v4285 = vadd.f32 %v1564, %v4284
        %v4286 = vld [vmem:[%s8] sm:$0xff]
        %v4287 = vld [vmem:[%s8 + $0x8] sm:$0xff]
        %v4288 = vld [vmem:[%s8 + $0x10] sm:$0xff]
        %v4289 = vld [vmem:[%s8 + $0x18] sm:$0xff]
        %v4290 = vld [vmem:[%s8 + $0x20] sm:$0xff]
        %v4291 = vld [vmem:[%s8 + $0x28] sm:$0xff]
        %v4292 = vld [vmem:[%s8 + $0x30] sm:$0xff]
        %v4293 = vld [vmem:[%s8 + $0x38] sm:$0xff]
        %v4294 = vld [vmem:[%s8 + $0x40] sm:$0xff]
        %v4295 = vld [vmem:[%s8 + $0x48] sm:$0xff]
        %v4296 = vld [vmem:[%s8 + $0x50] sm:$0xff]
        %v4297 = vld [vmem:[%s8 + $0x58] sm:$0xff]
        %v4298 = vld [vmem:[%s8 + $0x60] sm:$0xff]
        %v4299 = vld [vmem:[%s8 + $0x68] sm:$0xff]
        %v4300 = vld [vmem:[%s8 + $0x70] sm:$0xff]
        %v4301 = vld [vmem:[%s8 + $0x78] sm:$0xff]
        %v4302 = vld [vmem:[%s9] sm:$0x1]
        %v4304 = vlaneseq
        %v4305 = vshrl.u32 %v4304, 7
        %v4306 = vsub.s32 0, %v4305
        %v4307 = vrot.slane %v4302, %v4306
        %4309 = vmatprep.subr.mxu0 0.0
        %4310 = vmatpush1.msra.mxu0 %v4301
        %4311 = vmatprep.subr.mxu0 0.0
        %4312 = vmatpush1.msra.mxu0 %v4300
        %4313 = vmatprep.subr.mxu0 0.0
        %4314 = vmatpush1.msra.mxu0 %v4299
        %4315 = vmatprep.subr.mxu0 0.0
        %4316 = vmatpush1.msra.mxu0 %v4298
        %4317 = vmatprep.subr.mxu0 0.0
        %4318 = vmatpush1.msra.mxu0 %v4297
        %4319 = vmatprep.subr.mxu0 0.0
        %4320 = vmatpush1.msra.mxu0 %v4296
        %4321 = vmatprep.subr.mxu0 0.0
        %4322 = vmatpush1.msra.mxu0 %v4295
        %4323 = vmatprep.subr.mxu0 0.0
        %4324 = vmatpush1.msra.mxu0 %v4294
        %4325 = vmatprep.subr.mxu0 0.0
        %4326 = vmatpush1.msra.mxu0 %v4293
        %4327 = vmatprep.subr.mxu0 0.0
        %4328 = vmatpush1.msra.mxu0 %v4292
        %4329 = vmatprep.subr.mxu0 0.0
        %4330 = vmatpush1.msra.mxu0 %v4291
        %4331 = vmatprep.subr.mxu0 0.0
        %4332 = vmatpush1.msra.mxu0 %v4290
        %4333 = vmatprep.subr.mxu0 0.0
        %4334 = vmatpush1.msra.mxu0 %v4289
        %4335 = vmatprep.subr.mxu0 0.0
        %4336 = vmatpush1.msra.mxu0 %v4288
        %4337 = vmatprep.subr.mxu0 0.0
        %4338 = vmatpush1.msra.mxu0 %v4287
        %4339 = vmatprep.subr.mxu0 0.0
        %4340 = vmatpush1.msra.mxu0 %v4286
        %4341 = vmatprep.subr.mxu0 0.0
        %4342 = vmatpush2.msra.mxu0 0.0
        %4343 = vmatprep.subr.mxu0 0.0
        %4344 = vmatpush2.msra.mxu0 0.0
        %4345 = vmatprep.subr.mxu0 0.0
        %4346 = vmatpush2.msra.mxu0 0.0
        %4347 = vmatprep.subr.mxu0 0.0
        %4348 = vmatpush2.msra.mxu0 0.0
        %4349 = vmatprep.subr.mxu0 0.0
        %4350 = vmatpush2.msra.mxu0 0.0
        %4351 = vmatprep.subr.mxu0 0.0
        %4352 = vmatpush2.msra.mxu0 0.0
        %4353 = vmatprep.subr.mxu0 0.0
        %4354 = vmatpush2.msra.mxu0 0.0
        %4355 = vmatprep.subr.mxu0 0.0
        %4356 = vmatpush2.msra.mxu0 0.0
        %4357 = vmatprep.subr.mxu0 0.0
        %4358 = vmatpush2.msra.mxu0 0.0
        %4359 = vmatprep.subr.mxu0 0.0
        %4360 = vmatpush2.msra.mxu0 0.0
        %4361 = vmatprep.subr.mxu0 0.0
        %4362 = vmatpush2.msra.mxu0 0.0
        %4363 = vmatprep.subr.mxu0 0.0
        %4364 = vmatpush2.msra.mxu0 0.0
        %4365 = vmatprep.subr.mxu0 0.0
        %4366 = vmatpush2.msra.mxu0 0.0
        %4367 = vmatprep.subr.mxu0 0.0
        %4368 = vmatpush2.msra.mxu0 0.0
        %4369 = vmatprep.subr.mxu0 0.0
        %4370 = vmatpush2.msra.mxu0 0.0
        %4371 = vmatprep.subr.mxu0 0.0
        %4372 = vmatpush2.msra.mxu0 0.0
        %4373 = vmatprep.mubr.f32.mxu0 0.0
        %4374 = vmatmul.mubr.f32.gmra.mxu0 %v1919
        %v4375 = vpop.f32.mrf.mxu0
        %v4376 = vadd.f32 %v4307, %v4375
        %v4377 = vpop.f32.mrf.mxu0
        %4378 = vmatprep.mubr.f32.mxu0 0.0
        %4379 = vmatmul.mubr.f32.gmra.mxu0 %v2257
        %v4380 = vpop.f32.mrf.mxu0
        %v4381 = vadd.f32 %v4307, %v4380
        %v4382 = vpop.f32.mrf.mxu0
        %4383 = vmatprep.mubr.f32.mxu0 0.0
        %4384 = vmatmul.mubr.f32.gmra.mxu0 %v2595
        %v4385 = vpop.f32.mrf.mxu0
        %v4386 = vadd.f32 %v4307, %v4385
        %v4387 = vpop.f32.mrf.mxu0
        %4388 = vmatprep.mubr.f32.mxu0 0.0
        %4389 = vmatmul.mubr.f32.gmra.mxu0 %v2933
        %v4390 = vpop.f32.mrf.mxu0
        %v4391 = vadd.f32 %v4307, %v4390
        %v4392 = vpop.f32.mrf.mxu0
        %4393 = vmatprep.mubr.f32.mxu0 0.0
        %4394 = vmatmul.mubr.f32.gmra.mxu0 %v3271
        %v4395 = vpop.f32.mrf.mxu0
        %v4396 = vadd.f32 %v4307, %v4395
        %v4397 = vpop.f32.mrf.mxu0
        %4398 = vmatprep.mubr.f32.mxu0 0.0
        %4399 = vmatmul.mubr.f32.gmra.mxu0 %v3609
        %v4400 = vpop.f32.mrf.mxu0
        %v4401 = vadd.f32 %v4307, %v4400
        %v4402 = vpop.f32.mrf.mxu0
        %4403 = vmatprep.mubr.f32.mxu0 0.0
        %4404 = vmatmul.mubr.f32.gmra.mxu0 %v3947
        %v4405 = vpop.f32.mrf.mxu0
        %v4406 = vadd.f32 %v4307, %v4405
        %v4407 = vpop.f32.mrf.mxu0
        %4408 = vmatprep.mubr.f32.mxu0 0.0
        %4409 = vmatmul.mubr.f32.gmra.mxu0 %v4285
        %v4410 = vpop.f32.mrf.mxu0
        %v4411 = vadd.f32 %v4307, %v4410
        %v4412 = vpop.f32.mrf.mxu0
        %4413 = vdwg.mxu0
        %v4414 = vmax.f32 %v4376, 0.0
        %v4415 = vmax.f32 %v4381, 0.0
        %v4416 = vmax.f32 %v4386, 0.0
        %v4417 = vmax.f32 %v4391, 0.0
        %v4418 = vmax.f32 %v4396, 0.0
        %v4419 = vmax.f32 %v4401, 0.0
        %v4420 = vmax.f32 %v4406, 0.0
        %v4421 = vmax.f32 %v4411, 0.0
        %v4422 = vadd.f32 %v1919, %v4414
        %v4423 = vadd.f32 %v2257, %v4415
        %v4424 = vadd.f32 %v2595, %v4416
        %v4425 = vadd.f32 %v2933, %v4417
        %v4426 = vadd.f32 %v3271, %v4418
        %v4427 = vadd.f32 %v3609, %v4419
        %v4428 = vadd.f32 %v3947, %v4420
        %v4429 = vadd.f32 %v4285, %v4421
        %v4430 = vrot.slane %v4422, 4
        %v4431 = vmax.f32 %v4422, %v4430
        %v4432 = vrot.slane %v4431, 2
        %v4433 = vmax.f32 %v4431, %v4432
        %v4434 = vrot.slane %v4433, 1
        %v4435 = vmax.f32 %v4433, %v4434
        %v4436 = vrot.slane %v4423, 4
        %v4437 = vmax.f32 %v4423, %v4436
        %v4438 = vrot.slane %v4437, 2
        %v4439 = vmax.f32 %v4437, %v4438
        %v4440 = vrot.slane %v4439, 1
        %v4441 = vmax.f32 %v4439, %v4440
        %v4442 = vrot.slane %v4424, 4
        %v4443 = vmax.f32 %v4424, %v4442
        %v4444 = vrot.slane %v4443, 2
        %v4445 = vmax.f32 %v4443, %v4444
        %v4446 = vrot.slane %v4445, 1
        %v4447 = vmax.f32 %v4445, %v4446
        %v4448 = vrot.slane %v4425, 4
        %v4449 = vmax.f32 %v4425, %v4448
        %v4450 = vrot.slane %v4449, 2
        %v4451 = vmax.f32 %v4449, %v4450
        %v4452 = vrot.slane %v4451, 1
        %v4453 = vmax.f32 %v4451, %v4452
        %v4454 = vrot.slane %v4426, 4
        %v4455 = vmax.f32 %v4426, %v4454
        %v4456 = vrot.slane %v4455, 2
        %v4457 = vmax.f32 %v4455, %v4456
        %v4458 = vrot.slane %v4457, 1
        %v4459 = vmax.f32 %v4457, %v4458
        %v4460 = vrot.slane %v4427, 4
        %v4461 = vmax.f32 %v4427, %v4460
        %v4462 = vrot.slane %v4461, 2
        %v4463 = vmax.f32 %v4461, %v4462
        %v4464 = vrot.slane %v4463, 1
        %v4465 = vmax.f32 %v4463, %v4464
        %v4466 = vrot.slane %v4428, 4
        %v4467 = vmax.f32 %v4428, %v4466
        %v4468 = vrot.slane %v4467, 2
        %v4469 = vmax.f32 %v4467, %v4468
        %v4470 = vrot.slane %v4469, 1
        %v4471 = vmax.f32 %v4469, %v4470
        %v4472 = vrot.slane %v4429, 4
        %v4473 = vmax.f32 %v4429, %v4472
        %v4474 = vrot.slane %v4473, 2
        %v4475 = vmax.f32 %v4473, %v4474
        %v4476 = vrot.slane %v4475, 1
        %v4477 = vmax.f32 %v4475, %v4476
        %v4478 = vld [vmem:[%s10] sm:$0xff]
        %v4479 = vld [vmem:[%s10 + $0x8] sm:$0xff]
        %v4480 = vld [vmem:[%s10 + $0x10] sm:$0xff]
        %v4481 = vld [vmem:[%s10 + $0x18] sm:$0xff]
        %v4482 = vld [vmem:[%s10 + $0x20] sm:$0xff]
        %v4483 = vld [vmem:[%s10 + $0x28] sm:$0xff]
        %v4484 = vld [vmem:[%s10 + $0x30] sm:$0xff]
        %v4485 = vld [vmem:[%s10 + $0x38] sm:$0xff]
        %v4486 = vld [vmem:[%s10 + $0x40] sm:$0xff]
        %v4487 = vld [vmem:[%s10 + $0x48] sm:$0xff]
        %v4488 = vld [vmem:[%s10 + $0x50] sm:$0xff]
        %v4489 = vld [vmem:[%s10 + $0x58] sm:$0xff]
        %v4490 = vld [vmem:[%s10 + $0x60] sm:$0xff]
        %v4491 = vld [vmem:[%s10 + $0x68] sm:$0xff]
        %v4492 = vld [vmem:[%s10 + $0x70] sm:$0xff]
        %v4493 = vld [vmem:[%s10 + $0x78] sm:$0xff]
        %v4494 = vld [vmem:[%s11] sm:$0x1]
        %v4496 = vlaneseq
        %v4497 = vshrl.u32 %v4496, 7
        %v4498 = vsub.s32 0, %v4497
        %v4499 = vrot.slane %v4494, %v4498
        %vm4509 = vcmask 1041409
        %v4510 = vsel %vm4509, %v4441, %v4435
        %vm4511 = vcmask 1042434
        %v4512 = vsel %vm4511, %v4447, %v4510
        %vm4513 = vcmask 1043459
        %v4514 = vsel %vm4513, %v4453, %v4512
        %vm4515 = vcmask 1044484
        %v4516 = vsel %vm4515, %v4459, %v4514
        %vm4517 = vcmask 1045509
        %v4518 = vsel %vm4517, %v4465, %v4516
        %vm4519 = vcmask 1046534
        %v4520 = vsel %vm4519, %v4471, %v4518
        %vm4521 = vcmask 1047559
        %v4522 = vsel %vm4521, %v4477, %v4520
        %4524 = vmatprep.subr.mxu0 0.0
        %4525 = vmatpush1.msra.mxu0 %v4493
        %4526 = vmatprep.subr.mxu0 0.0
        %4527 = vmatpush1.msra.mxu0 %v4492
        %4528 = vmatprep.subr.mxu0 0.0
        %4529 = vmatpush1.msra.mxu0 %v4491
        %4530 = vmatprep.subr.mxu0 0.0
        %4531 = vmatpush1.msra.mxu0 %v4490
        %4532 = vmatprep.subr.mxu0 0.0
        %4533 = vmatpush1.msra.mxu0 %v4489
        %4534 = vmatprep.subr.mxu0 0.0
        %4535 = vmatpush1.msra.mxu0 %v4488
        %4536 = vmatprep.subr.mxu0 0.0
        %4537 = vmatpush1.msra.mxu0 %v4487
        %4538 = vmatprep.subr.mxu0 0.0
        %4539 = vmatpush1.msra.mxu0 %v4486
        %4540 = vmatprep.subr.mxu0 0.0
        %4541 = vmatpush1.msra.mxu0 %v4485
        %4542 = vmatprep.subr.mxu0 0.0
        %4543 = vmatpush1.msra.mxu0 %v4484
        %4544 = vmatprep.subr.mxu0 0.0
        %4545 = vmatpush1.msra.mxu0 %v4483
        %4546 = vmatprep.subr.mxu0 0.0
        %4547 = vmatpush1.msra.mxu0 %v4482
        %4548 = vmatprep.subr.mxu0 0.0
        %4549 = vmatpush1.msra.mxu0 %v4481
        %4550 = vmatprep.subr.mxu0 0.0
        %4551 = vmatpush1.msra.mxu0 %v4480
        %4552 = vmatprep.subr.mxu0 0.0
        %4553 = vmatpush1.msra.mxu0 %v4479
        %4554 = vmatprep.subr.mxu0 0.0
        %4555 = vmatpush1.msra.mxu0 %v4478
        %4556 = vmatprep.subr.mxu0 0.0
        %4557 = vmatpush2.msra.mxu0 0.0
        %4558 = vmatprep.subr.mxu0 0.0
        %4559 = vmatpush2.msra.mxu0 0.0
        %4560 = vmatprep.subr.mxu0 0.0
        %4561 = vmatpush2.msra.mxu0 0.0
        %4562 = vmatprep.subr.mxu0 0.0
        %4563 = vmatpush2.msra.mxu0 0.0
        %4564 = vmatprep.subr.mxu0 0.0
        %4565 = vmatpush2.msra.mxu0 0.0
        %4566 = vmatprep.subr.mxu0 0.0
        %4567 = vmatpush2.msra.mxu0 0.0
        %4568 = vmatprep.subr.mxu0 0.0
        %4569 = vmatpush2.msra.mxu0 0.0
        %4570 = vmatprep.subr.mxu0 0.0
        %4571 = vmatpush2.msra.mxu0 0.0
        %4572 = vmatprep.subr.mxu0 0.0
        %4573 = vmatpush2.msra.mxu0 0.0
        %4574 = vmatprep.subr.mxu0 0.0
        %4575 = vmatpush2.msra.mxu0 0.0
        %4576 = vmatprep.subr.mxu0 0.0
        %4577 = vmatpush2.msra.mxu0 0.0
        %4578 = vmatprep.subr.mxu0 0.0
        %4579 = vmatpush2.msra.mxu0 0.0
        %4580 = vmatprep.subr.mxu0 0.0
        %4581 = vmatpush2.msra.mxu0 0.0
        %4582 = vmatprep.subr.mxu0 0.0
        %4583 = vmatpush2.msra.mxu0 0.0
        %4584 = vmatprep.subr.mxu0 0.0
        %4585 = vmatpush2.msra.mxu0 0.0
        %4586 = vmatprep.subr.mxu0 0.0
        %4587 = vmatpush2.msra.mxu0 0.0
        %4588 = vmatprep.mubr.f32.mxu0 0.0
        %4589 = vmatmul.mubr.f32.gmra.mxu0 %v4522
        %v4590 = vpop.f32.mrf.mxu0
        %v4591 = vadd.f32 %v4499, %v4590
        %v4592 = vpop.f32.mrf.mxu0
        %4593 = vdwg.mxu0
        %4594 = vst.msk [vmem:[%s409] sm:$0xff] %vm1686, %v4591
        %s4595 = sand.u32 %s291, 1
        %s4596 = scalar_lea.sflag [#allocation3], %s4595
        %s4597 = sand.u32 %s291, 1
        %s4598 = smul.addr %s4597, 8
        %s4599 = scalar_lea.vmem [#allocation2], %s4598
        // Predicated region
        $region69: #{tpu_custom_call.1} parent=67 // pred_check
          %p4600 = pneg %p301
        $region70: #{tpu_custom_call.1} parent=67 // pred_check_branch
          %4602 = sbr.rel (%p4600) target = $region72
        $region71: #{tpu_custom_call.1} parent=67 // pred_region
          %s4604 = ssub.s32 128, 128
          %4605 = vsyncadd %s4596, %s4604
          %s4606 = smul.addr %s26, 128
          %s4607 = scalar_lea.hbm %s12, %s4606
          %s4609 = sshll.u32 %s4599, 4
          %s4610 = int_to_ptr.vmem [resolvable:$true] %s4609
          %4612 = dma.vmem_to_hbm [thread:$0]  %s4610, 128, %s4607, %s4596
        $region72: #{tpu_custom_call.1} parent=67 // pred_fallthru
          _
      $region68: #{tpu_custom_call.1} parent=5 // pred_fallthru
        _
      %p4613 = scmp.le.s32.totalorder 2, %s21
      // Predicated region
      $region73: #{tpu_custom_call.1} parent=5 // pred_check
        %p4614 = pneg %p4613
      $region74: #{tpu_custom_call.1} parent=5 // pred_check_branch
        %4616 = sbr.rel (%p4614) target = $region76
      $region75: #{tpu_custom_call.1} parent=5 // pred_region
        %s4617 = ssub.s32 %s21, 2
        // Predicated region
        $region77: #{tpu_custom_call.1} parent=75 // pred_check
          %p4618 = pneg %p307
        $region78: #{tpu_custom_call.1} parent=75 // pred_check_branch
          %4620 = sbr.rel (%p4618) target = $region80
        $region79: #{tpu_custom_call.1} parent=75 // pred_region
          %s4621 = sand.u32 %s292, 1
          %s4622 = scalar_lea.sflag [#allocation3], %s4621
          %s4623 = sand.u32 %s292, 1
          %s4624 = smul.addr %s4623, 8
          %s4625 = scalar_lea.vmem [#allocation2], %s4624
          %4626 = dma.done %s4622, 128
        $region80: #{tpu_custom_call.1} parent=75 // pred_fallthru
          _
      $region76: #{tpu_custom_call.1} parent=5 // pred_fallthru
        _
    $region6: #{tpu_custom_call.1} parent=1 // loop_footer
      %s25 = sadd.s32 1, %s21
    $region7: #{tpu_custom_call.1} parent=1 // loop_footer_branch
      %20 = sbr.rel target = $region3
    $region8: #{tpu_custom_call.1} parent=1 // loop_exit
      _
    %4627 = vsyncpa [#allocation3], 1
    %s4628 = scalar_lea.sflag [#allocation3], 1
    %4629 = vsyncpa %s4628, 1

</llo_original>
